<compile_context>
chip_gen: v5e
topology: v5e:2x2
jax: 0.10.0
libtpu: 0.0.40
codegen_flags: <defaults>
</compile_context>

<pallas_src>
import functools

import jax
import jax.numpy as jnp
import numpy as np
from jax.experimental import pallas as pl
from jax.experimental.pallas import tpu as pltpu

_LANE = 128


def _round_up(x, m):
    return (x + m - 1) // m * m


def _vmem_limit_bytes():
    # Per-generation scoped-VMEM sizing: ~half of the per-core physical VMEM
    # (=> ~64 MiB on v5e/v6e (128 MiB), ~32 MiB on v7x (64 MiB per TensorCore)).
    try:
        cap = int(pltpu.get_tpu_info().vmem_capacity_bytes)
        return max(32 * 1024 * 1024, min(96 * 1024 * 1024, cap // 2))
    except Exception:
        return 32 * 1024 * 1024


def _cparams(sem):
    return pltpu.CompilerParams(dimension_semantics=sem,
                                vmem_limit_bytes=_vmem_limit_bytes())


# ---------------------------------------------------------------------------
# Pallas kernels
# ---------------------------------------------------------------------------
def _fused_unet_inner_kernel(xs_ref, w1_ref, w2_ref, y_ref, stat_ref, dbuf,
                             *, ho, wo, cip, cop):
    """Per-image fused: LeakyReLU -> down conv -> ReLU -> up conv (4 phases) -> BN stats."""
    k1 = xs_ref.shape[-1]
    rows = ho * wo

    # LeakyReLU(0.2) on the compact space-to-depth tile (f32 math, one bf16 cast).
    xs = xs_ref[0].astype(jnp.float32)                            # (ho+1, wo+1, k1)
    xa = jnp.where(xs > 0, xs, 0.2 * xs).astype(jnp.bfloat16)

    # Down conv: 2x2 stride-1 conv over the space-to-depth input as 4 accumulated
    # MXU matmuls (bf16 operands, f32 accumulation) -- im2col stays in VMEM values.
    acc = jnp.zeros((rows, cip), jnp.float32)
    for p in range(2):
        for q in range(2):
            tap = xa[p:p + ho, q:q + wo, :].reshape(rows, k1)
            acc = acc + jnp.dot(tap, w1_ref[2 * p + q],
                                preferred_element_type=jnp.float32)

    # Fused ReLU + bf16 cast epilogue; keep result in a zero-halo VMEM scratch.
    dbuf[...] = jnp.zeros_like(dbuf)
    dbuf[1:1 + ho, 1:1 + wo, :] = (
        jnp.maximum(acc, 0.0).astype(jnp.bfloat16).reshape(ho, wo, cip))

    # Up conv (ConvTranspose2d 4x4/s2/p1) as 4 output phases, each a dense 2x2 conv
    # over the halo'd down activation.  BN sum / sum-of-squares accumulate in
    # registers and are written once per grid step (no per-iteration RMW stores).
    s0 = jnp.zeros((1, cop), jnp.float32)
    s1 = jnp.zeros((1, cop), jnp.float32)
    for r in range(2):
        for c in range(2):
            accy = jnp.zeros((rows, cop), jnp.float32)
            for p in range(2):
                for q in range(2):
                    tap = dbuf[r + p:r + p + ho, c + q:c + q + wo, :].reshape(rows, cip)
                    accy = accy + jnp.dot(tap, w2_ref[2 * r + c, 2 * p + q],
                                          preferred_element_type=jnp.float32)
            y_ref[0, 2 * r + c] = accy.astype(jnp.bfloat16)       # bf16 intermediate
            s0 = s0 + jnp.sum(accy, axis=0, keepdims=True)
            s1 = s1 + jnp.sum(accy * accy, axis=0, keepdims=True)

    stat_ref[0, 0:1, :] = s0
    stat_ref[0, 1:2, :] = s1
    stat_ref[0, 2:8, :] = jnp.zeros((6, cop), jnp.float32)


def _bn_affine_kernel(y_ref, sb_ref, o_ref):
    # BatchNorm affine: y * scale + shift per channel (f32 math, lane-dense blocks).
    y = y_ref[0, 0].astype(jnp.float32)
    o_ref[0, 0] = y * sb_ref[0:1, :] + sb_ref[1:2, :]


# ---------------------------------------------------------------------------
# One-time (hoisted) weight preparation
# ---------------------------------------------------------------------------
def prepare_params(params, input_nc):
    """Matmul-ready, lane-padded, bf16 weights + padded BN affine params."""
    w1 = params["w1"]                       # Conv2d weight          (inner, in, 4, 4)
    w2 = params["w2"]                       # ConvTranspose2d weight (inner, outer, 4, 4)
    inner_nc, outer_nc = int(w1.shape[0]), int(w2.shape[1])
    cip = _round_up(inner_nc, _LANE)
    cop = _round_up(outer_nc, _LANE)
    k1 = 4 * input_nc

    # Down conv as a 2x2 stride-1 conv on the space-to-depth input:
    #   w1_sd[2p+q, (2r+s)*C_in + c, o] = w1[o, c, 2p+r, 2q+s]
    w1_r = w1.reshape(inner_nc, input_nc, 2, 2, 2, 2)             # (o, c, p, r, q, s)
    w1_sd = jnp.transpose(w1_r, (2, 4, 3, 5, 1, 0)).reshape(4, k1, inner_nc)
    w1_sd = jnp.pad(w1_sd, ((0, 0), (0, 0), (0, cip - inner_nc))).astype(jnp.bfloat16)

    # ConvTranspose2d(4,2,1) decomposed into 4 output phases (r,c); each phase is a
    # dense 2x2 conv over the 1-padded down activation with taps w2[:, :, 3-r-2p, 3-c-2q].
    mats = []
    for r in (0, 1):
        for c in (0, 1):
            taps = [w2[:, :, 3 - r - 2 * p, 3 - c - 2 * q]
                    for p in (0, 1) for q in (0, 1)]
            mats.append(jnp.stack(taps, axis=0))                  # (4, inner, outer)
    w2_ph = jnp.stack(mats, axis=0)                               # (4, 4, inner, outer)
    w2_ph = jnp.pad(w2_ph, ((0, 0), (0, 0),
                            (0, cip - inner_nc),
                            (0, cop - outer_nc))).astype(jnp.bfloat16)

    wts = {
        "w1_sd": w1_sd,
        "w2_ph": w2_ph,
        "gamma": jnp.pad(params["gamma"], (0, cop - outer_nc),
                         constant_values=1.0).astype(jnp.float32),
        "beta": jnp.pad(params["beta"], (0, cop - outer_nc)).astype(jnp.float32),
    }
    dims = {"input_nc": input_nc, "inner_nc": inner_nc, "outer_nc": outer_nc,
            "cip": cip, "cop": cop, "k1": k1}
    return wts, dims


# ---------------------------------------------------------------------------
# Forward pass
# ---------------------------------------------------------------------------
def unet_innermost_forward(x, wts, dims, eps=1e-5):
    """x: (N, C_in, H, W) float32 NCHW (PyTorch layout)."""
    n, c_in, h, w = x.shape
    assert c_in == dims["input_nc"]
    ho, wo = h // 2, w // 2
    rows = ho * wo
    cip, cop, k1 = dims["cip"], dims["cop"], dims["k1"]
    outer_nc = dims["outer_nc"]

    # Single boundary pass in XLA: NCHW -> NHWC, zero-pad by 1, 2x2 space-to-depth, bf16.
    x_nhwc = jnp.transpose(x, (0, 2, 3, 1))
    xp = jnp.pad(x_nhwc, ((0, 0), (1, 1), (1, 1), (0, 0)))
    xs = xp.reshape(n, ho + 1, 2, wo + 1, 2, c_in)
    xs = jnp.transpose(xs, (0, 1, 3, 2, 4, 5)).reshape(n, ho + 1, wo + 1, k1)
    xs = xs.astype(jnp.bfloat16)

    kern = functools.partial(_fused_unet_inner_kernel, ho=ho, wo=wo, cip=cip, cop=cop)
    y_ph, stats = pl.pallas_call(
        kern,
        out_shape=(jax.ShapeDtypeStruct((n, 4, rows, cop), jnp.bfloat16),
                   jax.ShapeDtypeStruct((n, 8, cop), jnp.float32)),
        grid=(n,),
        in_specs=[pl.BlockSpec((1, ho + 1, wo + 1, k1), lambda i: (i, 0, 0, 0)),
                  pl.BlockSpec((4, k1, cip), lambda i: (0, 0, 0)),
                  pl.BlockSpec((4, 4, cip, cop), lambda i: (0, 0, 0, 0))],
        out_specs=(pl.BlockSpec((1, 4, rows, cop), lambda i: (i, 0, 0, 0)),
                   pl.BlockSpec((1, 8, cop), lambda i: (i, 0, 0))),
        scratch_shapes=[pltpu.VMEM((ho + 2, wo + 2, cip), jnp.bfloat16)],
        compiler_params=_cparams(("parallel",)),
    )(xs, wts["w1_sd"], wts["w2_ph"])

    # BatchNorm2d (training mode, biased variance) from per-image partial sums (tiny).
    count = jnp.float32(n * h * w)
    tot = jnp.sum(stats, axis=0)                                   # (8, cop)
    mean = tot[0] / count
    var = jnp.maximum(tot[1] / count - mean * mean, 0.0)
    scale = wts["gamma"] * jax.lax.rsqrt(var + eps)
    shift = wts["beta"] - mean * scale
    sb = jnp.zeros((8, cop), jnp.float32).at[0].set(scale).at[1].set(shift)

    yb = pl.pallas_call(
        _bn_affine_kernel,
        out_shape=jax.ShapeDtypeStruct((n, 4, rows, cop), jnp.float32),
        grid=(n, 4),
        in_specs=[pl.BlockSpec((1, 1, rows, cop), lambda i, j: (i, j, 0, 0)),
                  pl.BlockSpec((8, cop), lambda i, j: (0, 0))],
        out_specs=pl.BlockSpec((1, 1, rows, cop), lambda i, j: (i, j, 0, 0)),
        compiler_params=_cparams(("parallel", "parallel")),
    )(y_ph, sb)

    # One fused XLA permutation back to NCHW: yb[n, r, c, Y, X, o] -> y[n, o, 2Y+r, 2X+c].
    yb = yb.reshape(n, 2, 2, ho, wo, cop)[..., :outer_nc]
    y_nchw = jnp.transpose(yb, (0, 5, 3, 1, 4, 2)).reshape(n, outer_nc, h, w)

    # Skip connection at the module boundary: torch.cat([x, model(x)], dim=1).
    return jnp.concatenate([x, y_nchw], axis=1)


# ---------------------------------------------------------------------------
# Independent reference (pure lax convs) for correctness checking
# ---------------------------------------------------------------------------
def reference_forward(x, params, eps=1e-5):
    """Module semantics via lax convs (training-mode BatchNorm, biased variance).

    bf16 rounding is applied exactly where the Pallas pipeline rounds (MXU operands and
    the stored pre-BN activation); all accumulation stays f32 in both paths.
    """
    q = lambda t: t.astype(jnp.bfloat16).astype(jnp.float32)
    w1, w2 = params["w1"], params["w2"]
    gamma, beta = params["gamma"], params["beta"]

    xq = q(x)
    xl = q(jnp.where(xq > 0, xq, 0.2 * xq))
    d = jax.lax.conv_general_dilated(
        xl, q(w1), window_strides=(2, 2), padding=((1, 1), (1, 1)),
        dimension_numbers=("NCHW", "OIHW", "NCHW"),
        precision=jax.lax.Precision.HIGHEST)
    du = q(jnp.maximum(d, 0.0))
    w2_conv = jnp.transpose(q(w2)[:, :, ::-1, ::-1], (1, 0, 2, 3))   # (outer, inner, 4, 4)
    y = jax.lax.conv_general_dilated(
        du, w2_conv, window_strides=(1, 1), padding=((2, 2), (2, 2)),
        lhs_dilation=(2, 2),
        dimension_numbers=("NCHW", "OIHW", "NCHW"),
        precision=jax.lax.Precision.HIGHEST)
    mean = jnp.mean(y, axis=(0, 2, 3), keepdims=True)
    var = jnp.mean(jnp.square(y - mean), axis=(0, 2, 3), keepdims=True)
    scale = gamma.reshape(1, -1, 1, 1) * jax.lax.rsqrt(var + eps)
    shift = beta.reshape(1, -1, 1, 1) - mean * scale
    yb = q(y) * scale + shift           # kernel normalizes the bf16-stored activation
    return jnp.concatenate([x, yb], axis=1)


if __name__ == "__main__":
    key = jax.random.PRNGKey(0)
    kx, k1, k2 = jax.random.split(key, 3)

    n, outer_nc, inner_nc, hw = 2, 4, 8, 16
    input_nc = outer_nc            # innermost block: input_nc defaults to outer_nc

    x = jax.random.normal(kx, (n, input_nc, hw, hw), jnp.float32)
    params = {
        # Conv2d(input_nc, inner_nc, 4, 2, 1, bias=False) weight: (inner, in, 4, 4)
        "w1": 0.2 * jax.random.normal(k1, (inner_nc, input_nc, 4, 4), jnp.float32),
        # ConvTranspose2d(inner_nc, outer_nc, 4, 2, 1, bias=False) weight: (inner, outer, 4, 4)
        "w2": 0.2 * jax.random.normal(k2, (inner_nc, outer_nc, 4, 4), jnp.float32),
        # BatchNorm2d(outer_nc) affine params (PyTorch default init)
        "gamma": jnp.ones((outer_nc,), jnp.float32),
        "beta": jnp.zeros((outer_nc,), jnp.float32),
    }

    wts, dims = prepare_params(params, input_nc)      # hoisted weight prep (done once)
    fwd = jax.jit(functools.partial(unet_innermost_forward, dims=dims, eps=1e-5))

    out = jax.block_until_ready(fwd(x, wts))
    ref = jax.block_until_ready(reference_forward(x, params))

    assert out.shape == (n, input_nc + outer_nc, hw, hw), out.shape
    np.testing.assert_allclose(np.asarray(out), np.asarray(ref), rtol=2e-2, atol=2e-2)
    print("KERNEL_OK")
</pallas_src>

<mosaic_0001>
module attributes {stable_mosaic.version = 11 : i64} {
  func.func @_fused_unet_inner_kernel(%arg0: i32, %arg1: memref<1x9x9x16xbf16, #tpu.memory_space<vmem>>, %arg2: memref<4x16x128xbf16, #tpu.memory_space<vmem>>, %arg3: memref<4x4x128x128xbf16, #tpu.memory_space<vmem>>, %arg4: memref<1x4x64x128xbf16, #tpu.memory_space<vmem>>, %arg5: memref<1x8x128xf32, #tpu.memory_space<vmem>>, %arg6: memref<10x10x128xbf16, #tpu.memory_space<vmem>>) attributes {dimension_semantics = [#tpu.dimension_semantics<parallel>], iteration_bounds = array<i64: 2>, scalar_prefetch = 0 : i64, scratch_operands = 1 : i64, tpu.core_type = #tpu.core_type<tc>, window_params = [{transform_indices = @transform_0, window_bounds = array<i64: 1, 9, 9, 16>}, {pipeline_mode = #tpu.pipeline_mode<synchronous>, transform_indices = @transform_1, window_bounds = array<i64: 4, 16, 128>}, {pipeline_mode = #tpu.pipeline_mode<synchronous>, transform_indices = @transform_2, window_bounds = array<i64: 4, 4, 128, 128>}, {transform_indices = @transform_3, window_bounds = array<i64: 1, 4, 64, 128>}, {transform_indices = @transform_4, window_bounds = array<i64: 1, 8, 128>}]} {
    %c0 = arith.constant 0 : index
    %c0_0 = arith.constant 0 : index
    %c0_1 = arith.constant 0 : index
    %c0_2 = arith.constant 0 : index
    %0 = vector.load %arg1[%c0, %c0_0, %c0_1, %c0_2] : memref<1x9x9x16xbf16, #tpu.memory_space<vmem>>, vector<1x9x9x16xbf16>
    %1 = vector.shape_cast %0 : vector<1x9x9x16xbf16> to vector<9x9x16xbf16>
    %2 = arith.extf %1 : vector<9x9x16xbf16> to vector<9x9x16xf32>
    %cst = arith.constant 0.000000e+00 : f32
    %3 = vector.broadcast %cst : f32 to vector<9x9x16xf32>
    %4 = arith.cmpf ogt, %2, %3 : vector<9x9x16xf32>
    %cst_3 = arith.constant 2.000000e-01 : f32
    %5 = vector.broadcast %cst_3 : f32 to vector<9x9x16xf32>
    %6 = arith.mulf %5, %2 : vector<9x9x16xf32>
    %7 = arith.select %4, %2, %6 : vector<9x9x16xi1>, vector<9x9x16xf32>
    %8 = arith.truncf %7 : vector<9x9x16xf32> to vector<9x9x16xbf16>
    %cst_4 = arith.constant 0.000000e+00 : f32
    %9 = vector.broadcast %cst_4 : f32 to vector<64x128xf32>
    %10 = vector.extract_strided_slice %8 {offsets = [0, 0, 0], sizes = [8, 8, 16], strides = [1, 1, 1]} : vector<9x9x16xbf16> to vector<8x8x16xbf16>
    %11 = vector.shape_cast %10 : vector<8x8x16xbf16> to vector<64x16xbf16>
    %c0_5 = arith.constant 0 : index
    %c0_6 = arith.constant 0 : index
    %c0_7 = arith.constant 0 : index
    %12 = vector.load %arg2[%c0_5, %c0_6, %c0_7] : memref<4x16x128xbf16, #tpu.memory_space<vmem>>, vector<1x16x128xbf16>
    %13 = vector.shape_cast %12 : vector<1x16x128xbf16> to vector<16x128xbf16>
    %cst_8 = arith.constant dense<0.000000e+00> : vector<64x128xf32>
    %14 = tpu.matmul %11, %13, %cst_8 {dimension_numbers = #tpu.dot_dimension_numbers<[1], [0], [0], [1], [0, 0, 1, 1], [], []>} : vector<64x16xbf16>, vector<16x128xbf16>, vector<64x128xf32> -> vector<64x128xf32>
    %15 = arith.addf %9, %14 : vector<64x128xf32>
    %16 = vector.extract_strided_slice %8 {offsets = [0, 1, 0], sizes = [8, 8, 16], strides = [1, 1, 1]} : vector<9x9x16xbf16> to vector<8x8x16xbf16>
    %17 = vector.shape_cast %16 : vector<8x8x16xbf16> to vector<64x16xbf16>
    %c1 = arith.constant 1 : index
    %c0_9 = arith.constant 0 : index
    %c0_10 = arith.constant 0 : index
    %18 = vector.load %arg2[%c1, %c0_9, %c0_10] : memref<4x16x128xbf16, #tpu.memory_space<vmem>>, vector<1x16x128xbf16>
    %19 = vector.shape_cast %18 : vector<1x16x128xbf16> to vector<16x128xbf16>
    %cst_11 = arith.constant dense<0.000000e+00> : vector<64x128xf32>
    %20 = tpu.matmul %17, %19, %cst_11 {dimension_numbers = #tpu.dot_dimension_numbers<[1], [0], [0], [1], [0, 0, 1, 1], [], []>} : vector<64x16xbf16>, vector<16x128xbf16>, vector<64x128xf32> -> vector<64x128xf32>
    %21 = arith.addf %15, %20 : vector<64x128xf32>
    %22 = vector.extract_strided_slice %8 {offsets = [1, 0, 0], sizes = [8, 8, 16], strides = [1, 1, 1]} : vector<9x9x16xbf16> to vector<8x8x16xbf16>
    %23 = vector.shape_cast %22 : vector<8x8x16xbf16> to vector<64x16xbf16>
    %c2 = arith.constant 2 : index
    %c0_12 = arith.constant 0 : index
    %c0_13 = arith.constant 0 : index
    %24 = vector.load %arg2[%c2, %c0_12, %c0_13] : memref<4x16x128xbf16, #tpu.memory_space<vmem>>, vector<1x16x128xbf16>
    %25 = vector.shape_cast %24 : vector<1x16x128xbf16> to vector<16x128xbf16>
    %cst_14 = arith.constant dense<0.000000e+00> : vector<64x128xf32>
    %26 = tpu.matmul %23, %25, %cst_14 {dimension_numbers = #tpu.dot_dimension_numbers<[1], [0], [0], [1], [0, 0, 1, 1], [], []>} : vector<64x16xbf16>, vector<16x128xbf16>, vector<64x128xf32> -> vector<64x128xf32>
    %27 = arith.addf %21, %26 : vector<64x128xf32>
    %28 = vector.extract_strided_slice %8 {offsets = [1, 1, 0], sizes = [8, 8, 16], strides = [1, 1, 1]} : vector<9x9x16xbf16> to vector<8x8x16xbf16>
    %29 = vector.shape_cast %28 : vector<8x8x16xbf16> to vector<64x16xbf16>
    %c3 = arith.constant 3 : index
    %c0_15 = arith.constant 0 : index
    %c0_16 = arith.constant 0 : index
    %30 = vector.load %arg2[%c3, %c0_15, %c0_16] : memref<4x16x128xbf16, #tpu.memory_space<vmem>>, vector<1x16x128xbf16>
    %31 = vector.shape_cast %30 : vector<1x16x128xbf16> to vector<16x128xbf16>
    %cst_17 = arith.constant dense<0.000000e+00> : vector<64x128xf32>
    %32 = tpu.matmul %29, %31, %cst_17 {dimension_numbers = #tpu.dot_dimension_numbers<[1], [0], [0], [1], [0, 0, 1, 1], [], []>} : vector<64x16xbf16>, vector<16x128xbf16>, vector<64x128xf32> -> vector<64x128xf32>
    %33 = arith.addf %27, %32 : vector<64x128xf32>
    %cst_18 = arith.constant 0.000000e+00 : bf16
    %34 = vector.broadcast %cst_18 : bf16 to vector<10x10x128xbf16>
    %c0_19 = arith.constant 0 : index
    %c0_20 = arith.constant 0 : index
    %c0_21 = arith.constant 0 : index
    %35 = vector.load %arg6[%c0_19, %c0_20, %c0_21] : memref<10x10x128xbf16, #tpu.memory_space<vmem>>, vector<10x10x128xbf16>
    tpu.vector_store %arg6[%c0_19, %c0_20, %c0_21], %34 {strides = array<i32>} : memref<10x10x128xbf16, #tpu.memory_space<vmem>>, vector<10x10x128xbf16>,
    %cst_22 = arith.constant 0.000000e+00 : f32
    %36 = vector.broadcast %cst_22 : f32 to vector<64x128xf32>
    %37 = arith.maximumf %33, %36 : vector<64x128xf32>
    %38 = arith.truncf %37 : vector<64x128xf32> to vector<64x128xbf16>
    %39 = vector.shape_cast %38 : vector<64x128xbf16> to vector<8x8x128xbf16>
    %c1_23 = arith.constant 1 : index
    %c1_24 = arith.constant 1 : index
    %c0_25 = arith.constant 0 : index
    %40 = vector.load %arg6[%c1_23, %c1_24, %c0_25] : memref<10x10x128xbf16, #tpu.memory_space<vmem>>, vector<8x8x128xbf16>
    tpu.vector_store %arg6[%c1_23, %c1_24, %c0_25], %39 {strides = array<i32>} : memref<10x10x128xbf16, #tpu.memory_space<vmem>>, vector<8x8x128xbf16>,
    %cst_26 = arith.constant 0.000000e+00 : f32
    %41 = vector.broadcast %cst_26 : f32 to vector<1x128xf32>
    %cst_27 = arith.constant 0.000000e+00 : f32
    %42 = vector.broadcast %cst_27 : f32 to vector<1x128xf32>
    %cst_28 = arith.constant 0.000000e+00 : f32
    %43 = vector.broadcast %cst_28 : f32 to vector<64x128xf32>
    %c0_29 = arith.constant 0 : index
    %c0_30 = arith.constant 0 : index
    %c0_31 = arith.constant 0 : index
    %44 = vector.load %arg6[%c0_29, %c0_30, %c0_31] : memref<10x10x128xbf16, #tpu.memory_space<vmem>>, vector<8x8x128xbf16>
    %45 = vector.shape_cast %44 : vector<8x8x128xbf16> to vector<64x128xbf16>
    %c0_32 = arith.constant 0 : index
    %c0_33 = arith.constant 0 : index
    %c0_34 = arith.constant 0 : index
    %c0_35 = arith.constant 0 : index
    %46 = vector.load %arg3[%c0_32, %c0_33, %c0_34, %c0_35] : memref<4x4x128x128xbf16, #tpu.memory_space<vmem>>, vector<1x1x128x128xbf16>
    %47 = vector.shape_cast %46 : vector<1x1x128x128xbf16> to vector<128x128xbf16>
    %cst_36 = arith.constant dense<0.000000e+00> : vector<64x128xf32>
    %48 = tpu.matmul %45, %47, %cst_36 {dimension_numbers = #tpu.dot_dimension_numbers<[1], [0], [0], [1], [0, 0, 1, 1], [], []>} : vector<64x128xbf16>, vector<128x128xbf16>, vector<64x128xf32> -> vector<64x128xf32>
    %49 = arith.addf %43, %48 : vector<64x128xf32>
    %c0_37 = arith.constant 0 : index
    %c1_38 = arith.constant 1 : index
    %c0_39 = arith.constant 0 : index
    %50 = vector.load %arg6[%c0_37, %c1_38, %c0_39] : memref<10x10x128xbf16, #tpu.memory_space<vmem>>, vector<8x8x128xbf16>
    %51 = vector.shape_cast %50 : vector<8x8x128xbf16> to vector<64x128xbf16>
    %c0_40 = arith.constant 0 : index
    %c1_41 = arith.constant 1 : index
    %c0_42 = arith.constant 0 : index
    %c0_43 = arith.constant 0 : index
    %52 = vector.load %arg3[%c0_40, %c1_41, %c0_42, %c0_43] : memref<4x4x128x128xbf16, #tpu.memory_space<vmem>>, vector<1x1x128x128xbf16>
    %53 = vector.shape_cast %52 : vector<1x1x128x128xbf16> to vector<128x128xbf16>
    %cst_44 = arith.constant dense<0.000000e+00> : vector<64x128xf32>
    %54 = tpu.matmul %51, %53, %cst_44 {dimension_numbers = #tpu.dot_dimension_numbers<[1], [0], [0], [1], [0, 0, 1, 1], [], []>} : vector<64x128xbf16>, vector<128x128xbf16>, vector<64x128xf32> -> vector<64x128xf32>
    %55 = arith.addf %49, %54 : vector<64x128xf32>
    %c1_45 = arith.constant 1 : index
    %c0_46 = arith.constant 0 : index
    %c0_47 = arith.constant 0 : index
    %56 = vector.load %arg6[%c1_45, %c0_46, %c0_47] : memref<10x10x128xbf16, #tpu.memory_space<vmem>>, vector<8x8x128xbf16>
    %57 = vector.shape_cast %56 : vector<8x8x128xbf16> to vector<64x128xbf16>
    %c0_48 = arith.constant 0 : index
    %c2_49 = arith.constant 2 : index
    %c0_50 = arith.constant 0 : index
    %c0_51 = arith.constant 0 : index
    %58 = vector.load %arg3[%c0_48, %c2_49, %c0_50, %c0_51] : memref<4x4x128x128xbf16, #tpu.memory_space<vmem>>, vector<1x1x128x128xbf16>
    %59 = vector.shape_cast %58 : vector<1x1x128x128xbf16> to vector<128x128xbf16>
    %cst_52 = arith.constant dense<0.000000e+00> : vector<64x128xf32>
    %60 = tpu.matmul %57, %59, %cst_52 {dimension_numbers = #tpu.dot_dimension_numbers<[1], [0], [0], [1], [0, 0, 1, 1], [], []>} : vector<64x128xbf16>, vector<128x128xbf16>, vector<64x128xf32> -> vector<64x128xf32>
    %61 = arith.addf %55, %60 : vector<64x128xf32>
    %c1_53 = arith.constant 1 : index
    %c1_54 = arith.constant 1 : index
    %c0_55 = arith.constant 0 : index
    %62 = vector.load %arg6[%c1_53, %c1_54, %c0_55] : memref<10x10x128xbf16, #tpu.memory_space<vmem>>, vector<8x8x128xbf16>
    %63 = vector.shape_cast %62 : vector<8x8x128xbf16> to vector<64x128xbf16>
    %c0_56 = arith.constant 0 : index
    %c3_57 = arith.constant 3 : index
    %c0_58 = arith.constant 0 : index
    %c0_59 = arith.constant 0 : index
    %64 = vector.load %arg3[%c0_56, %c3_57, %c0_58, %c0_59] : memref<4x4x128x128xbf16, #tpu.memory_space<vmem>>, vector<1x1x128x128xbf16>
    %65 = vector.shape_cast %64 : vector<1x1x128x128xbf16> to vector<128x128xbf16>
    %cst_60 = arith.constant dense<0.000000e+00> : vector<64x128xf32>
    %66 = tpu.matmul %63, %65, %cst_60 {dimension_numbers = #tpu.dot_dimension_numbers<[1], [0], [0], [1], [0, 0, 1, 1], [], []>} : vector<64x128xbf16>, vector<128x128xbf16>, vector<64x128xf32> -> vector<64x128xf32>
    %67 = arith.addf %61, %66 : vector<64x128xf32>
    %68 = arith.truncf %67 : vector<64x128xf32> to vector<64x128xbf16>
    %c0_61 = arith.constant 0 : index
    %c0_62 = arith.constant 0 : index
    %c0_63 = arith.constant 0 : index
    %c0_64 = arith.constant 0 : index
    %69 = vector.load %arg4[%c0_61, %c0_62, %c0_63, %c0_64] : memref<1x4x64x128xbf16, #tpu.memory_space<vmem>>, vector<1x1x64x128xbf16>
    %70 = vector.shape_cast %69 : vector<1x1x64x128xbf16> to vector<64x128xbf16>
    %71 = vector.shape_cast %68 : vector<64x128xbf16> to vector<1x1x64x128xbf16>
    tpu.vector_store %arg4[%c0_61, %c0_62, %c0_63, %c0_64], %71 {strides = array<i32>} : memref<1x4x64x128xbf16, #tpu.memory_space<vmem>>, vector<1x1x64x128xbf16>,
    %cst_65 = arith.constant dense<0.000000e+00> : vector<128xf32>
    %72 = vector.multi_reduction <add>, %67, %cst_65 [0] : vector<64x128xf32> to vector<128xf32>
    %73 = vector.shape_cast %72 : vector<128xf32> to vector<1x128xf32>
    %74 = arith.addf %41, %73 : vector<1x128xf32>
    %75 = arith.mulf %67, %67 : vector<64x128xf32>
    %cst_66 = arith.constant dense<0.000000e+00> : vector<128xf32>
    %76 = vector.multi_reduction <add>, %75, %cst_66 [0] : vector<64x128xf32> to vector<128xf32>
    %77 = vector.shape_cast %76 : vector<128xf32> to vector<1x128xf32>
    %78 = arith.addf %42, %77 : vector<1x128xf32>
    %cst_67 = arith.constant 0.000000e+00 : f32
    %79 = vector.broadcast %cst_67 : f32 to vector<64x128xf32>
    %c0_68 = arith.constant 0 : index
    %c1_69 = arith.constant 1 : index
    %c0_70 = arith.constant 0 : index
    %80 = vector.load %arg6[%c0_68, %c1_69, %c0_70] : memref<10x10x128xbf16, #tpu.memory_space<vmem>>, vector<8x8x128xbf16>
    %81 = vector.shape_cast %80 : vector<8x8x128xbf16> to vector<64x128xbf16>
    %c1_71 = arith.constant 1 : index
    %c0_72 = arith.constant 0 : index
    %c0_73 = arith.constant 0 : index
    %c0_74 = arith.constant 0 : index
    %82 = vector.load %arg3[%c1_71, %c0_72, %c0_73, %c0_74] : memref<4x4x128x128xbf16, #tpu.memory_space<vmem>>, vector<1x1x128x128xbf16>
    %83 = vector.shape_cast %82 : vector<1x1x128x128xbf16> to vector<128x128xbf16>
    %cst_75 = arith.constant dense<0.000000e+00> : vector<64x128xf32>
    %84 = tpu.matmul %81, %83, %cst_75 {dimension_numbers = #tpu.dot_dimension_numbers<[1], [0], [0], [1], [0, 0, 1, 1], [], []>} : vector<64x128xbf16>, vector<128x128xbf16>, vector<64x128xf32> -> vector<64x128xf32>
    %85 = arith.addf %79, %84 : vector<64x128xf32>
    %c0_76 = arith.constant 0 : index
    %c2_77 = arith.constant 2 : index
    %c0_78 = arith.constant 0 : index
    %86 = vector.load %arg6[%c0_76, %c2_77, %c0_78] : memref<10x10x128xbf16, #tpu.memory_space<vmem>>, vector<8x8x128xbf16>
    %87 = vector.shape_cast %86 : vector<8x8x128xbf16> to vector<64x128xbf16>
    %c1_79 = arith.constant 1 : index
    %c1_80 = arith.constant 1 : index
    %c0_81 = arith.constant 0 : index
    %c0_82 = arith.constant 0 : index
    %88 = vector.load %arg3[%c1_79, %c1_80, %c0_81, %c0_82] : memref<4x4x128x128xbf16, #tpu.memory_space<vmem>>, vector<1x1x128x128xbf16>
    %89 = vector.shape_cast %88 : vector<1x1x128x128xbf16> to vector<128x128xbf16>
    %cst_83 = arith.constant dense<0.000000e+00> : vector<64x128xf32>
    %90 = tpu.matmul %87, %89, %cst_83 {dimension_numbers = #tpu.dot_dimension_numbers<[1], [0], [0], [1], [0, 0, 1, 1], [], []>} : vector<64x128xbf16>, vector<128x128xbf16>, vector<64x128xf32> -> vector<64x128xf32>
    %91 = arith.addf %85, %90 : vector<64x128xf32>
    %c1_84 = arith.constant 1 : index
    %c1_85 = arith.constant 1 : index
    %c0_86 = arith.constant 0 : index
    %92 = vector.load %arg6[%c1_84, %c1_85, %c0_86] : memref<10x10x128xbf16, #tpu.memory_space<vmem>>, vector<8x8x128xbf16>
    %93 = vector.shape_cast %92 : vector<8x8x128xbf16> to vector<64x128xbf16>
    %c1_87 = arith.constant 1 : index
    %c2_88 = arith.constant 2 : index
    %c0_89 = arith.constant 0 : index
    %c0_90 = arith.constant 0 : index
    %94 = vector.load %arg3[%c1_87, %c2_88, %c0_89, %c0_90] : memref<4x4x128x128xbf16, #tpu.memory_space<vmem>>, vector<1x1x128x128xbf16>
    %95 = vector.shape_cast %94 : vector<1x1x128x128xbf16> to vector<128x128xbf16>
    %cst_91 = arith.constant dense<0.000000e+00> : vector<64x128xf32>
    %96 = tpu.matmul %93, %95, %cst_91 {dimension_numbers = #tpu.dot_dimension_numbers<[1], [0], [0], [1], [0, 0, 1, 1], [], []>} : vector<64x128xbf16>, vector<128x128xbf16>, vector<64x128xf32> -> vector<64x128xf32>
    %97 = arith.addf %91, %96 : vector<64x128xf32>
    %c1_92 = arith.constant 1 : index
    %c2_93 = arith.constant 2 : index
    %c0_94 = arith.constant 0 : index
    %98 = vector.load %arg6[%c1_92, %c2_93, %c0_94] : memref<10x10x128xbf16, #tpu.memory_space<vmem>>, vector<8x8x128xbf16>
    %99 = vector.shape_cast %98 : vector<8x8x128xbf16> to vector<64x128xbf16>
    %c1_95 = arith.constant 1 : index
    %c3_96 = arith.constant 3 : index
    %c0_97 = arith.constant 0 : index
    %c0_98 = arith.constant 0 : index
    %100 = vector.load %arg3[%c1_95, %c3_96, %c0_97, %c0_98] : memref<4x4x128x128xbf16, #tpu.memory_space<vmem>>, vector<1x1x128x128xbf16>
    %101 = vector.shape_cast %100 : vector<1x1x128x128xbf16> to vector<128x128xbf16>
    %cst_99 = arith.constant dense<0.000000e+00> : vector<64x128xf32>
    %102 = tpu.matmul %99, %101, %cst_99 {dimension_numbers = #tpu.dot_dimension_numbers<[1], [0], [0], [1], [0, 0, 1, 1], [], []>} : vector<64x128xbf16>, vector<128x128xbf16>, vector<64x128xf32> -> vector<64x128xf32>
    %103 = arith.addf %97, %102 : vector<64x128xf32>
    %104 = arith.truncf %103 : vector<64x128xf32> to vector<64x128xbf16>
    %c0_100 = arith.constant 0 : index
    %c1_101 = arith.constant 1 : index
    %c0_102 = arith.constant 0 : index
    %c0_103 = arith.constant 0 : index
    %105 = vector.load %arg4[%c0_100, %c1_101, %c0_102, %c0_103] : memref<1x4x64x128xbf16, #tpu.memory_space<vmem>>, vector<1x1x64x128xbf16>
    %106 = vector.shape_cast %105 : vector<1x1x64x128xbf16> to vector<64x128xbf16>
    %107 = vector.shape_cast %104 : vector<64x128xbf16> to vector<1x1x64x128xbf16>
    tpu.vector_store %arg4[%c0_100, %c1_101, %c0_102, %c0_103], %107 {strides = array<i32>} : memref<1x4x64x128xbf16, #tpu.memory_space<vmem>>, vector<1x1x64x128xbf16>,
    %cst_104 = arith.constant dense<0.000000e+00> : vector<128xf32>
    %108 = vector.multi_reduction <add>, %103, %cst_104 [0] : vector<64x128xf32> to vector<128xf32>
    %109 = vector.shape_cast %108 : vector<128xf32> to vector<1x128xf32>
    %110 = arith.addf %74, %109 : vector<1x128xf32>
    %111 = arith.mulf %103, %103 : vector<64x128xf32>
    %cst_105 = arith.constant dense<0.000000e+00> : vector<128xf32>
    %112 = vector.multi_reduction <add>, %111, %cst_105 [0] : vector<64x128xf32> to vector<128xf32>
    %113 = vector.shape_cast %112 : vector<128xf32> to vector<1x128xf32>
    %114 = arith.addf %78, %113 : vector<1x128xf32>
    %cst_106 = arith.constant 0.000000e+00 : f32
    %115 = vector.broadcast %cst_106 : f32 to vector<64x128xf32>
    %c1_107 = arith.constant 1 : index
    %c0_108 = arith.constant 0 : index
    %c0_109 = arith.constant 0 : index
    %116 = vector.load %arg6[%c1_107, %c0_108, %c0_109] : memref<10x10x128xbf16, #tpu.memory_space<vmem>>, vector<8x8x128xbf16>
    %117 = vector.shape_cast %116 : vector<8x8x128xbf16> to vector<64x128xbf16>
    %c2_110 = arith.constant 2 : index
    %c0_111 = arith.constant 0 : index
    %c0_112 = arith.constant 0 : index
    %c0_113 = arith.constant 0 : index
    %118 = vector.load %arg3[%c2_110, %c0_111, %c0_112, %c0_113] : memref<4x4x128x128xbf16, #tpu.memory_space<vmem>>, vector<1x1x128x128xbf16>
    %119 = vector.shape_cast %118 : vector<1x1x128x128xbf16> to vector<128x128xbf16>
    %cst_114 = arith.constant dense<0.000000e+00> : vector<64x128xf32>
    %120 = tpu.matmul %117, %119, %cst_114 {dimension_numbers = #tpu.dot_dimension_numbers<[1], [0], [0], [1], [0, 0, 1, 1], [], []>} : vector<64x128xbf16>, vector<128x128xbf16>, vector<64x128xf32> -> vector<64x128xf32>
    %121 = arith.addf %115, %120 : vector<64x128xf32>
    %c1_115 = arith.constant 1 : index
    %c1_116 = arith.constant 1 : index
    %c0_117 = arith.constant 0 : index
    %122 = vector.load %arg6[%c1_115, %c1_116, %c0_117] : memref<10x10x128xbf16, #tpu.memory_space<vmem>>, vector<8x8x128xbf16>
    %123 = vector.shape_cast %122 : vector<8x8x128xbf16> to vector<64x128xbf16>
    %c2_118 = arith.constant 2 : index
    %c1_119 = arith.constant 1 : index
    %c0_120 = arith.constant 0 : index
    %c0_121 = arith.constant 0 : index
    %124 = vector.load %arg3[%c2_118, %c1_119, %c0_120, %c0_121] : memref<4x4x128x128xbf16, #tpu.memory_space<vmem>>, vector<1x1x128x128xbf16>
    %125 = vector.shape_cast %124 : vector<1x1x128x128xbf16> to vector<128x128xbf16>
    %cst_122 = arith.constant dense<0.000000e+00> : vector<64x128xf32>
    %126 = tpu.matmul %123, %125, %cst_122 {dimension_numbers = #tpu.dot_dimension_numbers<[1], [0], [0], [1], [0, 0, 1, 1], [], []>} : vector<64x128xbf16>, vector<128x128xbf16>, vector<64x128xf32> -> vector<64x128xf32>
    %127 = arith.addf %121, %126 : vector<64x128xf32>
    %c2_123 = arith.constant 2 : index
    %c0_124 = arith.constant 0 : index
    %c0_125 = arith.constant 0 : index
    %128 = vector.load %arg6[%c2_123, %c0_124, %c0_125] : memref<10x10x128xbf16, #tpu.memory_space<vmem>>, vector<8x8x128xbf16>
    %129 = vector.shape_cast %128 : vector<8x8x128xbf16> to vector<64x128xbf16>
    %c2_126 = arith.constant 2 : index
    %c2_127 = arith.constant 2 : index
    %c0_128 = arith.constant 0 : index
    %c0_129 = arith.constant 0 : index
    %130 = vector.load %arg3[%c2_126, %c2_127, %c0_128, %c0_129] : memref<4x4x128x128xbf16, #tpu.memory_space<vmem>>, vector<1x1x128x128xbf16>
    %131 = vector.shape_cast %130 : vector<1x1x128x128xbf16> to vector<128x128xbf16>
    %cst_130 = arith.constant dense<0.000000e+00> : vector<64x128xf32>
    %132 = tpu.matmul %129, %131, %cst_130 {dimension_numbers = #tpu.dot_dimension_numbers<[1], [0], [0], [1], [0, 0, 1, 1], [], []>} : vector<64x128xbf16>, vector<128x128xbf16>, vector<64x128xf32> -> vector<64x128xf32>
    %133 = arith.addf %127, %132 : vector<64x128xf32>
    %c2_131 = arith.constant 2 : index
    %c1_132 = arith.constant 1 : index
    %c0_133 = arith.constant 0 : index
    %134 = vector.load %arg6[%c2_131, %c1_132, %c0_133] : memref<10x10x128xbf16, #tpu.memory_space<vmem>>, vector<8x8x128xbf16>
    %135 = vector.shape_cast %134 : vector<8x8x128xbf16> to vector<64x128xbf16>
    %c2_134 = arith.constant 2 : index
    %c3_135 = arith.constant 3 : index
    %c0_136 = arith.constant 0 : index
    %c0_137 = arith.constant 0 : index
    %136 = vector.load %arg3[%c2_134, %c3_135, %c0_136, %c0_137] : memref<4x4x128x128xbf16, #tpu.memory_space<vmem>>, vector<1x1x128x128xbf16>
    %137 = vector.shape_cast %136 : vector<1x1x128x128xbf16> to vector<128x128xbf16>
    %cst_138 = arith.constant dense<0.000000e+00> : vector<64x128xf32>
    %138 = tpu.matmul %135, %137, %cst_138 {dimension_numbers = #tpu.dot_dimension_numbers<[1], [0], [0], [1], [0, 0, 1, 1], [], []>} : vector<64x128xbf16>, vector<128x128xbf16>, vector<64x128xf32> -> vector<64x128xf32>
    %139 = arith.addf %133, %138 : vector<64x128xf32>
    %140 = arith.truncf %139 : vector<64x128xf32> to vector<64x128xbf16>
    %c0_139 = arith.constant 0 : index
    %c2_140 = arith.constant 2 : index
    %c0_141 = arith.constant 0 : index
    %c0_142 = arith.constant 0 : index
    %141 = vector.load %arg4[%c0_139, %c2_140, %c0_141, %c0_142] : memref<1x4x64x128xbf16, #tpu.memory_space<vmem>>, vector<1x1x64x128xbf16>
    %142 = vector.shape_cast %141 : vector<1x1x64x128xbf16> to vector<64x128xbf16>
    %143 = vector.shape_cast %140 : vector<64x128xbf16> to vector<1x1x64x128xbf16>
    tpu.vector_store %arg4[%c0_139, %c2_140, %c0_141, %c0_142], %143 {strides = array<i32>} : memref<1x4x64x128xbf16, #tpu.memory_space<vmem>>, vector<1x1x64x128xbf16>,
    %cst_143 = arith.constant dense<0.000000e+00> : vector<128xf32>
    %144 = vector.multi_reduction <add>, %139, %cst_143 [0] : vector<64x128xf32> to vector<128xf32>
    %145 = vector.shape_cast %144 : vector<128xf32> to vector<1x128xf32>
    %146 = arith.addf %110, %145 : vector<1x128xf32>
    %147 = arith.mulf %139, %139 : vector<64x128xf32>
    %cst_144 = arith.constant dense<0.000000e+00> : vector<128xf32>
    %148 = vector.multi_reduction <add>, %147, %cst_144 [0] : vector<64x128xf32> to vector<128xf32>
    %149 = vector.shape_cast %148 : vector<128xf32> to vector<1x128xf32>
    %150 = arith.addf %114, %149 : vector<1x128xf32>
    %cst_145 = arith.constant 0.000000e+00 : f32
    %151 = vector.broadcast %cst_145 : f32 to vector<64x128xf32>
    %c1_146 = arith.constant 1 : index
    %c1_147 = arith.constant 1 : index
    %c0_148 = arith.constant 0 : index
    %152 = vector.load %arg6[%c1_146, %c1_147, %c0_148] : memref<10x10x128xbf16, #tpu.memory_space<vmem>>, vector<8x8x128xbf16>
    %153 = vector.shape_cast %152 : vector<8x8x128xbf16> to vector<64x128xbf16>
    %c3_149 = arith.constant 3 : index
    %c0_150 = arith.constant 0 : index
    %c0_151 = arith.constant 0 : index
    %c0_152 = arith.constant 0 : index
    %154 = vector.load %arg3[%c3_149, %c0_150, %c0_151, %c0_152] : memref<4x4x128x128xbf16, #tpu.memory_space<vmem>>, vector<1x1x128x128xbf16>
    %155 = vector.shape_cast %154 : vector<1x1x128x128xbf16> to vector<128x128xbf16>
    %cst_153 = arith.constant dense<0.000000e+00> : vector<64x128xf32>
    %156 = tpu.matmul %153, %155, %cst_153 {dimension_numbers = #tpu.dot_dimension_numbers<[1], [0], [0], [1], [0, 0, 1, 1], [], []>} : vector<64x128xbf16>, vector<128x128xbf16>, vector<64x128xf32> -> vector<64x128xf32>
    %157 = arith.addf %151, %156 : vector<64x128xf32>
    %c1_154 = arith.constant 1 : index
    %c2_155 = arith.constant 2 : index
    %c0_156 = arith.constant 0 : index
    %158 = vector.load %arg6[%c1_154, %c2_155, %c0_156] : memref<10x10x128xbf16, #tpu.memory_space<vmem>>, vector<8x8x128xbf16>
    %159 = vector.shape_cast %158 : vector<8x8x128xbf16> to vector<64x128xbf16>
    %c3_157 = arith.constant 3 : index
    %c1_158 = arith.constant 1 : index
    %c0_159 = arith.constant 0 : index
    %c0_160 = arith.constant 0 : index
    %160 = vector.load %arg3[%c3_157, %c1_158, %c0_159, %c0_160] : memref<4x4x128x128xbf16, #tpu.memory_space<vmem>>, vector<1x1x128x128xbf16>
    %161 = vector.shape_cast %160 : vector<1x1x128x128xbf16> to vector<128x128xbf16>
    %cst_161 = arith.constant dense<0.000000e+00> : vector<64x128xf32>
    %162 = tpu.matmul %159, %161, %cst_161 {dimension_numbers = #tpu.dot_dimension_numbers<[1], [0], [0], [1], [0, 0, 1, 1], [], []>} : vector<64x128xbf16>, vector<128x128xbf16>, vector<64x128xf32> -> vector<64x128xf32>
    %163 = arith.addf %157, %162 : vector<64x128xf32>
    %c2_162 = arith.constant 2 : index
    %c1_163 = arith.constant 1 : index
    %c0_164 = arith.constant 0 : index
    %164 = vector.load %arg6[%c2_162, %c1_163, %c0_164] : memref<10x10x128xbf16, #tpu.memory_space<vmem>>, vector<8x8x128xbf16>
    %165 = vector.shape_cast %164 : vector<8x8x128xbf16> to vector<64x128xbf16>
    %c3_165 = arith.constant 3 : index
    %c2_166 = arith.constant 2 : index
    %c0_167 = arith.constant 0 : index
    %c0_168 = arith.constant 0 : index
    %166 = vector.load %arg3[%c3_165, %c2_166, %c0_167, %c0_168] : memref<4x4x128x128xbf16, #tpu.memory_space<vmem>>, vector<1x1x128x128xbf16>
    %167 = vector.shape_cast %166 : vector<1x1x128x128xbf16> to vector<128x128xbf16>
    %cst_169 = arith.constant dense<0.000000e+00> : vector<64x128xf32>
    %168 = tpu.matmul %165, %167, %cst_169 {dimension_numbers = #tpu.dot_dimension_numbers<[1], [0], [0], [1], [0, 0, 1, 1], [], []>} : vector<64x128xbf16>, vector<128x128xbf16>, vector<64x128xf32> -> vector<64x128xf32>
    %169 = arith.addf %163, %168 : vector<64x128xf32>
    %c2_170 = arith.constant 2 : index
    %c2_171 = arith.constant 2 : index
    %c0_172 = arith.constant 0 : index
    %170 = vector.load %arg6[%c2_170, %c2_171, %c0_172] : memref<10x10x128xbf16, #tpu.memory_space<vmem>>, vector<8x8x128xbf16>
    %171 = vector.shape_cast %170 : vector<8x8x128xbf16> to vector<64x128xbf16>
    %c3_173 = arith.constant 3 : index
    %c3_174 = arith.constant 3 : index
    %c0_175 = arith.constant 0 : index
    %c0_176 = arith.constant 0 : index
    %172 = vector.load %arg3[%c3_173, %c3_174, %c0_175, %c0_176] : memref<4x4x128x128xbf16, #tpu.memory_space<vmem>>, vector<1x1x128x128xbf16>
    %173 = vector.shape_cast %172 : vector<1x1x128x128xbf16> to vector<128x128xbf16>
    %cst_177 = arith.constant dense<0.000000e+00> : vector<64x128xf32>
    %174 = tpu.matmul %171, %173, %cst_177 {dimension_numbers = #tpu.dot_dimension_numbers<[1], [0], [0], [1], [0, 0, 1, 1], [], []>} : vector<64x128xbf16>, vector<128x128xbf16>, vector<64x128xf32> -> vector<64x128xf32>
    %175 = arith.addf %169, %174 : vector<64x128xf32>
    %176 = arith.truncf %175 : vector<64x128xf32> to vector<64x128xbf16>
    %c0_178 = arith.constant 0 : index
    %c3_179 = arith.constant 3 : index
    %c0_180 = arith.constant 0 : index
    %c0_181 = arith.constant 0 : index
    %177 = vector.load %arg4[%c0_178, %c3_179, %c0_180, %c0_181] : memref<1x4x64x128xbf16, #tpu.memory_space<vmem>>, vector<1x1x64x128xbf16>
    %178 = vector.shape_cast %177 : vector<1x1x64x128xbf16> to vector<64x128xbf16>
    %179 = vector.shape_cast %176 : vector<64x128xbf16> to vector<1x1x64x128xbf16>
    tpu.vector_store %arg4[%c0_178, %c3_179, %c0_180, %c0_181], %179 {strides = array<i32>} : memref<1x4x64x128xbf16, #tpu.memory_space<vmem>>, vector<1x1x64x128xbf16>,
    %cst_182 = arith.constant dense<0.000000e+00> : vector<128xf32>
    %180 = vector.multi_reduction <add>, %175, %cst_182 [0] : vector<64x128xf32> to vector<128xf32>
    %181 = vector.shape_cast %180 : vector<128xf32> to vector<1x128xf32>
    %182 = arith.addf %146, %181 : vector<1x128xf32>
    %183 = arith.mulf %175, %175 : vector<64x128xf32>
    %cst_183 = arith.constant dense<0.000000e+00> : vector<128xf32>
    %184 = vector.multi_reduction <add>, %183, %cst_183 [0] : vector<64x128xf32> to vector<128xf32>
    %185 = vector.shape_cast %184 : vector<128xf32> to vector<1x128xf32>
    %186 = arith.addf %150, %185 : vector<1x128xf32>
    %c0_184 = arith.constant 0 : index
    %c0_185 = arith.constant 0 : index
    %c0_186 = arith.constant 0 : index
    %187 = vector.load %arg5[%c0_184, %c0_185, %c0_186] : memref<1x8x128xf32, #tpu.memory_space<vmem>>, vector<1x1x128xf32>
    %188 = vector.shape_cast %187 : vector<1x1x128xf32> to vector<1x128xf32>
    %189 = vector.shape_cast %182 : vector<1x128xf32> to vector<1x1x128xf32>
    tpu.vector_store %arg5[%c0_184, %c0_185, %c0_186], %189 {strides = array<i32>} : memref<1x8x128xf32, #tpu.memory_space<vmem>>, vector<1x1x128xf32>,
    %c0_187 = arith.constant 0 : index
    %c1_188 = arith.constant 1 : index
    %c0_189 = arith.constant 0 : index
    %190 = vector.load %arg5[%c0_187, %c1_188, %c0_189] : memref<1x8x128xf32, #tpu.memory_space<vmem>>, vector<1x1x128xf32>
    %191 = vector.shape_cast %190 : vector<1x1x128xf32> to vector<1x128xf32>
    %192 = vector.shape_cast %186 : vector<1x128xf32> to vector<1x1x128xf32>
    tpu.vector_store %arg5[%c0_187, %c1_188, %c0_189], %192 {strides = array<i32>} : memref<1x8x128xf32, #tpu.memory_space<vmem>>, vector<1x1x128xf32>,
    %cst_190 = arith.constant 0.000000e+00 : f32
    %193 = vector.broadcast %cst_190 : f32 to vector<6x128xf32>
    %c0_191 = arith.constant 0 : index
    %c2_192 = arith.constant 2 : index
    %c0_193 = arith.constant 0 : index
    %194 = vector.load %arg5[%c0_191, %c2_192, %c0_193] : memref<1x8x128xf32, #tpu.memory_space<vmem>>, vector<1x6x128xf32>
    %195 = vector.shape_cast %194 : vector<1x6x128xf32> to vector<6x128xf32>
    %196 = vector.shape_cast %193 : vector<6x128xf32> to vector<1x6x128xf32>
    tpu.vector_store %arg5[%c0_191, %c2_192, %c0_193], %196 {strides = array<i32>} : memref<1x8x128xf32, #tpu.memory_space<vmem>>, vector<1x6x128xf32>,
    return
  }
  func.func @transform_0(%arg0: i32) -> (i32, i32, i32, i32) {
    %c0_i32 = arith.constant 0 : i32
    %c0_i32_0 = arith.constant 0 : i32
    %c0_i32_1 = arith.constant 0 : i32
    %c0_i32_2 = arith.constant 0 : i32
    return %arg0, %c0_i32, %c0_i32_0, %c0_i32_1 : i32, i32, i32, i32
  }
  func.func @transform_1(%arg0: i32) -> (i32, i32, i32) {
    %c0_i32 = arith.constant 0 : i32
    %c0_i32_0 = arith.constant 0 : i32
    %c0_i32_1 = arith.constant 0 : i32
    %c0_i32_2 = arith.constant 0 : i32
    return %c0_i32, %c0_i32_0, %c0_i32_1 : i32, i32, i32
  }
  func.func @transform_2(%arg0: i32) -> (i32, i32, i32, i32) {
    %c0_i32 = arith.constant 0 : i32
    %c0_i32_0 = arith.constant 0 : i32
    %c0_i32_1 = arith.constant 0 : i32
    %c0_i32_2 = arith.constant 0 : i32
    %c0_i32_3 = arith.constant 0 : i32
    return %c0_i32, %c0_i32_0, %c0_i32_1, %c0_i32_2 : i32, i32, i32, i32
  }
  func.func @transform_3(%arg0: i32) -> (i32, i32, i32, i32) {
    %c0_i32 = arith.constant 0 : i32
    %c0_i32_0 = arith.constant 0 : i32
    %c0_i32_1 = arith.constant 0 : i32
    %c0_i32_2 = arith.constant 0 : i32
    return %arg0, %c0_i32, %c0_i32_0, %c0_i32_1 : i32, i32, i32, i32
  }
  func.func @transform_4(%arg0: i32) -> (i32, i32, i32) {
    %c0_i32 = arith.constant 0 : i32
    %c0_i32_0 = arith.constant 0 : i32
    %c0_i32_1 = arith.constant 0 : i32
    return %arg0, %c0_i32, %c0_i32_0 : i32, i32, i32
  }
}

module attributes {stable_mosaic.version = 11 : i64} {
  func.func @_bn_affine_kernel(%arg0: i32, %arg1: i32, %arg2: memref<1x1x64x128xbf16, #tpu.memory_space<vmem>>, %arg3: memref<8x128xf32, #tpu.memory_space<vmem>>, %arg4: memref<1x1x64x128xf32, #tpu.memory_space<vmem>>) attributes {dimension_semantics = [#tpu.dimension_semantics<parallel>, #tpu.dimension_semantics<parallel>], iteration_bounds = array<i64: 2, 4>, scalar_prefetch = 0 : i64, scratch_operands = 0 : i64, tpu.core_type = #tpu.core_type<tc>, window_params = [{transform_indices = @transform_0, window_bounds = array<i64: 1, 1, 64, 128>}, {pipeline_mode = #tpu.pipeline_mode<synchronous>, transform_indices = @transform_1, window_bounds = array<i64: 8, 128>}, {transform_indices = @transform_2, window_bounds = array<i64: 1, 1, 64, 128>}]} {
    %c0 = arith.constant 0 : index
    %c0_0 = arith.constant 0 : index
    %c0_1 = arith.constant 0 : index
    %c0_2 = arith.constant 0 : index
    %0 = vector.load %arg2[%c0, %c0_0, %c0_1, %c0_2] : memref<1x1x64x128xbf16, #tpu.memory_space<vmem>>, vector<1x1x64x128xbf16>
    %1 = vector.shape_cast %0 : vector<1x1x64x128xbf16> to vector<64x128xbf16>
    %2 = arith.extf %1 : vector<64x128xbf16> to vector<64x128xf32>
    %c0_3 = arith.constant 0 : index
    %c0_4 = arith.constant 0 : index
    %3 = vector.load %arg3[%c0_3, %c0_4] : memref<8x128xf32, #tpu.memory_space<vmem>>, vector<1x128xf32>
    %4 = vector.broadcast %3 : vector<1x128xf32> to vector<64x128xf32>
    %5 = arith.mulf %2, %4 : vector<64x128xf32>
    %c1 = arith.constant 1 : index
    %c0_5 = arith.constant 0 : index
    %6 = vector.load %arg3[%c1, %c0_5] : memref<8x128xf32, #tpu.memory_space<vmem>>, vector<1x128xf32>
    %7 = vector.broadcast %6 : vector<1x128xf32> to vector<64x128xf32>
    %8 = arith.addf %5, %7 : vector<64x128xf32>
    %c0_6 = arith.constant 0 : index
    %c0_7 = arith.constant 0 : index
    %c0_8 = arith.constant 0 : index
    %c0_9 = arith.constant 0 : index
    %9 = vector.load %arg4[%c0_6, %c0_7, %c0_8, %c0_9] : memref<1x1x64x128xf32, #tpu.memory_space<vmem>>, vector<1x1x64x128xf32>
    %10 = vector.shape_cast %9 : vector<1x1x64x128xf32> to vector<64x128xf32>
    %11 = vector.shape_cast %8 : vector<64x128xf32> to vector<1x1x64x128xf32>
    tpu.vector_store %arg4[%c0_6, %c0_7, %c0_8, %c0_9], %11 {strides = array<i32>} : memref<1x1x64x128xf32, #tpu.memory_space<vmem>>, vector<1x1x64x128xf32>,
    return
  }
  func.func @transform_0(%arg0: i32, %arg1: i32) -> (i32, i32, i32, i32) {
    %c0_i32 = arith.constant 0 : i32
    %c0_i32_0 = arith.constant 0 : i32
    %c0_i32_1 = arith.constant 0 : i32
    return %arg0, %arg1, %c0_i32, %c0_i32_0 : i32, i32, i32, i32
  }
  func.func @transform_1(%arg0: i32, %arg1: i32) -> (i32, i32) {
    %c0_i32 = arith.constant 0 : i32
    %c0_i32_0 = arith.constant 0 : i32
    %c0_i32_1 = arith.constant 0 : i32
    return %c0_i32, %c0_i32_0 : i32, i32
  }
  func.func @transform_2(%arg0: i32, %arg1: i32) -> (i32, i32, i32, i32) {
    %c0_i32 = arith.constant 0 : i32
    %c0_i32_0 = arith.constant 0 : i32
    %c0_i32_1 = arith.constant 0 : i32
    return %arg0, %arg1, %c0_i32, %c0_i32_0 : i32, i32, i32, i32
  }
}

</mosaic_0001>

<llo_original>
// kernel: unet_innermost_forward.3
$region0: #{unet_innermost_forward.3}
  #allocation0 [shape = 'u32[]', space=smem, size = 0x4, offset = 0x4, fixed_abs, tag = 'smem constant byte address 0x4 - core index']
  #allocation1 [shape = 'u32[72,128]{1,0:T(1,128)}', space=vmem, size = 0x9000, scoped, tag = 'internal scratch']
  %s0 = inlined_call_operand.vmem [shape: bf16[2,4,64,128], index: 0, kind: input, shape index: {}]
  %s1 = inlined_call_operand.vmem [shape: f32[8,128], index: 1, kind: input, shape index: {}]
  %s2 = inlined_call_operand.vmem [shape: f32[2,4,64,128], index: 2, kind: output, shape index: {}]
  %s3 = sld [smem:[#allocation0]]
  $region41: #{unet_innermost_forward.3} parent=0
    _
  %s5 = ssub.s32 1, %s3
  %s6 = scalar_select 0, %s5, %s3
  loop: start=0, step=1, limit=10
  $region2: #{unet_innermost_forward.3} parent=0 // loop_pre_header
    _
  $region3: #{unet_innermost_forward.3} parent=0 // loop_header
    %s8 = sphi 0, %s12
    %p9 = scmp.ge.s32.totalorder %s8, 10
    %s15 = sphi 0, %s27
    %s16 = sphi 0, %s23
    %s17 = sphi 0, %s15
    %s18 = sphi 0, %s16
    %s19 = sphi 0, %s17
    %s20 = sphi 0, %s18
    %s32 = sphi 0, %s34
    %s35 = sphi 0, %s32
    %s36 = sphi 0, %s35
    %s52 = sphi 0, %s36
    %s56 = sphi 0, %s56
    %s58 = sphi 0, %s56
    %s59 = sphi 0, %s58
    %s73 = sphi 0, %s59
    %s81 = sphi 0, %s83
    %s84 = sphi 0, %s81
    %s85 = sphi 0, %s84
    %s101 = sphi 0, %s85
  $region4: #{unet_innermost_forward.3} parent=0 // loop_header_branch
    %11 = sbr.rel (%p9) target = $region8
  $region5: #{unet_innermost_forward.3} parent=0 // loop_body
    %s13 = ssub.s32 %s8, 1
    %s14 = ssub.s32 %s8, 2
    %s21 = sadd.s32 1, %s16
    %p22 = scmp.ge.s32.totalorder %s21, 4
    %s23 = scalar_select %p22, 0, %s21
    %s24 = sadd.s32 1, %s15
    %s25 = scalar_select %p22, %s24, %s15
    %p26 = scmp.ge.s32.totalorder %s25, 2
    %s27 = scalar_select %p26, 0, %s25
    %s28 = ssub.s32 %s15, %s27
    %s29 = ssub.s32 %s16, %s23
    %s30 = sor.u32 %s28, %s29
    %p31 = scmp.eq.s32.totalorder %s30, 0
    %s33 = sadd.s32 %s32, 1
    %s34 = scalar_select %p31, %s32, %s33
    %p37 = pneg %p31
    %p38 = scmp.eq.s32.totalorder %s8, 7
    %p39 = por %p37, %p38
    %p40 = scmp.ne.s32.totalorder %s32, %s35
    %p41 = scmp.eq.s32.totalorder %s8, 0
    %p42 = por %p40, %p41
    %p43 = scmp.ne.s32.totalorder %s32, %s35
    %p44 = scmp.eq.s32.totalorder %s13, 7
    %p45 = por %p43, %p44
    %p46 = scmp.ne.s32.totalorder %s35, %s36
    %p47 = scmp.eq.s32.totalorder %s13, 0
    %p48 = por %p46, %p47
    %p49 = scmp.ne.s32.totalorder %s35, %s36
    %p50 = scmp.eq.s32.totalorder %s14, 7
    %p51 = por %p49, %p50
    %p53 = scmp.ne.s32.totalorder %s36, %s52
    %p54 = scmp.eq.s32.totalorder %s14, 0
    %p55 = por %p53, %p54
    %s57 = sadd.s32 %s56, 1
    %p60 = scmp.eq.s32.totalorder %s8, 7
    %p61 = scmp.ne.s32.totalorder %s56, %s58
    %p62 = scmp.eq.s32.totalorder %s8, 0
    %p63 = por %p61, %p62
    %p64 = scmp.ne.s32.totalorder %s56, %s58
    %p65 = scmp.eq.s32.totalorder %s13, 7
    %p66 = por %p64, %p65
    %p67 = scmp.ne.s32.totalorder %s58, %s59
    %p68 = scmp.eq.s32.totalorder %s13, 0
    %p69 = por %p67, %p68
    %p70 = scmp.ne.s32.totalorder %s58, %s59
    %p71 = scmp.eq.s32.totalorder %s14, 7
    %p72 = por %p70, %p71
    %p74 = scmp.ne.s32.totalorder %s59, %s73
    %p75 = scmp.eq.s32.totalorder %s14, 0
    %p76 = por %p74, %p75
    %s77 = ssub.s32 %s15, %s27
    %s78 = ssub.s32 %s16, %s23
    %s79 = sor.u32 %s77, %s78
    %p80 = scmp.eq.s32.totalorder %s79, 0
    %s82 = sadd.s32 %s81, 1
    %s83 = scalar_select %p80, %s81, %s82
    %p86 = pneg %p80
    %p87 = scmp.eq.s32.totalorder %s8, 7
    %p88 = por %p86, %p87
    %p89 = scmp.ne.s32.totalorder %s81, %s84
    %p90 = scmp.eq.s32.totalorder %s8, 0
    %p91 = por %p89, %p90
    %p92 = scmp.ne.s32.totalorder %s81, %s84
    %p93 = scmp.eq.s32.totalorder %s13, 7
    %p94 = por %p92, %p93
    %p95 = scmp.ne.s32.totalorder %s84, %s85
    %p96 = scmp.eq.s32.totalorder %s13, 0
    %p97 = por %p95, %p96
    %p98 = scmp.ne.s32.totalorder %s84, %s85
    %p99 = scmp.eq.s32.totalorder %s14, 7
    %p100 = por %p98, %p99
    %p102 = scmp.ne.s32.totalorder %s85, %s101
    %p103 = scmp.eq.s32.totalorder %s14, 0
    %p104 = por %p102, %p103
    %p105 = scmp.le.s32.totalorder 1, %s8
    %p106 = scmp.lt.s32.totalorder %s8, 9
    %p107 = pnand %p105, %p106
    %p108 = pneg %p107
    // Predicated region
    $region9: #{unet_innermost_forward.3} parent=5 // pred_check
      _
    $region10: #{unet_innermost_forward.3} parent=5 // pred_check_branch
      %110 = sbr.rel (%p107) target = $region12
    $region11: #{unet_innermost_forward.3} parent=5 // pred_region
      %s111 = ssub.s32 %s8, 1
      // Predicated region
      $region13: #{unet_innermost_forward.3} parent=11 // pred_check
        %p112 = pneg %p69
      $region14: #{unet_innermost_forward.3} parent=11 // pred_check_branch
        %114 = sbr.rel (%p112) target = $region16
      $region15: #{unet_innermost_forward.3} parent=11 // pred_region
        _
      $region16: #{unet_innermost_forward.3} parent=11 // pred_fallthru
        _
    $region12: #{unet_innermost_forward.3} parent=5 // pred_fallthru
      _
    %p115 = scmp.lt.s32.totalorder %s8, 8
    // Predicated region
    $region17: #{unet_innermost_forward.3} parent=5 // pred_check
      %p116 = pneg %p115
    $region18: #{unet_innermost_forward.3} parent=5 // pred_check_branch
      %118 = sbr.rel (%p116) target = $region20
    $region19: #{unet_innermost_forward.3} parent=5 // pred_region
      // Predicated region
      $region21: #{unet_innermost_forward.3} parent=19 // pred_check
        %p119 = pneg %p42
      $region22: #{unet_innermost_forward.3} parent=19 // pred_check_branch
        %121 = sbr.rel (%p119) target = $region24
      $region23: #{unet_innermost_forward.3} parent=19 // pred_region
        %p122 = scmp.lt.s32.totalorder %s15, 1
        %s123 = scalar_select %p122, %s15, 1
        %p124 = scmp.lt.s32.totalorder %s16, 3
        %s125 = scalar_select %p124, %s16, 3
        %s126 = smul.addr %s125, 8
        %s127 = smul.addr %s123, 32
        %s128 = sadd.s32 %s126, %s127
        %s129 = smul.addr %s128, 4
        %s130 = scalar_lea.vmem %s0, %s129
      $region24: #{unet_innermost_forward.3} parent=19 // pred_fallthru
        _
    $region20: #{unet_innermost_forward.3} parent=5 // pred_fallthru
      _
    %p131 = scmp.le.s32.totalorder 1, %s8
    %p132 = scmp.lt.s32.totalorder %s8, 9
    %p133 = pnand %p131, %p132
    %p134 = pneg %p133
    // Predicated region
    $region25: #{unet_innermost_forward.3} parent=5 // pred_check
      _
    $region26: #{unet_innermost_forward.3} parent=5 // pred_check_branch
      %136 = sbr.rel (%p133) target = $region28
    $region27: #{unet_innermost_forward.3} parent=5 // pred_region
      %s137 = ssub.s32 %s8, 1
      %p138 = scmp.lt.s32.totalorder %s17, 1
      %s139 = scalar_select %p138, %s17, 1
      %p140 = scmp.lt.s32.totalorder %s18, 3
      %s141 = scalar_select %p140, %s18, 3
      %s142 = smul.addr %s141, 8
      %s143 = smul.addr %s139, 32
      %s144 = sadd.s32 %s142, %s143
      %s145 = smul.addr %s144, 4
      %s146 = scalar_lea.vmem %s0, %s145
      %p147 = pneg %p48
      %p148 = pneg %p45
      %p149 = pneg %p69
      %p150 = pneg %p66
      %p151 = pneg %p97
      %p152 = pneg %p94
      %p153 = scmp.lt.s32.totalorder %s17, 1
      %s154 = scalar_select %p153, %s17, 1
      %p155 = scmp.lt.s32.totalorder %s18, 3
      %s156 = scalar_select %p155, %s18, 3
      %s157 = smul.addr %s156, 8
      %s158 = smul.addr %s154, 32
      %s159 = sadd.s32 %s157, %s158
      %s160 = smul.addr %s159, 8
      %s161 = scalar_lea.vmem %s2, %s160
      %p162 = scmp.lt.s32.totalorder %s17, 1
      %s163 = scalar_select %p162, %s17, 1
      %p164 = scmp.lt.s32.totalorder %s18, 3
      %s165 = scalar_select %p164, %s18, 3
      %s166 = smul.addr %s165, 8
      %s167 = smul.addr %s163, 32
      %s168 = sadd.s32 %s166, %s167
      %s169 = smul.addr %s168, 4
      %s170 = scalar_lea.vmem %s0, %s169
      %p171 = scmp.lt.s32.totalorder %s17, 1
      %s172 = scalar_select %p171, %s17, 1
      %p173 = scmp.lt.s32.totalorder %s18, 3
      %s174 = scalar_select %p173, %s18, 3
      %s175 = smul.addr %s174, 8
      %s176 = smul.addr %s172, 32
      %s177 = sadd.s32 %s175, %s176
      %s178 = smul.addr %s177, 8
      %s179 = scalar_lea.vmem %s2, %s178
      %v180 = vld [vmem:[%s170] sm:$0xf]
      %v181 = vld [vmem:[%s170 + $0x4] sm:$0xf]
      %v182 = vld [vmem:[%s170 + $0x8] sm:$0xf]
      %v183 = vld [vmem:[%s170 + $0xc] sm:$0xf]
      %v184 = vld [vmem:[%s170 + $0x10] sm:$0xf]
      %v185 = vld [vmem:[%s170 + $0x14] sm:$0xf]
      %v186 = vld [vmem:[%s170 + $0x18] sm:$0xf]
      %v187 = vld [vmem:[%s170 + $0x1c] sm:$0xf]
      %v188 = vunpack.c.l.bf16 %v180
      %v189 = vunpack.c.l.bf16 %v181
      %v190 = vunpack.c.l.bf16 %v182
      %v191 = vunpack.c.l.bf16 %v183
      %v192 = vunpack.c.l.bf16 %v184
      %v193 = vunpack.c.l.bf16 %v185
      %v194 = vunpack.c.l.bf16 %v186
      %v195 = vunpack.c.l.bf16 %v187
      %v196 = vld [vmem:[%s1] sm:$0x1]
      %v197 = vperm.slane %v196, 0
      %v198 = vmul.f32 %v188, %v197
      %v199 = vmul.f32 %v189, %v197
      %v200 = vmul.f32 %v190, %v197
      %v201 = vmul.f32 %v191, %v197
      %v202 = vmul.f32 %v192, %v197
      %v203 = vmul.f32 %v193, %v197
      %v204 = vmul.f32 %v194, %v197
      %v205 = vmul.f32 %v195, %v197
      %v206 = vld [vmem:[%s1 + $0x1] sm:$0x1]
      %v207 = vperm.slane %v206, 0
      %v208 = vadd.f32 %v198, %v207
      %v209 = vadd.f32 %v199, %v207
      %v210 = vadd.f32 %v200, %v207
      %v211 = vadd.f32 %v201, %v207
      %v212 = vadd.f32 %v202, %v207
      %v213 = vadd.f32 %v203, %v207
      %v214 = vadd.f32 %v204, %v207
      %v215 = vadd.f32 %v205, %v207
      %216 = vst [vmem:[%s179] sm:$0xff] %v208
      %217 = vst [vmem:[%s179 + $0x8] sm:$0xff] %v209
      %218 = vst [vmem:[%s179 + $0x10] sm:$0xff] %v210
      %219 = vst [vmem:[%s179 + $0x18] sm:$0xff] %v211
      %220 = vst [vmem:[%s179 + $0x20] sm:$0xff] %v212
      %221 = vst [vmem:[%s179 + $0x28] sm:$0xff] %v213
      %222 = vst [vmem:[%s179 + $0x30] sm:$0xff] %v214
      %223 = vst [vmem:[%s179 + $0x38] sm:$0xff] %v215
      %p224 = scmp.lt.s32.totalorder %s17, 1
      %s225 = scalar_select %p224, %s17, 1
      %p226 = scmp.lt.s32.totalorder %s18, 3
      %s227 = scalar_select %p226, %s18, 3
      %s228 = smul.addr %s227, 8
      %s229 = smul.addr %s225, 32
      %s230 = sadd.s32 %s228, %s229
      %s231 = smul.addr %s230, 8
      %s232 = scalar_lea.vmem %s2, %s231
      // Predicated region
      $region29: #{unet_innermost_forward.3} parent=27 // pred_check
        %p233 = pneg %p94
      $region30: #{unet_innermost_forward.3} parent=27 // pred_check_branch
        %235 = sbr.rel (%p233) target = $region32
      $region31: #{unet_innermost_forward.3} parent=27 // pred_region
        _
      $region32: #{unet_innermost_forward.3} parent=27 // pred_fallthru
        _
    $region28: #{unet_innermost_forward.3} parent=5 // pred_fallthru
      _
    %p236 = scmp.le.s32.totalorder 2, %s8
    // Predicated region
    $region33: #{unet_innermost_forward.3} parent=5 // pred_check
      %p237 = pneg %p236
    $region34: #{unet_innermost_forward.3} parent=5 // pred_check_branch
      %239 = sbr.rel (%p237) target = $region36
    $region35: #{unet_innermost_forward.3} parent=5 // pred_region
      %s240 = ssub.s32 %s8, 2
      // Predicated region
      $region37: #{unet_innermost_forward.3} parent=35 // pred_check
        %p241 = pneg %p100
      $region38: #{unet_innermost_forward.3} parent=35 // pred_check_branch
        %243 = sbr.rel (%p241) target = $region40
      $region39: #{unet_innermost_forward.3} parent=35 // pred_region
        %p244 = scmp.lt.s32.totalorder %s19, 1
        %s245 = scalar_select %p244, %s19, 1
        %p246 = scmp.lt.s32.totalorder %s20, 3
        %s247 = scalar_select %p246, %s20, 3
        %s248 = smul.addr %s247, 8
        %s249 = smul.addr %s245, 32
        %s250 = sadd.s32 %s248, %s249
        %s251 = smul.addr %s250, 8
        %s252 = scalar_lea.vmem %s2, %s251
      $region40: #{unet_innermost_forward.3} parent=35 // pred_fallthru
        _
    $region36: #{unet_innermost_forward.3} parent=5 // pred_fallthru
      _
  $region6: #{unet_innermost_forward.3} parent=0 // loop_footer
    %s12 = sadd.s32 1, %s8
  $region7: #{unet_innermost_forward.3} parent=0 // loop_footer_branch
    %7 = sbr.rel target = $region3
  $region8: #{unet_innermost_forward.3} parent=0 // loop_exit
    _

// kernel: unet_innermost_forward.2
$region0: #{unet_innermost_forward.2}
  #allocation0 [shape = 'u32[]', space=smem, size = 0x4, offset = 0x4, fixed_abs, tag = 'smem constant byte address 0x4 - core index']
  #allocation1 [shape = 'u32[72,128]{1,0:T(1,128)}', space=vmem, size = 0x9000, scoped, tag = 'internal scratch']
  #allocation2 [shape = 'bf16[10,10,128]{2,1,0:T(8,128)(2,1)}', space=vmem, size = 0xa000, scoped, tag = 'scratch operand']
  %s0 = inlined_call_operand.vmem [shape: bf16[2,9,9,16], index: 0, kind: input, shape index: {}]
  %s1 = inlined_call_operand.vmem [shape: bf16[4,16,128], index: 1, kind: input, shape index: {}]
  %s2 = inlined_call_operand.vmem [shape: bf16[4,4,128,128], index: 2, kind: input, shape index: {}]
  %s3 = inlined_call_operand.vmem [shape: bf16[2,4,64,128], index: 3, kind: output, shape index: {0}]
  %s4 = inlined_call_operand.vmem [shape: f32[2,8,128], index: 4, kind: output, shape index: {1}]
  %5 = xla_tuple %s3, %s4
  %s6 = sld [smem:[#allocation0]]
  $region53: #{unet_innermost_forward.2} parent=0
    _
  %s8 = ssub.s32 1, %s6
  %s9 = scalar_select 0, %s8, %s6
  loop: start=0, step=1, limit=4
  $region2: #{unet_innermost_forward.2} parent=0 // loop_pre_header
    _
  $region3: #{unet_innermost_forward.2} parent=0 // loop_header
    %s11 = sphi 0, %s15
    %p12 = scmp.ge.s32.totalorder %s11, 4
    %s21 = sphi 0, %s23
    %s24 = sphi 0, %s21
    %s25 = sphi 0, %s24
    %s41 = sphi 0, %s25
    %s45 = sphi 0, %s45
    %s47 = sphi 0, %s45
    %s48 = sphi 0, %s47
    %s62 = sphi 0, %s48
    %s66 = sphi 0, %s66
    %s68 = sphi 0, %s66
    %s69 = sphi 0, %s68
    %s83 = sphi 0, %s69
    %s89 = sphi 0, %s91
    %s92 = sphi 0, %s89
    %s93 = sphi 0, %s92
    %s109 = sphi 0, %s93
    %s115 = sphi 0, %s117
    %s118 = sphi 0, %s115
    %s119 = sphi 0, %s118
    %s135 = sphi 0, %s119
  $region4: #{unet_innermost_forward.2} parent=0 // loop_header_branch
    %14 = sbr.rel (%p12) target = $region8
  $region5: #{unet_innermost_forward.2} parent=0 // loop_body
    %s16 = ssub.s32 %s11, 1
    %s17 = ssub.s32 %s11, 2
    %s18 = sadd.s32 %s11, 1
    %s19 = ssub.s32 %s11, %s18
    %p20 = scmp.eq.s32.totalorder %s19, 0
    %s22 = sadd.s32 %s21, 1
    %s23 = scalar_select %p20, %s21, %s22
    %p26 = pneg %p20
    %p27 = scmp.eq.s32.totalorder %s11, 1
    %p28 = por %p26, %p27
    %p29 = scmp.ne.s32.totalorder %s21, %s24
    %p30 = scmp.eq.s32.totalorder %s11, 0
    %p31 = por %p29, %p30
    %p32 = scmp.ne.s32.totalorder %s21, %s24
    %p33 = scmp.eq.s32.totalorder %s16, 1
    %p34 = por %p32, %p33
    %p35 = scmp.ne.s32.totalorder %s24, %s25
    %p36 = scmp.eq.s32.totalorder %s16, 0
    %p37 = por %p35, %p36
    %p38 = scmp.ne.s32.totalorder %s24, %s25
    %p39 = scmp.eq.s32.totalorder %s17, 1
    %p40 = por %p38, %p39
    %p42 = scmp.ne.s32.totalorder %s25, %s41
    %p43 = scmp.eq.s32.totalorder %s17, 0
    %p44 = por %p42, %p43
    %s46 = sadd.s32 %s45, 1
    %p49 = scmp.eq.s32.totalorder %s11, 1
    %p50 = scmp.ne.s32.totalorder %s45, %s47
    %p51 = scmp.eq.s32.totalorder %s11, 0
    %p52 = por %p50, %p51
    %p53 = scmp.ne.s32.totalorder %s45, %s47
    %p54 = scmp.eq.s32.totalorder %s16, 1
    %p55 = por %p53, %p54
    %p56 = scmp.ne.s32.totalorder %s47, %s48
    %p57 = scmp.eq.s32.totalorder %s16, 0
    %p58 = por %p56, %p57
    %p59 = scmp.ne.s32.totalorder %s47, %s48
    %p60 = scmp.eq.s32.totalorder %s17, 1
    %p61 = por %p59, %p60
    %p63 = scmp.ne.s32.totalorder %s48, %s62
    %p64 = scmp.eq.s32.totalorder %s17, 0
    %p65 = por %p63, %p64
    %s67 = sadd.s32 %s66, 1
    %p70 = scmp.eq.s32.totalorder %s11, 1
    %p71 = scmp.ne.s32.totalorder %s66, %s68
    %p72 = scmp.eq.s32.totalorder %s11, 0
    %p73 = por %p71, %p72
    %p74 = scmp.ne.s32.totalorder %s66, %s68
    %p75 = scmp.eq.s32.totalorder %s16, 1
    %p76 = por %p74, %p75
    %p77 = scmp.ne.s32.totalorder %s68, %s69
    %p78 = scmp.eq.s32.totalorder %s16, 0
    %p79 = por %p77, %p78
    %p80 = scmp.ne.s32.totalorder %s68, %s69
    %p81 = scmp.eq.s32.totalorder %s17, 1
    %p82 = por %p80, %p81
    %p84 = scmp.ne.s32.totalorder %s69, %s83
    %p85 = scmp.eq.s32.totalorder %s17, 0
    %p86 = por %p84, %p85
    %s87 = ssub.s32 %s11, %s18
    %p88 = scmp.eq.s32.totalorder %s87, 0
    %s90 = sadd.s32 %s89, 1
    %s91 = scalar_select %p88, %s89, %s90
    %p94 = pneg %p88
    %p95 = scmp.eq.s32.totalorder %s11, 1
    %p96 = por %p94, %p95
    %p97 = scmp.ne.s32.totalorder %s89, %s92
    %p98 = scmp.eq.s32.totalorder %s11, 0
    %p99 = por %p97, %p98
    %p100 = scmp.ne.s32.totalorder %s89, %s92
    %p101 = scmp.eq.s32.totalorder %s16, 1
    %p102 = por %p100, %p101
    %p103 = scmp.ne.s32.totalorder %s92, %s93
    %p104 = scmp.eq.s32.totalorder %s16, 0
    %p105 = por %p103, %p104
    %p106 = scmp.ne.s32.totalorder %s92, %s93
    %p107 = scmp.eq.s32.totalorder %s17, 1
    %p108 = por %p106, %p107
    %p110 = scmp.ne.s32.totalorder %s93, %s109
    %p111 = scmp.eq.s32.totalorder %s17, 0
    %p112 = por %p110, %p111
    %s113 = ssub.s32 %s11, %s18
    %p114 = scmp.eq.s32.totalorder %s113, 0
    %s116 = sadd.s32 %s115, 1
    %s117 = scalar_select %p114, %s115, %s116
    %p120 = pneg %p114
    %p121 = scmp.eq.s32.totalorder %s11, 1
    %p122 = por %p120, %p121
    %p123 = scmp.ne.s32.totalorder %s115, %s118
    %p124 = scmp.eq.s32.totalorder %s11, 0
    %p125 = por %p123, %p124
    %p126 = scmp.ne.s32.totalorder %s115, %s118
    %p127 = scmp.eq.s32.totalorder %s16, 1
    %p128 = por %p126, %p127
    %p129 = scmp.ne.s32.totalorder %s118, %s119
    %p130 = scmp.eq.s32.totalorder %s16, 0
    %p131 = por %p129, %p130
    %p132 = scmp.ne.s32.totalorder %s118, %s119
    %p133 = scmp.eq.s32.totalorder %s17, 1
    %p134 = por %p132, %p133
    %p136 = scmp.ne.s32.totalorder %s119, %s135
    %p137 = scmp.eq.s32.totalorder %s17, 0
    %p138 = por %p136, %p137
    %p139 = scmp.le.s32.totalorder 1, %s11
    %p140 = scmp.lt.s32.totalorder %s11, 3
    %p141 = pnand %p139, %p140
    %p142 = pneg %p141
    // Predicated region
    $region9: #{unet_innermost_forward.2} parent=5 // pred_check
      _
    $region10: #{unet_innermost_forward.2} parent=5 // pred_check_branch
      %144 = sbr.rel (%p141) target = $region12
    $region11: #{unet_innermost_forward.2} parent=5 // pred_region
      %s145 = ssub.s32 %s11, 1
      // Predicated region
      $region13: #{unet_innermost_forward.2} parent=11 // pred_check
        %p146 = pneg %p58
      $region14: #{unet_innermost_forward.2} parent=11 // pred_check_branch
        %148 = sbr.rel (%p146) target = $region16
      $region15: #{unet_innermost_forward.2} parent=11 // pred_region
        _
      $region16: #{unet_innermost_forward.2} parent=11 // pred_fallthru
        _
      // Predicated region
      $region17: #{unet_innermost_forward.2} parent=11 // pred_check
        %p149 = pneg %p79
      $region18: #{unet_innermost_forward.2} parent=11 // pred_check_branch
        %151 = sbr.rel (%p149) target = $region20
      $region19: #{unet_innermost_forward.2} parent=11 // pred_region
        _
      $region20: #{unet_innermost_forward.2} parent=11 // pred_fallthru
        _
    $region12: #{unet_innermost_forward.2} parent=5 // pred_fallthru
      _
    %p152 = scmp.lt.s32.totalorder %s11, 2
    // Predicated region
    $region21: #{unet_innermost_forward.2} parent=5 // pred_check
      %p153 = pneg %p152
    $region22: #{unet_innermost_forward.2} parent=5 // pred_check_branch
      %155 = sbr.rel (%p153) target = $region24
    $region23: #{unet_innermost_forward.2} parent=5 // pred_region
      // Predicated region
      $region25: #{unet_innermost_forward.2} parent=23 // pred_check
        %p156 = pneg %p31
      $region26: #{unet_innermost_forward.2} parent=23 // pred_check_branch
        %158 = sbr.rel (%p156) target = $region28
      $region27: #{unet_innermost_forward.2} parent=23 // pred_region
        %p159 = scmp.lt.s32.totalorder %s11, 1
        %s160 = scalar_select %p159, %s11, 1
        %s161 = smul.addr %s160, 18
        %s162 = smul.addr %s161, 4
        %s163 = scalar_lea.vmem %s0, %s162
      $region28: #{unet_innermost_forward.2} parent=23 // pred_fallthru
        _
    $region24: #{unet_innermost_forward.2} parent=5 // pred_fallthru
      _
    %p164 = scmp.le.s32.totalorder 1, %s11
    %p165 = scmp.lt.s32.totalorder %s11, 3
    %p166 = pnand %p164, %p165
    %p167 = pneg %p166
    // Predicated region
    $region29: #{unet_innermost_forward.2} parent=5 // pred_check
      _
    $region30: #{unet_innermost_forward.2} parent=5 // pred_check_branch
      %169 = sbr.rel (%p166) target = $region32
    $region31: #{unet_innermost_forward.2} parent=5 // pred_region
      %s170 = ssub.s32 %s11, 1
      %p171 = scmp.lt.s32.totalorder %s16, 1
      %s172 = scalar_select %p171, %s16, 1
      %s173 = smul.addr %s172, 18
      %s174 = smul.addr %s173, 4
      %s175 = scalar_lea.vmem %s0, %s174
      %p176 = pneg %p37
      %p177 = pneg %p34
      %p178 = pneg %p58
      %p179 = pneg %p55
      %p180 = pneg %p79
      %p181 = pneg %p76
      %p182 = pneg %p105
      %p183 = pneg %p102
      %p184 = scmp.lt.s32.totalorder %s16, 1
      %s185 = scalar_select %p184, %s16, 1
      %s186 = smul.addr %s185, 32
      %s187 = smul.addr %s186, 4
      %s188 = scalar_lea.vmem %s3, %s187
      %p189 = pneg %p131
      %p190 = pneg %p128
      %p191 = scmp.lt.s32.totalorder %s16, 1
      %s192 = scalar_select %p191, %s16, 1
      %s193 = smul.addr %s192, 8
      %s194 = scalar_lea.vmem %s4, %s193
      %p195 = scmp.lt.s32.totalorder %s16, 1
      %s196 = scalar_select %p195, %s16, 1
      %s197 = smul.addr %s196, 18
      %s198 = smul.addr %s197, 4
      %s199 = scalar_lea.vmem %s0, %s198
      %p200 = scmp.lt.s32.totalorder %s16, 1
      %s201 = scalar_select %p200, %s16, 1
      %s202 = smul.addr %s201, 32
      %s203 = smul.addr %s202, 4
      %s204 = scalar_lea.vmem %s3, %s203
      %p205 = scmp.lt.s32.totalorder %s16, 1
      %s206 = scalar_select %p205, %s16, 1
      %s207 = smul.addr %s206, 8
      %s208 = scalar_lea.vmem %s4, %s207
      %v210 = vld [vmem:[%s199] sm:$0xf]
      %v211 = vld [vmem:[%s199 + $0x4] sm:$0x1]
      %v212 = vld [vmem:[%s199 + $0x8] sm:$0xf]
      %v213 = vld [vmem:[%s199 + $0xc] sm:$0x1]
      %v214 = vld [vmem:[%s199 + $0x10] sm:$0xf]
      %v215 = vld [vmem:[%s199 + $0x14] sm:$0x1]
      %v216 = vld [vmem:[%s199 + $0x18] sm:$0xf]
      %v217 = vld [vmem:[%s199 + $0x1c] sm:$0x1]
      %v218 = vld [vmem:[%s199 + $0x20] sm:$0xf]
      %v219 = vld [vmem:[%s199 + $0x24] sm:$0x1]
      %v220 = vld [vmem:[%s199 + $0x28] sm:$0xf]
      %v221 = vld [vmem:[%s199 + $0x2c] sm:$0x1]
      %v222 = vld [vmem:[%s199 + $0x30] sm:$0xf]
      %v223 = vld [vmem:[%s199 + $0x34] sm:$0x1]
      %v224 = vld [vmem:[%s199 + $0x38] sm:$0xf]
      %v225 = vld [vmem:[%s199 + $0x3c] sm:$0x1]
      %v226 = vld [vmem:[%s199 + $0x40] sm:$0xf]
      %v227 = vld [vmem:[%s199 + $0x44] sm:$0x1]
      %v228 = vunpack.c.l.bf16 %v210
      %v229 = vunpack.c.l.bf16 %v211
      %v230 = vunpack.c.l.bf16 %v212
      %v231 = vunpack.c.l.bf16 %v213
      %v232 = vunpack.c.l.bf16 %v214
      %v233 = vunpack.c.l.bf16 %v215
      %v234 = vunpack.c.l.bf16 %v216
      %v235 = vunpack.c.l.bf16 %v217
      %v236 = vunpack.c.l.bf16 %v218
      %v237 = vunpack.c.l.bf16 %v219
      %v238 = vunpack.c.l.bf16 %v220
      %v239 = vunpack.c.l.bf16 %v221
      %v240 = vunpack.c.l.bf16 %v222
      %v241 = vunpack.c.l.bf16 %v223
      %v242 = vunpack.c.l.bf16 %v224
      %v243 = vunpack.c.l.bf16 %v225
      %v244 = vunpack.c.l.bf16 %v226
      %v245 = vunpack.c.l.bf16 %v227
      %vm246 = vcmp.gt.f32.partialorder %v228, 0.0
      %vm247 = vcmp.gt.f32.partialorder %v229, 0.0
      %vm248 = vcmp.gt.f32.partialorder %v230, 0.0
      %vm249 = vcmp.gt.f32.partialorder %v231, 0.0
      %vm250 = vcmp.gt.f32.partialorder %v232, 0.0
      %vm251 = vcmp.gt.f32.partialorder %v233, 0.0
      %vm252 = vcmp.gt.f32.partialorder %v234, 0.0
      %vm253 = vcmp.gt.f32.partialorder %v235, 0.0
      %vm254 = vcmp.gt.f32.partialorder %v236, 0.0
      %vm255 = vcmp.gt.f32.partialorder %v237, 0.0
      %vm256 = vcmp.gt.f32.partialorder %v238, 0.0
      %vm257 = vcmp.gt.f32.partialorder %v239, 0.0
      %vm258 = vcmp.gt.f32.partialorder %v240, 0.0
      %vm259 = vcmp.gt.f32.partialorder %v241, 0.0
      %vm260 = vcmp.gt.f32.partialorder %v242, 0.0
      %vm261 = vcmp.gt.f32.partialorder %v243, 0.0
      %vm262 = vcmp.gt.f32.partialorder %v244, 0.0
      %vm263 = vcmp.gt.f32.partialorder %v245, 0.0
      %v264 = vmul.f32 %v228, 0.2
      %v265 = vmul.f32 %v229, 0.2
      %v266 = vmul.f32 %v230, 0.2
      %v267 = vmul.f32 %v231, 0.2
      %v268 = vmul.f32 %v232, 0.2
      %v269 = vmul.f32 %v233, 0.2
      %v270 = vmul.f32 %v234, 0.2
      %v271 = vmul.f32 %v235, 0.2
      %v272 = vmul.f32 %v236, 0.2
      %v273 = vmul.f32 %v237, 0.2
      %v274 = vmul.f32 %v238, 0.2
      %v275 = vmul.f32 %v239, 0.2
      %v276 = vmul.f32 %v240, 0.2
      %v277 = vmul.f32 %v241, 0.2
      %v278 = vmul.f32 %v242, 0.2
      %v279 = vmul.f32 %v243, 0.2
      %v280 = vmul.f32 %v244, 0.2
      %v281 = vmul.f32 %v245, 0.2
      %v282 = vsel %vm246, %v228, %v264
      %v283 = vsel %vm247, %v229, %v265
      %v284 = vsel %vm248, %v230, %v266
      %v285 = vsel %vm249, %v231, %v267
      %v286 = vsel %vm250, %v232, %v268
      %v287 = vsel %vm251, %v233, %v269
      %v288 = vsel %vm252, %v234, %v270
      %v289 = vsel %vm253, %v235, %v271
      %v290 = vsel %vm254, %v236, %v272
      %v291 = vsel %vm255, %v237, %v273
      %v292 = vsel %vm256, %v238, %v274
      %v293 = vsel %vm257, %v239, %v275
      %v294 = vsel %vm258, %v240, %v276
      %v295 = vsel %vm259, %v241, %v277
      %v296 = vsel %vm260, %v242, %v278
      %v297 = vsel %vm261, %v243, %v279
      %v298 = vsel %vm262, %v244, %v280
      %v299 = vsel %vm263, %v245, %v281
      %v300 = vpack.c.bf16 %v282, %v282
      %v301 = vpack.c.bf16 %v283, %v283
      %v302 = vpack.c.bf16 %v284, %v284
      %v303 = vpack.c.bf16 %v285, %v285
      %v304 = vpack.c.bf16 %v286, %v286
      %v305 = vpack.c.bf16 %v287, %v287
      %v306 = vpack.c.bf16 %v288, %v288
      %v307 = vpack.c.bf16 %v289, %v289
      %v308 = vpack.c.bf16 %v290, %v290
      %v309 = vpack.c.bf16 %v291, %v291
      %v310 = vpack.c.bf16 %v292, %v292
      %v311 = vpack.c.bf16 %v293, %v293
      %v312 = vpack.c.bf16 %v294, %v294
      %v313 = vpack.c.bf16 %v295, %v295
      %v314 = vpack.c.bf16 %v296, %v296
      %v315 = vpack.c.bf16 %v297, %v297
      %v316 = vpack.c.bf16 %v298, %v298
      %v317 = vpack.c.bf16 %v299, %v299
      %v318 = vld [vmem:[%s1] sm:$0xf]
      %v319 = vld [vmem:[%s1 + $0x4] sm:$0xf]
      %vm320 = vsmask.f32 3328
      %vm321 = vsmask.f32 7440
      %vm322 = vmor %vm320, %vm321
      %v324 = vshrl.u32 %v300, 16
      %v326 = vrot.slane %v324, 4
      %v327 = vshll.u32 %v300, 16
      %v329 = vrot.slane %v327, 5
      %v330 = vor.u32 %v326, %v329
      %v331 = vrot.slane %v330, 4
      %v333 = vshll.u32 %v301, 16
      %v335 = vrot.slane %v333, 5
      %v336 = vsel %vm322, %v331, %v335
      %v338 = vshrl.u32 %v302, 16
      %v340 = vrot.slane %v338, 4
      %v341 = vshll.u32 %v302, 16
      %v343 = vrot.slane %v341, 5
      %v344 = vor.u32 %v340, %v343
      %v345 = vrot.slane %v344, 4
      %v347 = vshll.u32 %v303, 16
      %v349 = vrot.slane %v347, 5
      %v350 = vsel %vm322, %v345, %v349
      %v352 = vshrl.u32 %v304, 16
      %v354 = vrot.slane %v352, 4
      %v355 = vshll.u32 %v304, 16
      %v357 = vrot.slane %v355, 5
      %v358 = vor.u32 %v354, %v357
      %v359 = vrot.slane %v358, 4
      %v361 = vshll.u32 %v305, 16
      %v363 = vrot.slane %v361, 5
      %v364 = vsel %vm322, %v359, %v363
      %v366 = vshrl.u32 %v306, 16
      %v368 = vrot.slane %v366, 4
      %v369 = vshll.u32 %v306, 16
      %v371 = vrot.slane %v369, 5
      %v372 = vor.u32 %v368, %v371
      %v373 = vrot.slane %v372, 4
      %v375 = vshll.u32 %v307, 16
      %v377 = vrot.slane %v375, 5
      %v378 = vsel %vm322, %v373, %v377
      %v380 = vshrl.u32 %v308, 16
      %v382 = vrot.slane %v380, 4
      %v383 = vshll.u32 %v308, 16
      %v385 = vrot.slane %v383, 5
      %v386 = vor.u32 %v382, %v385
      %v387 = vrot.slane %v386, 4
      %v389 = vshll.u32 %v309, 16
      %v391 = vrot.slane %v389, 5
      %v392 = vsel %vm322, %v387, %v391
      %v394 = vshrl.u32 %v310, 16
      %v396 = vrot.slane %v394, 4
      %v397 = vshll.u32 %v310, 16
      %v399 = vrot.slane %v397, 5
      %v400 = vor.u32 %v396, %v399
      %v401 = vrot.slane %v400, 4
      %v403 = vshll.u32 %v311, 16
      %v405 = vrot.slane %v403, 5
      %v406 = vsel %vm322, %v401, %v405
      %v408 = vshrl.u32 %v312, 16
      %v410 = vrot.slane %v408, 4
      %v411 = vshll.u32 %v312, 16
      %v413 = vrot.slane %v411, 5
      %v414 = vor.u32 %v410, %v413
      %v415 = vrot.slane %v414, 4
      %v417 = vshll.u32 %v313, 16
      %v419 = vrot.slane %v417, 5
      %v420 = vsel %vm322, %v415, %v419
      %v422 = vshrl.u32 %v314, 16
      %v424 = vrot.slane %v422, 4
      %v425 = vshll.u32 %v314, 16
      %v427 = vrot.slane %v425, 5
      %v428 = vor.u32 %v424, %v427
      %v429 = vrot.slane %v428, 4
      %v431 = vshll.u32 %v315, 16
      %v433 = vrot.slane %v431, 5
      %v434 = vsel %vm322, %v429, %v433
      %s435 = scalar_lea.vmem %s1, 8
      %v436 = vld [vmem:[%s435] sm:$0xf]
      %v437 = vld [vmem:[%s435 + $0x4] sm:$0xf]
      %v438 = vunpack.c.l.b16 %v336
      %v439 = vunpack.c.l.b16 %v350
      %v440 = vunpack.c.l.b16 %v364
      %v441 = vunpack.c.l.b16 %v378
      %v442 = vunpack.c.l.b16 %v392
      %v443 = vunpack.c.l.b16 %v406
      %v444 = vunpack.c.l.b16 %v420
      %v445 = vunpack.c.l.b16 %v434
      %v446 = vpack.c.b16 %v439, %v438
      %v447 = vpack.c.b16 %v441, %v440
      %v448 = vpack.c.b16 %v443, %v442
      %v449 = vpack.c.b16 %v445, %v444
      %v452 = vunpack.c.l.b16 %v436
      %v453 = vunpack.c.l.b16 %v437
      %v454 = vpack.c.b16 %v453, %v452
      %vm456 = vcmask 130048
      %v458 = vsel %vm456, %v446, 0
      %v461 = vsel %vm456, %v447, 0
      %v464 = vsel %vm456, %v448, 0
      %v467 = vsel %vm456, %v449, 0
      %469 = vmatpush.bf16.msra.mxu0 0
      %470 = vmatpush.bf16.msra.mxu0 0
      %471 = vmatpush.bf16.msra.mxu0 0
      %472 = vmatpush.bf16.msra.mxu0 0
      %473 = vmatpush.bf16.msra.mxu0 0
      %474 = vmatpush.bf16.msra.mxu0 0
      %475 = vmatpush.bf16.msra.mxu0 0
      %476 = vmatpush.bf16.msra.mxu0 %v454
      %477 = vmatmul.bf16.gmra.mxu0 %v458
      %v478 = vpop.f32.mrf.mxu0
      %v479 = vadd.f32 0.0, %v478
      %v480 = vpop.f32.mrf.mxu0
      %v481 = vadd.f32 0.0, %v480
      %482 = vmatmul.bf16.gmra.mxu0 %v461
      %v483 = vpop.f32.mrf.mxu0
      %v484 = vadd.f32 0.0, %v483
      %v485 = vpop.f32.mrf.mxu0
      %v486 = vadd.f32 0.0, %v485
      %487 = vmatmul.bf16.gmra.mxu0 %v464
      %v488 = vpop.f32.mrf.mxu0
      %v489 = vadd.f32 0.0, %v488
      %v490 = vpop.f32.mrf.mxu0
      %v491 = vadd.f32 0.0, %v490
      %492 = vmatmul.bf16.gmra.mxu0 %v467
      %v493 = vpop.f32.mrf.mxu0
      %v494 = vadd.f32 0.0, %v493
      %v495 = vpop.f32.mrf.mxu0
      %v496 = vadd.f32 0.0, %v495
      %497 = vdwg.mxu0
      %v506 = vunpack.c.l.b16 %v300
      %v507 = vunpack.c.l.b16 %v302
      %v508 = vunpack.c.l.b16 %v304
      %v509 = vunpack.c.l.b16 %v306
      %v510 = vunpack.c.l.b16 %v308
      %v511 = vunpack.c.l.b16 %v310
      %v512 = vunpack.c.l.b16 %v312
      %v513 = vunpack.c.l.b16 %v314
      %v514 = vpack.c.b16 %v507, %v506
      %v515 = vpack.c.b16 %v509, %v508
      %v516 = vpack.c.b16 %v511, %v510
      %v517 = vpack.c.b16 %v513, %v512
      %v520 = vunpack.c.l.b16 %v318
      %v521 = vunpack.c.l.b16 %v319
      %v522 = vpack.c.b16 %v521, %v520
      %v525 = vsel %vm456, %v514, 0
      %v528 = vsel %vm456, %v515, 0
      %v531 = vsel %vm456, %v516, 0
      %v534 = vsel %vm456, %v517, 0
      %536 = vmatpush.bf16.msra.mxu0 0
      %537 = vmatpush.bf16.msra.mxu0 0
      %538 = vmatpush.bf16.msra.mxu0 0
      %539 = vmatpush.bf16.msra.mxu0 0
      %540 = vmatpush.bf16.msra.mxu0 0
      %541 = vmatpush.bf16.msra.mxu0 0
      %542 = vmatpush.bf16.msra.mxu0 0
      %543 = vmatpush.bf16.msra.mxu0 %v522
      %544 = vmatmul.bf16.gmra.mxu0 %v525
      %v545 = vpop.f32.mrf.mxu0
      %v546 = vadd.f32 %v479, %v545
      %v547 = vpop.f32.mrf.mxu0
      %v548 = vadd.f32 %v481, %v547
      %549 = vmatmul.bf16.gmra.mxu0 %v528
      %v550 = vpop.f32.mrf.mxu0
      %v551 = vadd.f32 %v484, %v550
      %v552 = vpop.f32.mrf.mxu0
      %v553 = vadd.f32 %v486, %v552
      %554 = vmatmul.bf16.gmra.mxu0 %v531
      %v555 = vpop.f32.mrf.mxu0
      %v556 = vadd.f32 %v489, %v555
      %v557 = vpop.f32.mrf.mxu0
      %v558 = vadd.f32 %v491, %v557
      %559 = vmatmul.bf16.gmra.mxu0 %v534
      %v560 = vpop.f32.mrf.mxu0
      %v561 = vadd.f32 %v494, %v560
      %v562 = vpop.f32.mrf.mxu0
      %v563 = vadd.f32 %v496, %v562
      %564 = vdwg.mxu0
      %s565 = scalar_lea.vmem %s1, 16
      %v566 = vld [vmem:[%s565] sm:$0xf]
      %v567 = vld [vmem:[%s565 + $0x4] sm:$0xf]
      %v569 = vunpack.c.l.b16 %v316
      %v570 = vpack.c.b16 %v508, %v507
      %v571 = vpack.c.b16 %v510, %v509
      %v572 = vpack.c.b16 %v512, %v511
      %v573 = vpack.c.b16 %v569, %v513
      %v576 = vunpack.c.l.b16 %v566
      %v577 = vunpack.c.l.b16 %v567
      %v578 = vpack.c.b16 %v577, %v576
      %v581 = vsel %vm456, %v570, 0
      %v584 = vsel %vm456, %v571, 0
      %v587 = vsel %vm456, %v572, 0
      %v590 = vsel %vm456, %v573, 0
      %592 = vmatpush.bf16.msra.mxu0 0
      %593 = vmatpush.bf16.msra.mxu0 0
      %594 = vmatpush.bf16.msra.mxu0 0
      %595 = vmatpush.bf16.msra.mxu0 0
      %596 = vmatpush.bf16.msra.mxu0 0
      %597 = vmatpush.bf16.msra.mxu0 0
      %598 = vmatpush.bf16.msra.mxu0 0
      %599 = vmatpush.bf16.msra.mxu0 %v578
      %600 = vmatmul.bf16.gmra.mxu0 %v581
      %v601 = vpop.f32.mrf.mxu0
      %v602 = vadd.f32 0.0, %v601
      %v603 = vpop.f32.mrf.mxu0
      %v604 = vadd.f32 0.0, %v603
      %605 = vmatmul.bf16.gmra.mxu0 %v584
      %v606 = vpop.f32.mrf.mxu0
      %v607 = vadd.f32 0.0, %v606
      %v608 = vpop.f32.mrf.mxu0
      %v609 = vadd.f32 0.0, %v608
      %610 = vmatmul.bf16.gmra.mxu0 %v587
      %v611 = vpop.f32.mrf.mxu0
      %v612 = vadd.f32 0.0, %v611
      %v613 = vpop.f32.mrf.mxu0
      %v614 = vadd.f32 0.0, %v613
      %615 = vmatmul.bf16.gmra.mxu0 %v590
      %v616 = vpop.f32.mrf.mxu0
      %v617 = vadd.f32 0.0, %v616
      %v618 = vpop.f32.mrf.mxu0
      %v619 = vadd.f32 0.0, %v618
      %620 = vdwg.mxu0
      %v621 = vadd.f32 %v546, %v602
      %v622 = vadd.f32 %v548, %v604
      %v623 = vadd.f32 %v551, %v607
      %v624 = vadd.f32 %v553, %v609
      %v625 = vadd.f32 %v556, %v612
      %v626 = vadd.f32 %v558, %v614
      %v627 = vadd.f32 %v561, %v617
      %v628 = vadd.f32 %v563, %v619
      %v630 = vshrl.u32 %v316, 16
      %v632 = vrot.slane %v630, 4
      %v633 = vshll.u32 %v316, 16
      %v635 = vrot.slane %v633, 5
      %v636 = vor.u32 %v632, %v635
      %v637 = vrot.slane %v636, 4
      %v639 = vshll.u32 %v317, 16
      %v641 = vrot.slane %v639, 5
      %v642 = vsel %vm322, %v637, %v641
      %s643 = scalar_lea.vmem %s1, 24
      %v644 = vld [vmem:[%s643] sm:$0xf]
      %v645 = vld [vmem:[%s643 + $0x4] sm:$0xf]
      %v646 = vunpack.c.l.b16 %v642
      %v647 = vpack.c.b16 %v440, %v439
      %v648 = vpack.c.b16 %v442, %v441
      %v649 = vpack.c.b16 %v444, %v443
      %v650 = vpack.c.b16 %v646, %v445
      %v653 = vunpack.c.l.b16 %v644
      %v654 = vunpack.c.l.b16 %v645
      %v655 = vpack.c.b16 %v654, %v653
      %v658 = vsel %vm456, %v647, 0
      %v661 = vsel %vm456, %v648, 0
      %v664 = vsel %vm456, %v649, 0
      %v667 = vsel %vm456, %v650, 0
      %669 = vmatpush.bf16.msra.mxu0 0
      %670 = vmatpush.bf16.msra.mxu0 0
      %671 = vmatpush.bf16.msra.mxu0 0
      %672 = vmatpush.bf16.msra.mxu0 0
      %673 = vmatpush.bf16.msra.mxu0 0
      %674 = vmatpush.bf16.msra.mxu0 0
      %675 = vmatpush.bf16.msra.mxu0 0
      %676 = vmatpush.bf16.msra.mxu0 %v655
      %677 = vmatmul.bf16.gmra.mxu0 %v658
      %v678 = vpop.f32.mrf.mxu0
      %v679 = vadd.f32 0.0, %v678
      %v680 = vpop.f32.mrf.mxu0
      %v681 = vadd.f32 0.0, %v680
      %682 = vmatmul.bf16.gmra.mxu0 %v661
      %v683 = vpop.f32.mrf.mxu0
      %v684 = vadd.f32 0.0, %v683
      %v685 = vpop.f32.mrf.mxu0
      %v686 = vadd.f32 0.0, %v685
      %687 = vmatmul.bf16.gmra.mxu0 %v664
      %v688 = vpop.f32.mrf.mxu0
      %v689 = vadd.f32 0.0, %v688
      %v690 = vpop.f32.mrf.mxu0
      %v691 = vadd.f32 0.0, %v690
      %692 = vmatmul.bf16.gmra.mxu0 %v667
      %v693 = vpop.f32.mrf.mxu0
      %v694 = vadd.f32 0.0, %v693
      %v695 = vpop.f32.mrf.mxu0
      %v696 = vadd.f32 0.0, %v695
      %697 = vdwg.mxu0
      %v698 = vadd.f32 %v621, %v679
      %v699 = vadd.f32 %v622, %v681
      %v700 = vadd.f32 %v623, %v684
      %v701 = vadd.f32 %v624, %v686
      %v702 = vadd.f32 %v625, %v689
      %v703 = vadd.f32 %v626, %v691
      %v704 = vadd.f32 %v627, %v694
      %v705 = vadd.f32 %v628, %v696
      %706 = vst [vmem:[#allocation2] sm:$0xf] 0
      %707 = vst [vmem:[#allocation2 + $0x4] sm:$0x1] 0
      %708 = vst [vmem:[#allocation2 + $0x8] sm:$0xf] 0
      %709 = vst [vmem:[#allocation2 + $0xc] sm:$0x1] 0
      %710 = vst [vmem:[#allocation2 + $0x10] sm:$0xf] 0
      %711 = vst [vmem:[#allocation2 + $0x14] sm:$0x1] 0
      %712 = vst [vmem:[#allocation2 + $0x18] sm:$0xf] 0
      %713 = vst [vmem:[#allocation2 + $0x1c] sm:$0x1] 0
      %714 = vst [vmem:[#allocation2 + $0x20] sm:$0xf] 0
      %715 = vst [vmem:[#allocation2 + $0x24] sm:$0x1] 0
      %716 = vst [vmem:[#allocation2 + $0x28] sm:$0xf] 0
      %717 = vst [vmem:[#allocation2 + $0x2c] sm:$0x1] 0
      %718 = vst [vmem:[#allocation2 + $0x30] sm:$0xf] 0
      %719 = vst [vmem:[#allocation2 + $0x34] sm:$0x1] 0
      %720 = vst [vmem:[#allocation2 + $0x38] sm:$0xf] 0
      %721 = vst [vmem:[#allocation2 + $0x3c] sm:$0x1] 0
      %722 = vst [vmem:[#allocation2 + $0x40] sm:$0xf] 0
      %723 = vst [vmem:[#allocation2 + $0x44] sm:$0x1] 0
      %724 = vst [vmem:[#allocation2 + $0x48] sm:$0xf] 0
      %725 = vst [vmem:[#allocation2 + $0x4c] sm:$0x1] 0
      %v726 = vmax.f32 %v698, 0.0
      %v727 = vmax.f32 %v699, 0.0
      %v728 = vmax.f32 %v700, 0.0
      %v729 = vmax.f32 %v701, 0.0
      %v730 = vmax.f32 %v702, 0.0
      %v731 = vmax.f32 %v703, 0.0
      %v732 = vmax.f32 %v704, 0.0
      %v733 = vmax.f32 %v705, 0.0
      %v734 = vpack.c.bf16 %v726, %v726
      %v735 = vpack.c.bf16 %v727, %v727
      %v736 = vpack.c.bf16 %v728, %v728
      %v737 = vpack.c.bf16 %v729, %v729
      %v738 = vpack.c.bf16 %v730, %v730
      %v739 = vpack.c.bf16 %v731, %v731
      %v740 = vpack.c.bf16 %v732, %v732
      %v741 = vpack.c.bf16 %v733, %v733
      %v743 = vshrl.u32 %v734, 16
      %v745 = vrot.slane %v743, 7
      %v746 = vshll.u32 %v734, 16
      %v748 = vor.u32 %v745, %v746
      %v749 = vrot.slane %v745, 4
      %v751 = vshrl.u32 %v735, 16
      %v753 = vrot.slane %v751, 7
      %v754 = vshll.u32 %v735, 16
      %v756 = vor.u32 %v753, %v754
      %v757 = vrot.slane %v753, 4
      %v759 = vshrl.u32 %v736, 16
      %v761 = vrot.slane %v759, 7
      %v762 = vshll.u32 %v736, 16
      %v764 = vor.u32 %v761, %v762
      %v765 = vrot.slane %v761, 4
      %v767 = vshrl.u32 %v737, 16
      %v769 = vrot.slane %v767, 7
      %v770 = vshll.u32 %v737, 16
      %v772 = vor.u32 %v769, %v770
      %v773 = vrot.slane %v769, 4
      %v775 = vshrl.u32 %v738, 16
      %v777 = vrot.slane %v775, 7
      %v778 = vshll.u32 %v738, 16
      %v780 = vor.u32 %v777, %v778
      %v781 = vrot.slane %v777, 4
      %v783 = vshrl.u32 %v739, 16
      %v785 = vrot.slane %v783, 7
      %v786 = vshll.u32 %v739, 16
      %v788 = vor.u32 %v785, %v786
      %v789 = vrot.slane %v785, 4
      %v791 = vshrl.u32 %v740, 16
      %v793 = vrot.slane %v791, 7
      %v794 = vshll.u32 %v740, 16
      %v796 = vor.u32 %v793, %v794
      %v797 = vrot.slane %v793, 4
      %v799 = vshrl.u32 %v741, 16
      %v801 = vrot.slane %v799, 7
      %v802 = vshll.u32 %v741, 16
      %v804 = vor.u32 %v801, %v802
      %v805 = vrot.slane %v801, 4
      %s822 = scalar_lea.vmem [#allocation2], 8
      %vm823 = vcmask 1043456
      %vm824 = vsmask.f32 7938
      %vm825 = vmand %vm823, %vm824
      %v826 = vld [vmem:[%s822] sm:$0xf]
      %v827 = vsel %vm825, %v748, %v826
      %828 = vst [vmem:[%s822] sm:$0xf] %v827
      %vm829 = vcmask 1040384
      %vm830 = vsmask.f32 256
      %vm831 = vmand %vm829, %vm830
      %v832 = vld [vmem:[%s822 + $0x4] sm:$0x1]
      %v833 = vsel %vm831, %v749, %v832
      %834 = vst [vmem:[%s822 + $0x4] sm:$0x1] %v833
      %v835 = vld [vmem:[%s822 + $0x8] sm:$0xf]
      %v836 = vsel %vm825, %v756, %v835
      %837 = vst [vmem:[%s822 + $0x8] sm:$0xf] %v836
      %v838 = vld [vmem:[%s822 + $0xc] sm:$0x1]
      %v839 = vsel %vm831, %v757, %v838
      %840 = vst [vmem:[%s822 + $0xc] sm:$0x1] %v839
      %v841 = vld [vmem:[%s822 + $0x10] sm:$0xf]
      %v842 = vsel %vm825, %v764, %v841
      %843 = vst [vmem:[%s822 + $0x10] sm:$0xf] %v842
      %v844 = vld [vmem:[%s822 + $0x14] sm:$0x1]
      %v845 = vsel %vm831, %v765, %v844
      %846 = vst [vmem:[%s822 + $0x14] sm:$0x1] %v845
      %v847 = vld [vmem:[%s822 + $0x18] sm:$0xf]
      %v848 = vsel %vm825, %v772, %v847
      %849 = vst [vmem:[%s822 + $0x18] sm:$0xf] %v848
      %v850 = vld [vmem:[%s822 + $0x1c] sm:$0x1]
      %v851 = vsel %vm831, %v773, %v850
      %852 = vst [vmem:[%s822 + $0x1c] sm:$0x1] %v851
      %v853 = vld [vmem:[%s822 + $0x20] sm:$0xf]
      %v854 = vsel %vm825, %v780, %v853
      %855 = vst [vmem:[%s822 + $0x20] sm:$0xf] %v854
      %v856 = vld [vmem:[%s822 + $0x24] sm:$0x1]
      %v857 = vsel %vm831, %v781, %v856
      %858 = vst [vmem:[%s822 + $0x24] sm:$0x1] %v857
      %v859 = vld [vmem:[%s822 + $0x28] sm:$0xf]
      %v860 = vsel %vm825, %v788, %v859
      %861 = vst [vmem:[%s822 + $0x28] sm:$0xf] %v860
      %v862 = vld [vmem:[%s822 + $0x2c] sm:$0x1]
      %v863 = vsel %vm831, %v789, %v862
      %864 = vst [vmem:[%s822 + $0x2c] sm:$0x1] %v863
      %v865 = vld [vmem:[%s822 + $0x30] sm:$0xf]
      %v866 = vsel %vm825, %v796, %v865
      %867 = vst [vmem:[%s822 + $0x30] sm:$0xf] %v866
      %v868 = vld [vmem:[%s822 + $0x34] sm:$0x1]
      %v869 = vsel %vm831, %v797, %v868
      %870 = vst [vmem:[%s822 + $0x34] sm:$0x1] %v869
      %v871 = vld [vmem:[%s822 + $0x38] sm:$0xf]
      %v872 = vsel %vm825, %v804, %v871
      %873 = vst [vmem:[%s822 + $0x38] sm:$0xf] %v872
      %v874 = vld [vmem:[%s822 + $0x3c] sm:$0x1]
      %v875 = vsel %vm831, %v805, %v874
      %876 = vst [vmem:[%s822 + $0x3c] sm:$0x1] %v875
      %v877 = vld [vmem:[#allocation2] sm:$0xf]
      %v878 = vld [vmem:[#allocation2 + $0x8] sm:$0xf]
      %v879 = vld [vmem:[#allocation2 + $0x10] sm:$0xf]
      %v880 = vld [vmem:[#allocation2 + $0x18] sm:$0xf]
      %v881 = vld [vmem:[#allocation2 + $0x20] sm:$0xf]
      %v882 = vld [vmem:[#allocation2 + $0x28] sm:$0xf]
      %v883 = vld [vmem:[#allocation2 + $0x30] sm:$0xf]
      %v884 = vld [vmem:[#allocation2 + $0x38] sm:$0xf]
      %v885 = vld [vmem:[%s2] sm:$0xf]
      %v886 = vld [vmem:[%s2 + $0x4] sm:$0xf]
      %v887 = vld [vmem:[%s2 + $0x8] sm:$0xf]
      %v888 = vld [vmem:[%s2 + $0xc] sm:$0xf]
      %v889 = vld [vmem:[%s2 + $0x10] sm:$0xf]
      %v890 = vld [vmem:[%s2 + $0x14] sm:$0xf]
      %v891 = vld [vmem:[%s2 + $0x18] sm:$0xf]
      %v892 = vld [vmem:[%s2 + $0x1c] sm:$0xf]
      %v893 = vld [vmem:[%s2 + $0x20] sm:$0xf]
      %v894 = vld [vmem:[%s2 + $0x24] sm:$0xf]
      %v895 = vld [vmem:[%s2 + $0x28] sm:$0xf]
      %v896 = vld [vmem:[%s2 + $0x2c] sm:$0xf]
      %v897 = vld [vmem:[%s2 + $0x30] sm:$0xf]
      %v898 = vld [vmem:[%s2 + $0x34] sm:$0xf]
      %v899 = vld [vmem:[%s2 + $0x38] sm:$0xf]
      %v900 = vld [vmem:[%s2 + $0x3c] sm:$0xf]
      %v901 = vld [vmem:[#allocation2 + $0x4] sm:$0x1]
      %v902 = vld [vmem:[#allocation2 + $0xc] sm:$0x1]
      %v903 = vld [vmem:[#allocation2 + $0x14] sm:$0x1]
      %v904 = vld [vmem:[#allocation2 + $0x1c] sm:$0x1]
      %v905 = vld [vmem:[#allocation2 + $0x24] sm:$0x1]
      %v906 = vld [vmem:[#allocation2 + $0x2c] sm:$0x1]
      %v907 = vld [vmem:[#allocation2 + $0x34] sm:$0x1]
      %v908 = vld [vmem:[#allocation2 + $0x3c] sm:$0x1]
      %v910 = vshrl.u32 %v877, 16
      %v912 = vrot.slane %v910, 4
      %v913 = vshll.u32 %v877, 16
      %v915 = vrot.slane %v913, 5
      %v916 = vor.u32 %v912, %v915
      %v917 = vrot.slane %v916, 4
      %v919 = vshll.u32 %v901, 16
      %v921 = vrot.slane %v919, 5
      %v922 = vsel %vm322, %v917, %v921
      %v924 = vshrl.u32 %v878, 16
      %v926 = vrot.slane %v924, 4
      %v927 = vshll.u32 %v878, 16
      %v929 = vrot.slane %v927, 5
      %v930 = vor.u32 %v926, %v929
      %v931 = vrot.slane %v930, 4
      %v933 = vshll.u32 %v902, 16
      %v935 = vrot.slane %v933, 5
      %v936 = vsel %vm322, %v931, %v935
      %v938 = vshrl.u32 %v879, 16
      %v940 = vrot.slane %v938, 4
      %v941 = vshll.u32 %v879, 16
      %v943 = vrot.slane %v941, 5
      %v944 = vor.u32 %v940, %v943
      %v945 = vrot.slane %v944, 4
      %v947 = vshll.u32 %v903, 16
      %v949 = vrot.slane %v947, 5
      %v950 = vsel %vm322, %v945, %v949
      %v952 = vshrl.u32 %v880, 16
      %v954 = vrot.slane %v952, 4
      %v955 = vshll.u32 %v880, 16
      %v957 = vrot.slane %v955, 5
      %v958 = vor.u32 %v954, %v957
      %v959 = vrot.slane %v958, 4
      %v961 = vshll.u32 %v904, 16
      %v963 = vrot.slane %v961, 5
      %v964 = vsel %vm322, %v959, %v963
      %v966 = vshrl.u32 %v881, 16
      %v968 = vrot.slane %v966, 4
      %v969 = vshll.u32 %v881, 16
      %v971 = vrot.slane %v969, 5
      %v972 = vor.u32 %v968, %v971
      %v973 = vrot.slane %v972, 4
      %v975 = vshll.u32 %v905, 16
      %v977 = vrot.slane %v975, 5
      %v978 = vsel %vm322, %v973, %v977
      %v980 = vshrl.u32 %v882, 16
      %v982 = vrot.slane %v980, 4
      %v983 = vshll.u32 %v882, 16
      %v985 = vrot.slane %v983, 5
      %v986 = vor.u32 %v982, %v985
      %v987 = vrot.slane %v986, 4
      %v989 = vshll.u32 %v906, 16
      %v991 = vrot.slane %v989, 5
      %v992 = vsel %vm322, %v987, %v991
      %v994 = vshrl.u32 %v883, 16
      %v996 = vrot.slane %v994, 4
      %v997 = vshll.u32 %v883, 16
      %v999 = vrot.slane %v997, 5
      %v1000 = vor.u32 %v996, %v999
      %v1001 = vrot.slane %v1000, 4
      %v1003 = vshll.u32 %v907, 16
      %v1005 = vrot.slane %v1003, 5
      %v1006 = vsel %vm322, %v1001, %v1005
      %v1008 = vshrl.u32 %v884, 16
      %v1010 = vrot.slane %v1008, 4
      %v1011 = vshll.u32 %v884, 16
      %v1013 = vrot.slane %v1011, 5
      %v1014 = vor.u32 %v1010, %v1013
      %v1015 = vrot.slane %v1014, 4
      %v1017 = vshll.u32 %v908, 16
      %v1019 = vrot.slane %v1017, 5
      %v1020 = vsel %vm322, %v1015, %v1019
      %s1021 = scalar_lea.vmem %s2, 64
      %v1022 = vld [vmem:[%s1021] sm:$0xf]
      %v1023 = vld [vmem:[%s1021 + $0x4] sm:$0xf]
      %v1024 = vld [vmem:[%s1021 + $0x8] sm:$0xf]
      %v1025 = vld [vmem:[%s1021 + $0xc] sm:$0xf]
      %v1026 = vld [vmem:[%s1021 + $0x10] sm:$0xf]
      %v1027 = vld [vmem:[%s1021 + $0x14] sm:$0xf]
      %v1028 = vld [vmem:[%s1021 + $0x18] sm:$0xf]
      %v1029 = vld [vmem:[%s1021 + $0x1c] sm:$0xf]
      %v1030 = vld [vmem:[%s1021 + $0x20] sm:$0xf]
      %v1031 = vld [vmem:[%s1021 + $0x24] sm:$0xf]
      %v1032 = vld [vmem:[%s1021 + $0x28] sm:$0xf]
      %v1033 = vld [vmem:[%s1021 + $0x2c] sm:$0xf]
      %v1034 = vld [vmem:[%s1021 + $0x30] sm:$0xf]
      %v1035 = vld [vmem:[%s1021 + $0x34] sm:$0xf]
      %v1036 = vld [vmem:[%s1021 + $0x38] sm:$0xf]
      %v1037 = vld [vmem:[%s1021 + $0x3c] sm:$0xf]
      %v1038 = vunpack.c.l.b16 %v922
      %v1039 = vunpack.c.l.b16 %v936
      %v1040 = vunpack.c.l.b16 %v950
      %v1041 = vunpack.c.l.b16 %v964
      %v1042 = vunpack.c.l.b16 %v978
      %v1043 = vunpack.c.l.b16 %v992
      %v1044 = vunpack.c.l.b16 %v1006
      %v1045 = vunpack.c.l.b16 %v1020
      %v1046 = vpack.c.b16 %v1039, %v1038
      %v1047 = vpack.c.b16 %v1041, %v1040
      %v1048 = vpack.c.b16 %v1043, %v1042
      %v1049 = vpack.c.b16 %v1045, %v1044
      %v1070 = vunpack.c.l.b16 %v1022
      %v1071 = vunpack.c.l.b16 %v1023
      %v1072 = vunpack.c.l.b16 %v1024
      %v1073 = vunpack.c.l.b16 %v1025
      %v1074 = vunpack.c.l.b16 %v1026
      %v1075 = vunpack.c.l.b16 %v1027
      %v1076 = vunpack.c.l.b16 %v1028
      %v1077 = vunpack.c.l.b16 %v1029
      %v1078 = vunpack.c.l.b16 %v1030
      %v1079 = vunpack.c.l.b16 %v1031
      %v1080 = vunpack.c.l.b16 %v1032
      %v1081 = vunpack.c.l.b16 %v1033
      %v1082 = vunpack.c.l.b16 %v1034
      %v1083 = vunpack.c.l.b16 %v1035
      %v1084 = vunpack.c.l.b16 %v1036
      %v1085 = vunpack.c.l.b16 %v1037
      %v1086 = vpack.c.b16 %v1071, %v1070
      %v1087 = vpack.c.b16 %v1073, %v1072
      %v1088 = vpack.c.b16 %v1075, %v1074
      %v1089 = vpack.c.b16 %v1077, %v1076
      %v1090 = vpack.c.b16 %v1079, %v1078
      %v1091 = vpack.c.b16 %v1081, %v1080
      %v1092 = vpack.c.b16 %v1083, %v1082
      %v1093 = vpack.c.b16 %v1085, %v1084
      %1102 = vmatpush.bf16.msra.mxu0 %v1093
      %1103 = vmatpush.bf16.msra.mxu0 %v1092
      %1104 = vmatpush.bf16.msra.mxu0 %v1091
      %1105 = vmatpush.bf16.msra.mxu0 %v1090
      %1106 = vmatpush.bf16.msra.mxu0 %v1089
      %1107 = vmatpush.bf16.msra.mxu0 %v1088
      %1108 = vmatpush.bf16.msra.mxu0 %v1087
      %1109 = vmatpush.bf16.msra.mxu0 %v1086
      %1110 = vmatmul.bf16.gmra.mxu0 %v1046
      %v1111 = vpop.f32.mrf.mxu0
      %v1112 = vadd.f32 0.0, %v1111
      %v1113 = vpop.f32.mrf.mxu0
      %v1114 = vadd.f32 0.0, %v1113
      %1115 = vmatmul.bf16.gmra.mxu0 %v1047
      %v1116 = vpop.f32.mrf.mxu0
      %v1117 = vadd.f32 0.0, %v1116
      %v1118 = vpop.f32.mrf.mxu0
      %v1119 = vadd.f32 0.0, %v1118
      %1120 = vmatmul.bf16.gmra.mxu0 %v1048
      %v1121 = vpop.f32.mrf.mxu0
      %v1122 = vadd.f32 0.0, %v1121
      %v1123 = vpop.f32.mrf.mxu0
      %v1124 = vadd.f32 0.0, %v1123
      %1125 = vmatmul.bf16.gmra.mxu0 %v1049
      %v1126 = vpop.f32.mrf.mxu0
      %v1127 = vadd.f32 0.0, %v1126
      %v1128 = vpop.f32.mrf.mxu0
      %v1129 = vadd.f32 0.0, %v1128
      %1130 = vdwg.mxu0
      %v1139 = vunpack.c.l.b16 %v877
      %v1140 = vunpack.c.l.b16 %v878
      %v1141 = vunpack.c.l.b16 %v879
      %v1142 = vunpack.c.l.b16 %v880
      %v1143 = vunpack.c.l.b16 %v881
      %v1144 = vunpack.c.l.b16 %v882
      %v1145 = vunpack.c.l.b16 %v883
      %v1146 = vunpack.c.l.b16 %v884
      %v1147 = vpack.c.b16 %v1140, %v1139
      %v1148 = vpack.c.b16 %v1142, %v1141
      %v1149 = vpack.c.b16 %v1144, %v1143
      %v1150 = vpack.c.b16 %v1146, %v1145
      %v1171 = vunpack.c.l.b16 %v885
      %v1172 = vunpack.c.l.b16 %v886
      %v1173 = vunpack.c.l.b16 %v887
      %v1174 = vunpack.c.l.b16 %v888
      %v1175 = vunpack.c.l.b16 %v889
      %v1176 = vunpack.c.l.b16 %v890
      %v1177 = vunpack.c.l.b16 %v891
      %v1178 = vunpack.c.l.b16 %v892
      %v1179 = vunpack.c.l.b16 %v893
      %v1180 = vunpack.c.l.b16 %v894
      %v1181 = vunpack.c.l.b16 %v895
      %v1182 = vunpack.c.l.b16 %v896
      %v1183 = vunpack.c.l.b16 %v897
      %v1184 = vunpack.c.l.b16 %v898
      %v1185 = vunpack.c.l.b16 %v899
      %v1186 = vunpack.c.l.b16 %v900
      %v1187 = vpack.c.b16 %v1172, %v1171
      %v1188 = vpack.c.b16 %v1174, %v1173
      %v1189 = vpack.c.b16 %v1176, %v1175
      %v1190 = vpack.c.b16 %v1178, %v1177
      %v1191 = vpack.c.b16 %v1180, %v1179
      %v1192 = vpack.c.b16 %v1182, %v1181
      %v1193 = vpack.c.b16 %v1184, %v1183
      %v1194 = vpack.c.b16 %v1186, %v1185
      %1203 = vmatpush.bf16.msra.mxu0 %v1194
      %1204 = vmatpush.bf16.msra.mxu0 %v1193
      %1205 = vmatpush.bf16.msra.mxu0 %v1192
      %1206 = vmatpush.bf16.msra.mxu0 %v1191
      %1207 = vmatpush.bf16.msra.mxu0 %v1190
      %1208 = vmatpush.bf16.msra.mxu0 %v1189
      %1209 = vmatpush.bf16.msra.mxu0 %v1188
      %1210 = vmatpush.bf16.msra.mxu0 %v1187
      %1211 = vmatmul.bf16.gmra.mxu0 %v1147
      %v1212 = vpop.f32.mrf.mxu0
      %v1213 = vadd.f32 %v1112, %v1212
      %v1214 = vpop.f32.mrf.mxu0
      %v1215 = vadd.f32 %v1114, %v1214
      %1216 = vmatmul.bf16.gmra.mxu0 %v1148
      %v1217 = vpop.f32.mrf.mxu0
      %v1218 = vadd.f32 %v1117, %v1217
      %v1219 = vpop.f32.mrf.mxu0
      %v1220 = vadd.f32 %v1119, %v1219
      %1221 = vmatmul.bf16.gmra.mxu0 %v1149
      %v1222 = vpop.f32.mrf.mxu0
      %v1223 = vadd.f32 %v1122, %v1222
      %v1224 = vpop.f32.mrf.mxu0
      %v1225 = vadd.f32 %v1124, %v1224
      %1226 = vmatmul.bf16.gmra.mxu0 %v1150
      %v1227 = vpop.f32.mrf.mxu0
      %v1228 = vadd.f32 %v1127, %v1227
      %v1229 = vpop.f32.mrf.mxu0
      %v1230 = vadd.f32 %v1129, %v1229
      %1231 = vdwg.mxu0
      %v1232 = vld [vmem:[%s822] sm:$0xf]
      %v1233 = vld [vmem:[%s822 + $0x8] sm:$0xf]
      %v1234 = vld [vmem:[%s822 + $0x10] sm:$0xf]
      %v1235 = vld [vmem:[%s822 + $0x18] sm:$0xf]
      %v1236 = vld [vmem:[%s822 + $0x20] sm:$0xf]
      %v1237 = vld [vmem:[%s822 + $0x28] sm:$0xf]
      %v1238 = vld [vmem:[%s822 + $0x30] sm:$0xf]
      %v1239 = vld [vmem:[%s822 + $0x38] sm:$0xf]
      %s1240 = scalar_lea.vmem %s2, 128
      %v1241 = vld [vmem:[%s1240] sm:$0xf]
      %v1242 = vld [vmem:[%s1240 + $0x4] sm:$0xf]
      %v1243 = vld [vmem:[%s1240 + $0x8] sm:$0xf]
      %v1244 = vld [vmem:[%s1240 + $0xc] sm:$0xf]
      %v1245 = vld [vmem:[%s1240 + $0x10] sm:$0xf]
      %v1246 = vld [vmem:[%s1240 + $0x14] sm:$0xf]
      %v1247 = vld [vmem:[%s1240 + $0x18] sm:$0xf]
      %v1248 = vld [vmem:[%s1240 + $0x1c] sm:$0xf]
      %v1249 = vld [vmem:[%s1240 + $0x20] sm:$0xf]
      %v1250 = vld [vmem:[%s1240 + $0x24] sm:$0xf]
      %v1251 = vld [vmem:[%s1240 + $0x28] sm:$0xf]
      %v1252 = vld [vmem:[%s1240 + $0x2c] sm:$0xf]
      %v1253 = vld [vmem:[%s1240 + $0x30] sm:$0xf]
      %v1254 = vld [vmem:[%s1240 + $0x34] sm:$0xf]
      %v1255 = vld [vmem:[%s1240 + $0x38] sm:$0xf]
      %v1256 = vld [vmem:[%s1240 + $0x3c] sm:$0xf]
      %v1265 = vunpack.c.l.b16 %v1232
      %v1266 = vunpack.c.l.b16 %v1233
      %v1267 = vunpack.c.l.b16 %v1234
      %v1268 = vunpack.c.l.b16 %v1235
      %v1269 = vunpack.c.l.b16 %v1236
      %v1270 = vunpack.c.l.b16 %v1237
      %v1271 = vunpack.c.l.b16 %v1238
      %v1272 = vunpack.c.l.b16 %v1239
      %v1273 = vpack.c.b16 %v1266, %v1265
      %v1274 = vpack.c.b16 %v1268, %v1267
      %v1275 = vpack.c.b16 %v1270, %v1269
      %v1276 = vpack.c.b16 %v1272, %v1271
      %v1297 = vunpack.c.l.b16 %v1241
      %v1298 = vunpack.c.l.b16 %v1242
      %v1299 = vunpack.c.l.b16 %v1243
      %v1300 = vunpack.c.l.b16 %v1244
      %v1301 = vunpack.c.l.b16 %v1245
      %v1302 = vunpack.c.l.b16 %v1246
      %v1303 = vunpack.c.l.b16 %v1247
      %v1304 = vunpack.c.l.b16 %v1248
      %v1305 = vunpack.c.l.b16 %v1249
      %v1306 = vunpack.c.l.b16 %v1250
      %v1307 = vunpack.c.l.b16 %v1251
      %v1308 = vunpack.c.l.b16 %v1252
      %v1309 = vunpack.c.l.b16 %v1253
      %v1310 = vunpack.c.l.b16 %v1254
      %v1311 = vunpack.c.l.b16 %v1255
      %v1312 = vunpack.c.l.b16 %v1256
      %v1313 = vpack.c.b16 %v1298, %v1297
      %v1314 = vpack.c.b16 %v1300, %v1299
      %v1315 = vpack.c.b16 %v1302, %v1301
      %v1316 = vpack.c.b16 %v1304, %v1303
      %v1317 = vpack.c.b16 %v1306, %v1305
      %v1318 = vpack.c.b16 %v1308, %v1307
      %v1319 = vpack.c.b16 %v1310, %v1309
      %v1320 = vpack.c.b16 %v1312, %v1311
      %1329 = vmatpush.bf16.msra.mxu0 %v1320
      %1330 = vmatpush.bf16.msra.mxu0 %v1319
      %1331 = vmatpush.bf16.msra.mxu0 %v1318
      %1332 = vmatpush.bf16.msra.mxu0 %v1317
      %1333 = vmatpush.bf16.msra.mxu0 %v1316
      %1334 = vmatpush.bf16.msra.mxu0 %v1315
      %1335 = vmatpush.bf16.msra.mxu0 %v1314
      %1336 = vmatpush.bf16.msra.mxu0 %v1313
      %1337 = vmatmul.bf16.gmra.mxu0 %v1273
      %v1338 = vpop.f32.mrf.mxu0
      %v1339 = vadd.f32 0.0, %v1338
      %v1340 = vpop.f32.mrf.mxu0
      %v1341 = vadd.f32 0.0, %v1340
      %1342 = vmatmul.bf16.gmra.mxu0 %v1274
      %v1343 = vpop.f32.mrf.mxu0
      %v1344 = vadd.f32 0.0, %v1343
      %v1345 = vpop.f32.mrf.mxu0
      %v1346 = vadd.f32 0.0, %v1345
      %1347 = vmatmul.bf16.gmra.mxu0 %v1275
      %v1348 = vpop.f32.mrf.mxu0
      %v1349 = vadd.f32 0.0, %v1348
      %v1350 = vpop.f32.mrf.mxu0
      %v1351 = vadd.f32 0.0, %v1350
      %1352 = vmatmul.bf16.gmra.mxu0 %v1276
      %v1353 = vpop.f32.mrf.mxu0
      %v1354 = vadd.f32 0.0, %v1353
      %v1355 = vpop.f32.mrf.mxu0
      %v1356 = vadd.f32 0.0, %v1355
      %1357 = vdwg.mxu0
      %v1358 = vadd.f32 %v1213, %v1339
      %v1359 = vadd.f32 %v1215, %v1341
      %v1360 = vadd.f32 %v1218, %v1344
      %v1361 = vadd.f32 %v1220, %v1346
      %v1362 = vadd.f32 %v1223, %v1349
      %v1363 = vadd.f32 %v1225, %v1351
      %v1364 = vadd.f32 %v1228, %v1354
      %v1365 = vadd.f32 %v1230, %v1356
      %v1366 = vld [vmem:[%s822] sm:$0xf]
      %v1367 = vld [vmem:[%s822 + $0x4] sm:$0x1]
      %v1368 = vld [vmem:[%s822 + $0x8] sm:$0xf]
      %v1369 = vld [vmem:[%s822 + $0xc] sm:$0x1]
      %v1370 = vld [vmem:[%s822 + $0x10] sm:$0xf]
      %v1371 = vld [vmem:[%s822 + $0x14] sm:$0x1]
      %v1372 = vld [vmem:[%s822 + $0x18] sm:$0xf]
      %v1373 = vld [vmem:[%s822 + $0x1c] sm:$0x1]
      %v1374 = vld [vmem:[%s822 + $0x20] sm:$0xf]
      %v1375 = vld [vmem:[%s822 + $0x24] sm:$0x1]
      %v1376 = vld [vmem:[%s822 + $0x28] sm:$0xf]
      %v1377 = vld [vmem:[%s822 + $0x2c] sm:$0x1]
      %v1378 = vld [vmem:[%s822 + $0x30] sm:$0xf]
      %v1379 = vld [vmem:[%s822 + $0x34] sm:$0x1]
      %v1380 = vld [vmem:[%s822 + $0x38] sm:$0xf]
      %v1381 = vld [vmem:[%s822 + $0x3c] sm:$0x1]
      %v1383 = vshrl.u32 %v1366, 16
      %v1385 = vrot.slane %v1383, 4
      %v1386 = vshll.u32 %v1366, 16
      %v1388 = vrot.slane %v1386, 5
      %v1389 = vor.u32 %v1385, %v1388
      %v1390 = vrot.slane %v1389, 4
      %v1392 = vshll.u32 %v1367, 16
      %v1394 = vrot.slane %v1392, 5
      %v1395 = vsel %vm322, %v1390, %v1394
      %v1397 = vshrl.u32 %v1368, 16
      %v1399 = vrot.slane %v1397, 4
      %v1400 = vshll.u32 %v1368, 16
      %v1402 = vrot.slane %v1400, 5
      %v1403 = vor.u32 %v1399, %v1402
      %v1404 = vrot.slane %v1403, 4
      %v1406 = vshll.u32 %v1369, 16
      %v1408 = vrot.slane %v1406, 5
      %v1409 = vsel %vm322, %v1404, %v1408
      %v1411 = vshrl.u32 %v1370, 16
      %v1413 = vrot.slane %v1411, 4
      %v1414 = vshll.u32 %v1370, 16
      %v1416 = vrot.slane %v1414, 5
      %v1417 = vor.u32 %v1413, %v1416
      %v1418 = vrot.slane %v1417, 4
      %v1420 = vshll.u32 %v1371, 16
      %v1422 = vrot.slane %v1420, 5
      %v1423 = vsel %vm322, %v1418, %v1422
      %v1425 = vshrl.u32 %v1372, 16
      %v1427 = vrot.slane %v1425, 4
      %v1428 = vshll.u32 %v1372, 16
      %v1430 = vrot.slane %v1428, 5
      %v1431 = vor.u32 %v1427, %v1430
      %v1432 = vrot.slane %v1431, 4
      %v1434 = vshll.u32 %v1373, 16
      %v1436 = vrot.slane %v1434, 5
      %v1437 = vsel %vm322, %v1432, %v1436
      %v1439 = vshrl.u32 %v1374, 16
      %v1441 = vrot.slane %v1439, 4
      %v1442 = vshll.u32 %v1374, 16
      %v1444 = vrot.slane %v1442, 5
      %v1445 = vor.u32 %v1441, %v1444
      %v1446 = vrot.slane %v1445, 4
      %v1448 = vshll.u32 %v1375, 16
      %v1450 = vrot.slane %v1448, 5
      %v1451 = vsel %vm322, %v1446, %v1450
      %v1453 = vshrl.u32 %v1376, 16
      %v1455 = vrot.slane %v1453, 4
      %v1456 = vshll.u32 %v1376, 16
      %v1458 = vrot.slane %v1456, 5
      %v1459 = vor.u32 %v1455, %v1458
      %v1460 = vrot.slane %v1459, 4
      %v1462 = vshll.u32 %v1377, 16
      %v1464 = vrot.slane %v1462, 5
      %v1465 = vsel %vm322, %v1460, %v1464
      %v1467 = vshrl.u32 %v1378, 16
      %v1469 = vrot.slane %v1467, 4
      %v1470 = vshll.u32 %v1378, 16
      %v1472 = vrot.slane %v1470, 5
      %v1473 = vor.u32 %v1469, %v1472
      %v1474 = vrot.slane %v1473, 4
      %v1476 = vshll.u32 %v1379, 16
      %v1478 = vrot.slane %v1476, 5
      %v1479 = vsel %vm322, %v1474, %v1478
      %v1481 = vshrl.u32 %v1380, 16
      %v1483 = vrot.slane %v1481, 4
      %v1484 = vshll.u32 %v1380, 16
      %v1486 = vrot.slane %v1484, 5
      %v1487 = vor.u32 %v1483, %v1486
      %v1488 = vrot.slane %v1487, 4
      %v1490 = vshll.u32 %v1381, 16
      %v1492 = vrot.slane %v1490, 5
      %v1493 = vsel %vm322, %v1488, %v1492
      %s1494 = scalar_lea.vmem %s2, 192
      %v1495 = vld [vmem:[%s1494] sm:$0xf]
      %v1496 = vld [vmem:[%s1494 + $0x4] sm:$0xf]
      %v1497 = vld [vmem:[%s1494 + $0x8] sm:$0xf]
      %v1498 = vld [vmem:[%s1494 + $0xc] sm:$0xf]
      %v1499 = vld [vmem:[%s1494 + $0x10] sm:$0xf]
      %v1500 = vld [vmem:[%s1494 + $0x14] sm:$0xf]
      %v1501 = vld [vmem:[%s1494 + $0x18] sm:$0xf]
      %v1502 = vld [vmem:[%s1494 + $0x1c] sm:$0xf]
      %v1503 = vld [vmem:[%s1494 + $0x20] sm:$0xf]
      %v1504 = vld [vmem:[%s1494 + $0x24] sm:$0xf]
      %v1505 = vld [vmem:[%s1494 + $0x28] sm:$0xf]
      %v1506 = vld [vmem:[%s1494 + $0x2c] sm:$0xf]
      %v1507 = vld [vmem:[%s1494 + $0x30] sm:$0xf]
      %v1508 = vld [vmem:[%s1494 + $0x34] sm:$0xf]
      %v1509 = vld [vmem:[%s1494 + $0x38] sm:$0xf]
      %v1510 = vld [vmem:[%s1494 + $0x3c] sm:$0xf]
      %v1511 = vunpack.c.l.b16 %v1395
      %v1512 = vunpack.c.l.b16 %v1409
      %v1513 = vunpack.c.l.b16 %v1423
      %v1514 = vunpack.c.l.b16 %v1437
      %v1515 = vunpack.c.l.b16 %v1451
      %v1516 = vunpack.c.l.b16 %v1465
      %v1517 = vunpack.c.l.b16 %v1479
      %v1518 = vunpack.c.l.b16 %v1493
      %v1519 = vpack.c.b16 %v1512, %v1511
      %v1520 = vpack.c.b16 %v1514, %v1513
      %v1521 = vpack.c.b16 %v1516, %v1515
      %v1522 = vpack.c.b16 %v1518, %v1517
      %v1543 = vunpack.c.l.b16 %v1495
      %v1544 = vunpack.c.l.b16 %v1496
      %v1545 = vunpack.c.l.b16 %v1497
      %v1546 = vunpack.c.l.b16 %v1498
      %v1547 = vunpack.c.l.b16 %v1499
      %v1548 = vunpack.c.l.b16 %v1500
      %v1549 = vunpack.c.l.b16 %v1501
      %v1550 = vunpack.c.l.b16 %v1502
      %v1551 = vunpack.c.l.b16 %v1503
      %v1552 = vunpack.c.l.b16 %v1504
      %v1553 = vunpack.c.l.b16 %v1505
      %v1554 = vunpack.c.l.b16 %v1506
      %v1555 = vunpack.c.l.b16 %v1507
      %v1556 = vunpack.c.l.b16 %v1508
      %v1557 = vunpack.c.l.b16 %v1509
      %v1558 = vunpack.c.l.b16 %v1510
      %v1559 = vpack.c.b16 %v1544, %v1543
      %v1560 = vpack.c.b16 %v1546, %v1545
      %v1561 = vpack.c.b16 %v1548, %v1547
      %v1562 = vpack.c.b16 %v1550, %v1549
      %v1563 = vpack.c.b16 %v1552, %v1551
      %v1564 = vpack.c.b16 %v1554, %v1553
      %v1565 = vpack.c.b16 %v1556, %v1555
      %v1566 = vpack.c.b16 %v1558, %v1557
      %1575 = vmatpush.bf16.msra.mxu0 %v1566
      %1576 = vmatpush.bf16.msra.mxu0 %v1565
      %1577 = vmatpush.bf16.msra.mxu0 %v1564
      %1578 = vmatpush.bf16.msra.mxu0 %v1563
      %1579 = vmatpush.bf16.msra.mxu0 %v1562
      %1580 = vmatpush.bf16.msra.mxu0 %v1561
      %1581 = vmatpush.bf16.msra.mxu0 %v1560
      %1582 = vmatpush.bf16.msra.mxu0 %v1559
      %1583 = vmatmul.bf16.gmra.mxu0 %v1519
      %v1584 = vpop.f32.mrf.mxu0
      %v1585 = vadd.f32 0.0, %v1584
      %v1586 = vpop.f32.mrf.mxu0
      %v1587 = vadd.f32 0.0, %v1586
      %1588 = vmatmul.bf16.gmra.mxu0 %v1520
      %v1589 = vpop.f32.mrf.mxu0
      %v1590 = vadd.f32 0.0, %v1589
      %v1591 = vpop.f32.mrf.mxu0
      %v1592 = vadd.f32 0.0, %v1591
      %1593 = vmatmul.bf16.gmra.mxu0 %v1521
      %v1594 = vpop.f32.mrf.mxu0
      %v1595 = vadd.f32 0.0, %v1594
      %v1596 = vpop.f32.mrf.mxu0
      %v1597 = vadd.f32 0.0, %v1596
      %1598 = vmatmul.bf16.gmra.mxu0 %v1522
      %v1599 = vpop.f32.mrf.mxu0
      %v1600 = vadd.f32 0.0, %v1599
      %v1601 = vpop.f32.mrf.mxu0
      %v1602 = vadd.f32 0.0, %v1601
      %1603 = vdwg.mxu0
      %v1604 = vadd.f32 %v1358, %v1585
      %v1605 = vadd.f32 %v1359, %v1587
      %v1606 = vadd.f32 %v1360, %v1590
      %v1607 = vadd.f32 %v1361, %v1592
      %v1608 = vadd.f32 %v1362, %v1595
      %v1609 = vadd.f32 %v1363, %v1597
      %v1610 = vadd.f32 %v1364, %v1600
      %v1611 = vadd.f32 %v1365, %v1602
      %v1612 = vpack.c.bf16 %v1604, %v1604
      %v1613 = vpack.c.bf16 %v1605, %v1605
      %v1614 = vpack.c.bf16 %v1606, %v1606
      %v1615 = vpack.c.bf16 %v1607, %v1607
      %v1616 = vpack.c.bf16 %v1608, %v1608
      %v1617 = vpack.c.bf16 %v1609, %v1609
      %v1618 = vpack.c.bf16 %v1610, %v1610
      %v1619 = vpack.c.bf16 %v1611, %v1611
      %1620 = vst [vmem:[%s204] sm:$0xf] %v1612
      %1621 = vst [vmem:[%s204 + $0x4] sm:$0xf] %v1613
      %1622 = vst [vmem:[%s204 + $0x8] sm:$0xf] %v1614
      %1623 = vst [vmem:[%s204 + $0xc] sm:$0xf] %v1615
      %1624 = vst [vmem:[%s204 + $0x10] sm:$0xf] %v1616
      %1625 = vst [vmem:[%s204 + $0x14] sm:$0xf] %v1617
      %1626 = vst [vmem:[%s204 + $0x18] sm:$0xf] %v1618
      %1627 = vst [vmem:[%s204 + $0x1c] sm:$0xf] %v1619
      %v1628 = vadd.f32 %v1604, %v1605
      %v1629 = vadd.f32 %v1628, %v1606
      %v1630 = vadd.f32 %v1629, %v1607
      %v1631 = vadd.f32 %v1630, %v1608
      %v1632 = vadd.f32 %v1631, %v1609
      %v1633 = vadd.f32 %v1632, %v1610
      %v1634 = vadd.f32 %v1633, %v1611
      %v1635 = vrot.slane %v1634, 4
      %v1636 = vadd.f32 %v1634, %v1635
      %v1637 = vrot.slane %v1636, 2
      %v1638 = vadd.f32 %v1636, %v1637
      %v1639 = vrot.slane %v1638, 1
      %v1640 = vadd.f32 %v1638, %v1639
      %v1641 = vadd.f32 %v1640, 0.0
      %v1642 = vmul.f32 %v1604, %v1604
      %v1643 = vmul.f32 %v1605, %v1605
      %v1644 = vmul.f32 %v1606, %v1606
      %v1645 = vmul.f32 %v1607, %v1607
      %v1646 = vmul.f32 %v1608, %v1608
      %v1647 = vmul.f32 %v1609, %v1609
      %v1648 = vmul.f32 %v1610, %v1610
      %v1649 = vmul.f32 %v1611, %v1611
      %v1650 = vadd.f32 %v1642, %v1643
      %v1651 = vadd.f32 %v1650, %v1644
      %v1652 = vadd.f32 %v1651, %v1645
      %v1653 = vadd.f32 %v1652, %v1646
      %v1654 = vadd.f32 %v1653, %v1647
      %v1655 = vadd.f32 %v1654, %v1648
      %v1656 = vadd.f32 %v1655, %v1649
      %v1657 = vrot.slane %v1656, 4
      %v1658 = vadd.f32 %v1656, %v1657
      %v1659 = vrot.slane %v1658, 2
      %v1660 = vadd.f32 %v1658, %v1659
      %v1661 = vrot.slane %v1660, 1
      %v1662 = vadd.f32 %v1660, %v1661
      %v1663 = vadd.f32 %v1662, 0.0
      %v1664 = vld [vmem:[#allocation2] sm:$0xf]
      %v1665 = vld [vmem:[#allocation2 + $0x4] sm:$0x1]
      %v1666 = vld [vmem:[#allocation2 + $0x8] sm:$0xf]
      %v1667 = vld [vmem:[#allocation2 + $0xc] sm:$0x1]
      %v1668 = vld [vmem:[#allocation2 + $0x10] sm:$0xf]
      %v1669 = vld [vmem:[#allocation2 + $0x14] sm:$0x1]
      %v1670 = vld [vmem:[#allocation2 + $0x18] sm:$0xf]
      %v1671 = vld [vmem:[#allocation2 + $0x1c] sm:$0x1]
      %v1672 = vld [vmem:[#allocation2 + $0x20] sm:$0xf]
      %v1673 = vld [vmem:[#allocation2 + $0x24] sm:$0x1]
      %v1674 = vld [vmem:[#allocation2 + $0x28] sm:$0xf]
      %v1675 = vld [vmem:[#allocation2 + $0x2c] sm:$0x1]
      %v1676 = vld [vmem:[#allocation2 + $0x30] sm:$0xf]
      %v1677 = vld [vmem:[#allocation2 + $0x34] sm:$0x1]
      %v1678 = vld [vmem:[#allocation2 + $0x38] sm:$0xf]
      %v1679 = vld [vmem:[#allocation2 + $0x3c] sm:$0x1]
      %v1681 = vshrl.u32 %v1664, 16
      %v1683 = vrot.slane %v1681, 4
      %v1684 = vshll.u32 %v1664, 16
      %v1686 = vrot.slane %v1684, 5
      %v1687 = vor.u32 %v1683, %v1686
      %v1688 = vrot.slane %v1687, 4
      %v1690 = vshll.u32 %v1665, 16
      %v1692 = vrot.slane %v1690, 5
      %v1693 = vsel %vm322, %v1688, %v1692
      %v1695 = vshrl.u32 %v1666, 16
      %v1697 = vrot.slane %v1695, 4
      %v1698 = vshll.u32 %v1666, 16
      %v1700 = vrot.slane %v1698, 5
      %v1701 = vor.u32 %v1697, %v1700
      %v1702 = vrot.slane %v1701, 4
      %v1704 = vshll.u32 %v1667, 16
      %v1706 = vrot.slane %v1704, 5
      %v1707 = vsel %vm322, %v1702, %v1706
      %v1709 = vshrl.u32 %v1668, 16
      %v1711 = vrot.slane %v1709, 4
      %v1712 = vshll.u32 %v1668, 16
      %v1714 = vrot.slane %v1712, 5
      %v1715 = vor.u32 %v1711, %v1714
      %v1716 = vrot.slane %v1715, 4
      %v1718 = vshll.u32 %v1669, 16
      %v1720 = vrot.slane %v1718, 5
      %v1721 = vsel %vm322, %v1716, %v1720
      %v1723 = vshrl.u32 %v1670, 16
      %v1725 = vrot.slane %v1723, 4
      %v1726 = vshll.u32 %v1670, 16
      %v1728 = vrot.slane %v1726, 5
      %v1729 = vor.u32 %v1725, %v1728
      %v1730 = vrot.slane %v1729, 4
      %v1732 = vshll.u32 %v1671, 16
      %v1734 = vrot.slane %v1732, 5
      %v1735 = vsel %vm322, %v1730, %v1734
      %v1737 = vshrl.u32 %v1672, 16
      %v1739 = vrot.slane %v1737, 4
      %v1740 = vshll.u32 %v1672, 16
      %v1742 = vrot.slane %v1740, 5
      %v1743 = vor.u32 %v1739, %v1742
      %v1744 = vrot.slane %v1743, 4
      %v1746 = vshll.u32 %v1673, 16
      %v1748 = vrot.slane %v1746, 5
      %v1749 = vsel %vm322, %v1744, %v1748
      %v1751 = vshrl.u32 %v1674, 16
      %v1753 = vrot.slane %v1751, 4
      %v1754 = vshll.u32 %v1674, 16
      %v1756 = vrot.slane %v1754, 5
      %v1757 = vor.u32 %v1753, %v1756
      %v1758 = vrot.slane %v1757, 4
      %v1760 = vshll.u32 %v1675, 16
      %v1762 = vrot.slane %v1760, 5
      %v1763 = vsel %vm322, %v1758, %v1762
      %v1765 = vshrl.u32 %v1676, 16
      %v1767 = vrot.slane %v1765, 4
      %v1768 = vshll.u32 %v1676, 16
      %v1770 = vrot.slane %v1768, 5
      %v1771 = vor.u32 %v1767, %v1770
      %v1772 = vrot.slane %v1771, 4
      %v1774 = vshll.u32 %v1677, 16
      %v1776 = vrot.slane %v1774, 5
      %v1777 = vsel %vm322, %v1772, %v1776
      %v1779 = vshrl.u32 %v1678, 16
      %v1781 = vrot.slane %v1779, 4
      %v1782 = vshll.u32 %v1678, 16
      %v1784 = vrot.slane %v1782, 5
      %v1785 = vor.u32 %v1781, %v1784
      %v1786 = vrot.slane %v1785, 4
      %v1788 = vshll.u32 %v1679, 16
      %v1790 = vrot.slane %v1788, 5
      %v1791 = vsel %vm322, %v1786, %v1790
      %s1792 = scalar_lea.vmem %s2, 256
      %v1793 = vld [vmem:[%s1792] sm:$0xf]
      %v1794 = vld [vmem:[%s1792 + $0x4] sm:$0xf]
      %v1795 = vld [vmem:[%s1792 + $0x8] sm:$0xf]
      %v1796 = vld [vmem:[%s1792 + $0xc] sm:$0xf]
      %v1797 = vld [vmem:[%s1792 + $0x10] sm:$0xf]
      %v1798 = vld [vmem:[%s1792 + $0x14] sm:$0xf]
      %v1799 = vld [vmem:[%s1792 + $0x18] sm:$0xf]
      %v1800 = vld [vmem:[%s1792 + $0x1c] sm:$0xf]
      %v1801 = vld [vmem:[%s1792 + $0x20] sm:$0xf]
      %v1802 = vld [vmem:[%s1792 + $0x24] sm:$0xf]
      %v1803 = vld [vmem:[%s1792 + $0x28] sm:$0xf]
      %v1804 = vld [vmem:[%s1792 + $0x2c] sm:$0xf]
      %v1805 = vld [vmem:[%s1792 + $0x30] sm:$0xf]
      %v1806 = vld [vmem:[%s1792 + $0x34] sm:$0xf]
      %v1807 = vld [vmem:[%s1792 + $0x38] sm:$0xf]
      %v1808 = vld [vmem:[%s1792 + $0x3c] sm:$0xf]
      %v1809 = vld [vmem:[#allocation2] sm:$0xe]
      %v1810 = vld [vmem:[#allocation2 + $0x8] sm:$0xe]
      %v1811 = vld [vmem:[#allocation2 + $0x10] sm:$0xe]
      %v1812 = vld [vmem:[#allocation2 + $0x18] sm:$0xe]
      %v1813 = vld [vmem:[#allocation2 + $0x20] sm:$0xe]
      %v1814 = vld [vmem:[#allocation2 + $0x28] sm:$0xe]
      %v1815 = vld [vmem:[#allocation2 + $0x30] sm:$0xe]
      %v1816 = vld [vmem:[#allocation2 + $0x38] sm:$0xe]
      %vm1833 = vcmask 1042432
      %vm1834 = vcmask 1046532
      %vm1835 = vmor %vm1833, %vm1834
      %v1836 = vrot.slane %v1809, 5
      %v1837 = vrot.slane %v1836, 4
      %v1838 = vrot.slane %v1665, 5
      %v1839 = vsel %vm1835, %v1837, %v1838
      %v1840 = vrot.slane %v1810, 5
      %v1841 = vrot.slane %v1840, 4
      %v1842 = vrot.slane %v1667, 5
      %v1843 = vsel %vm1835, %v1841, %v1842
      %v1844 = vrot.slane %v1811, 5
      %v1845 = vrot.slane %v1844, 4
      %v1846 = vrot.slane %v1669, 5
      %v1847 = vsel %vm1835, %v1845, %v1846
      %v1848 = vrot.slane %v1812, 5
      %v1849 = vrot.slane %v1848, 4
      %v1850 = vrot.slane %v1671, 5
      %v1851 = vsel %vm1835, %v1849, %v1850
      %v1852 = vrot.slane %v1813, 5
      %v1853 = vrot.slane %v1852, 4
      %v1854 = vrot.slane %v1673, 5
      %v1855 = vsel %vm1835, %v1853, %v1854
      %v1856 = vrot.slane %v1814, 5
      %v1857 = vrot.slane %v1856, 4
      %v1858 = vrot.slane %v1675, 5
      %v1859 = vsel %vm1835, %v1857, %v1858
      %v1860 = vrot.slane %v1815, 5
      %v1861 = vrot.slane %v1860, 4
      %v1862 = vrot.slane %v1677, 5
      %v1863 = vsel %vm1835, %v1861, %v1862
      %v1864 = vrot.slane %v1816, 5
      %v1865 = vrot.slane %v1864, 4
      %v1866 = vrot.slane %v1679, 5
      %v1867 = vsel %vm1835, %v1865, %v1866
      %s1868 = scalar_lea.vmem %s2, 320
      %v1869 = vld [vmem:[%s1868] sm:$0xf]
      %v1870 = vld [vmem:[%s1868 + $0x4] sm:$0xf]
      %v1871 = vld [vmem:[%s1868 + $0x8] sm:$0xf]
      %v1872 = vld [vmem:[%s1868 + $0xc] sm:$0xf]
      %v1873 = vld [vmem:[%s1868 + $0x10] sm:$0xf]
      %v1874 = vld [vmem:[%s1868 + $0x14] sm:$0xf]
      %v1875 = vld [vmem:[%s1868 + $0x18] sm:$0xf]
      %v1876 = vld [vmem:[%s1868 + $0x1c] sm:$0xf]
      %v1877 = vld [vmem:[%s1868 + $0x20] sm:$0xf]
      %v1878 = vld [vmem:[%s1868 + $0x24] sm:$0xf]
      %v1879 = vld [vmem:[%s1868 + $0x28] sm:$0xf]
      %v1880 = vld [vmem:[%s1868 + $0x2c] sm:$0xf]
      %v1881 = vld [vmem:[%s1868 + $0x30] sm:$0xf]
      %v1882 = vld [vmem:[%s1868 + $0x34] sm:$0xf]
      %v1883 = vld [vmem:[%s1868 + $0x38] sm:$0xf]
      %v1884 = vld [vmem:[%s1868 + $0x3c] sm:$0xf]
      %v1885 = vunpack.c.l.b16 %v1839
      %v1886 = vunpack.c.l.b16 %v1843
      %v1887 = vunpack.c.l.b16 %v1847
      %v1888 = vunpack.c.l.b16 %v1851
      %v1889 = vunpack.c.l.b16 %v1855
      %v1890 = vunpack.c.l.b16 %v1859
      %v1891 = vunpack.c.l.b16 %v1863
      %v1892 = vunpack.c.l.b16 %v1867
      %v1893 = vpack.c.b16 %v1886, %v1885
      %v1894 = vpack.c.b16 %v1888, %v1887
      %v1895 = vpack.c.b16 %v1890, %v1889
      %v1896 = vpack.c.b16 %v1892, %v1891
      %v1917 = vunpack.c.l.b16 %v1869
      %v1918 = vunpack.c.l.b16 %v1870
      %v1919 = vunpack.c.l.b16 %v1871
      %v1920 = vunpack.c.l.b16 %v1872
      %v1921 = vunpack.c.l.b16 %v1873
      %v1922 = vunpack.c.l.b16 %v1874
      %v1923 = vunpack.c.l.b16 %v1875
      %v1924 = vunpack.c.l.b16 %v1876
      %v1925 = vunpack.c.l.b16 %v1877
      %v1926 = vunpack.c.l.b16 %v1878
      %v1927 = vunpack.c.l.b16 %v1879
      %v1928 = vunpack.c.l.b16 %v1880
      %v1929 = vunpack.c.l.b16 %v1881
      %v1930 = vunpack.c.l.b16 %v1882
      %v1931 = vunpack.c.l.b16 %v1883
      %v1932 = vunpack.c.l.b16 %v1884
      %v1933 = vpack.c.b16 %v1918, %v1917
      %v1934 = vpack.c.b16 %v1920, %v1919
      %v1935 = vpack.c.b16 %v1922, %v1921
      %v1936 = vpack.c.b16 %v1924, %v1923
      %v1937 = vpack.c.b16 %v1926, %v1925
      %v1938 = vpack.c.b16 %v1928, %v1927
      %v1939 = vpack.c.b16 %v1930, %v1929
      %v1940 = vpack.c.b16 %v1932, %v1931
      %1949 = vmatpush.bf16.msra.mxu0 %v1940
      %1950 = vmatpush.bf16.msra.mxu0 %v1939
      %1951 = vmatpush.bf16.msra.mxu0 %v1938
      %1952 = vmatpush.bf16.msra.mxu0 %v1937
      %1953 = vmatpush.bf16.msra.mxu0 %v1936
      %1954 = vmatpush.bf16.msra.mxu0 %v1935
      %1955 = vmatpush.bf16.msra.mxu0 %v1934
      %1956 = vmatpush.bf16.msra.mxu0 %v1933
      %1957 = vmatmul.bf16.gmra.mxu0 %v1893
      %v1958 = vpop.f32.mrf.mxu0
      %v1959 = vadd.f32 0.0, %v1958
      %v1960 = vpop.f32.mrf.mxu0
      %v1961 = vadd.f32 0.0, %v1960
      %1962 = vmatmul.bf16.gmra.mxu0 %v1894
      %v1963 = vpop.f32.mrf.mxu0
      %v1964 = vadd.f32 0.0, %v1963
      %v1965 = vpop.f32.mrf.mxu0
      %v1966 = vadd.f32 0.0, %v1965
      %1967 = vmatmul.bf16.gmra.mxu0 %v1895
      %v1968 = vpop.f32.mrf.mxu0
      %v1969 = vadd.f32 0.0, %v1968
      %v1970 = vpop.f32.mrf.mxu0
      %v1971 = vadd.f32 0.0, %v1970
      %1972 = vmatmul.bf16.gmra.mxu0 %v1896
      %v1973 = vpop.f32.mrf.mxu0
      %v1974 = vadd.f32 0.0, %v1973
      %v1975 = vpop.f32.mrf.mxu0
      %v1976 = vadd.f32 0.0, %v1975
      %1977 = vdwg.mxu0
      %v1978 = vunpack.c.l.b16 %v1693
      %v1979 = vunpack.c.l.b16 %v1707
      %v1980 = vunpack.c.l.b16 %v1721
      %v1981 = vunpack.c.l.b16 %v1735
      %v1982 = vunpack.c.l.b16 %v1749
      %v1983 = vunpack.c.l.b16 %v1763
      %v1984 = vunpack.c.l.b16 %v1777
      %v1985 = vunpack.c.l.b16 %v1791
      %v1986 = vpack.c.b16 %v1979, %v1978
      %v1987 = vpack.c.b16 %v1981, %v1980
      %v1988 = vpack.c.b16 %v1983, %v1982
      %v1989 = vpack.c.b16 %v1985, %v1984
      %v2010 = vunpack.c.l.b16 %v1793
      %v2011 = vunpack.c.l.b16 %v1794
      %v2012 = vunpack.c.l.b16 %v1795
      %v2013 = vunpack.c.l.b16 %v1796
      %v2014 = vunpack.c.l.b16 %v1797
      %v2015 = vunpack.c.l.b16 %v1798
      %v2016 = vunpack.c.l.b16 %v1799
      %v2017 = vunpack.c.l.b16 %v1800
      %v2018 = vunpack.c.l.b16 %v1801
      %v2019 = vunpack.c.l.b16 %v1802
      %v2020 = vunpack.c.l.b16 %v1803
      %v2021 = vunpack.c.l.b16 %v1804
      %v2022 = vunpack.c.l.b16 %v1805
      %v2023 = vunpack.c.l.b16 %v1806
      %v2024 = vunpack.c.l.b16 %v1807
      %v2025 = vunpack.c.l.b16 %v1808
      %v2026 = vpack.c.b16 %v2011, %v2010
      %v2027 = vpack.c.b16 %v2013, %v2012
      %v2028 = vpack.c.b16 %v2015, %v2014
      %v2029 = vpack.c.b16 %v2017, %v2016
      %v2030 = vpack.c.b16 %v2019, %v2018
      %v2031 = vpack.c.b16 %v2021, %v2020
      %v2032 = vpack.c.b16 %v2023, %v2022
      %v2033 = vpack.c.b16 %v2025, %v2024
      %2042 = vmatpush.bf16.msra.mxu0 %v2033
      %2043 = vmatpush.bf16.msra.mxu0 %v2032
      %2044 = vmatpush.bf16.msra.mxu0 %v2031
      %2045 = vmatpush.bf16.msra.mxu0 %v2030
      %2046 = vmatpush.bf16.msra.mxu0 %v2029
      %2047 = vmatpush.bf16.msra.mxu0 %v2028
      %2048 = vmatpush.bf16.msra.mxu0 %v2027
      %2049 = vmatpush.bf16.msra.mxu0 %v2026
      %2050 = vmatmul.bf16.gmra.mxu0 %v1986
      %v2051 = vpop.f32.mrf.mxu0
      %v2052 = vadd.f32 %v1959, %v2051
      %v2053 = vpop.f32.mrf.mxu0
      %v2054 = vadd.f32 %v1961, %v2053
      %2055 = vmatmul.bf16.gmra.mxu0 %v1987
      %v2056 = vpop.f32.mrf.mxu0
      %v2057 = vadd.f32 %v1964, %v2056
      %v2058 = vpop.f32.mrf.mxu0
      %v2059 = vadd.f32 %v1966, %v2058
      %2060 = vmatmul.bf16.gmra.mxu0 %v1988
      %v2061 = vpop.f32.mrf.mxu0
      %v2062 = vadd.f32 %v1969, %v2061
      %v2063 = vpop.f32.mrf.mxu0
      %v2064 = vadd.f32 %v1971, %v2063
      %2065 = vmatmul.bf16.gmra.mxu0 %v1989
      %v2066 = vpop.f32.mrf.mxu0
      %v2067 = vadd.f32 %v1974, %v2066
      %v2068 = vpop.f32.mrf.mxu0
      %v2069 = vadd.f32 %v1976, %v2068
      %2070 = vdwg.mxu0
      %v2071 = vld [vmem:[%s822] sm:$0xf]
      %v2072 = vld [vmem:[%s822 + $0x4] sm:$0x1]
      %v2073 = vld [vmem:[%s822 + $0x8] sm:$0xf]
      %v2074 = vld [vmem:[%s822 + $0xc] sm:$0x1]
      %v2075 = vld [vmem:[%s822 + $0x10] sm:$0xf]
      %v2076 = vld [vmem:[%s822 + $0x14] sm:$0x1]
      %v2077 = vld [vmem:[%s822 + $0x18] sm:$0xf]
      %v2078 = vld [vmem:[%s822 + $0x1c] sm:$0x1]
      %v2079 = vld [vmem:[%s822 + $0x20] sm:$0xf]
      %v2080 = vld [vmem:[%s822 + $0x24] sm:$0x1]
      %v2081 = vld [vmem:[%s822 + $0x28] sm:$0xf]
      %v2082 = vld [vmem:[%s822 + $0x2c] sm:$0x1]
      %v2083 = vld [vmem:[%s822 + $0x30] sm:$0xf]
      %v2084 = vld [vmem:[%s822 + $0x34] sm:$0x1]
      %v2085 = vld [vmem:[%s822 + $0x38] sm:$0xf]
      %v2086 = vld [vmem:[%s822 + $0x3c] sm:$0x1]
      %v2088 = vshrl.u32 %v2071, 16
      %v2090 = vrot.slane %v2088, 4
      %v2091 = vshll.u32 %v2071, 16
      %v2093 = vrot.slane %v2091, 5
      %v2094 = vor.u32 %v2090, %v2093
      %v2095 = vrot.slane %v2094, 4
      %v2097 = vshll.u32 %v2072, 16
      %v2099 = vrot.slane %v2097, 5
      %v2100 = vsel %vm322, %v2095, %v2099
      %v2102 = vshrl.u32 %v2073, 16
      %v2104 = vrot.slane %v2102, 4
      %v2105 = vshll.u32 %v2073, 16
      %v2107 = vrot.slane %v2105, 5
      %v2108 = vor.u32 %v2104, %v2107
      %v2109 = vrot.slane %v2108, 4
      %v2111 = vshll.u32 %v2074, 16
      %v2113 = vrot.slane %v2111, 5
      %v2114 = vsel %vm322, %v2109, %v2113
      %v2116 = vshrl.u32 %v2075, 16
      %v2118 = vrot.slane %v2116, 4
      %v2119 = vshll.u32 %v2075, 16
      %v2121 = vrot.slane %v2119, 5
      %v2122 = vor.u32 %v2118, %v2121
      %v2123 = vrot.slane %v2122, 4
      %v2125 = vshll.u32 %v2076, 16
      %v2127 = vrot.slane %v2125, 5
      %v2128 = vsel %vm322, %v2123, %v2127
      %v2130 = vshrl.u32 %v2077, 16
      %v2132 = vrot.slane %v2130, 4
      %v2133 = vshll.u32 %v2077, 16
      %v2135 = vrot.slane %v2133, 5
      %v2136 = vor.u32 %v2132, %v2135
      %v2137 = vrot.slane %v2136, 4
      %v2139 = vshll.u32 %v2078, 16
      %v2141 = vrot.slane %v2139, 5
      %v2142 = vsel %vm322, %v2137, %v2141
      %v2144 = vshrl.u32 %v2079, 16
      %v2146 = vrot.slane %v2144, 4
      %v2147 = vshll.u32 %v2079, 16
      %v2149 = vrot.slane %v2147, 5
      %v2150 = vor.u32 %v2146, %v2149
      %v2151 = vrot.slane %v2150, 4
      %v2153 = vshll.u32 %v2080, 16
      %v2155 = vrot.slane %v2153, 5
      %v2156 = vsel %vm322, %v2151, %v2155
      %v2158 = vshrl.u32 %v2081, 16
      %v2160 = vrot.slane %v2158, 4
      %v2161 = vshll.u32 %v2081, 16
      %v2163 = vrot.slane %v2161, 5
      %v2164 = vor.u32 %v2160, %v2163
      %v2165 = vrot.slane %v2164, 4
      %v2167 = vshll.u32 %v2082, 16
      %v2169 = vrot.slane %v2167, 5
      %v2170 = vsel %vm322, %v2165, %v2169
      %v2172 = vshrl.u32 %v2083, 16
      %v2174 = vrot.slane %v2172, 4
      %v2175 = vshll.u32 %v2083, 16
      %v2177 = vrot.slane %v2175, 5
      %v2178 = vor.u32 %v2174, %v2177
      %v2179 = vrot.slane %v2178, 4
      %v2181 = vshll.u32 %v2084, 16
      %v2183 = vrot.slane %v2181, 5
      %v2184 = vsel %vm322, %v2179, %v2183
      %v2186 = vshrl.u32 %v2085, 16
      %v2188 = vrot.slane %v2186, 4
      %v2189 = vshll.u32 %v2085, 16
      %v2191 = vrot.slane %v2189, 5
      %v2192 = vor.u32 %v2188, %v2191
      %v2193 = vrot.slane %v2192, 4
      %v2195 = vshll.u32 %v2086, 16
      %v2197 = vrot.slane %v2195, 5
      %v2198 = vsel %vm322, %v2193, %v2197
      %s2199 = scalar_lea.vmem %s2, 384
      %v2200 = vld [vmem:[%s2199] sm:$0xf]
      %v2201 = vld [vmem:[%s2199 + $0x4] sm:$0xf]
      %v2202 = vld [vmem:[%s2199 + $0x8] sm:$0xf]
      %v2203 = vld [vmem:[%s2199 + $0xc] sm:$0xf]
      %v2204 = vld [vmem:[%s2199 + $0x10] sm:$0xf]
      %v2205 = vld [vmem:[%s2199 + $0x14] sm:$0xf]
      %v2206 = vld [vmem:[%s2199 + $0x18] sm:$0xf]
      %v2207 = vld [vmem:[%s2199 + $0x1c] sm:$0xf]
      %v2208 = vld [vmem:[%s2199 + $0x20] sm:$0xf]
      %v2209 = vld [vmem:[%s2199 + $0x24] sm:$0xf]
      %v2210 = vld [vmem:[%s2199 + $0x28] sm:$0xf]
      %v2211 = vld [vmem:[%s2199 + $0x2c] sm:$0xf]
      %v2212 = vld [vmem:[%s2199 + $0x30] sm:$0xf]
      %v2213 = vld [vmem:[%s2199 + $0x34] sm:$0xf]
      %v2214 = vld [vmem:[%s2199 + $0x38] sm:$0xf]
      %v2215 = vld [vmem:[%s2199 + $0x3c] sm:$0xf]
      %v2216 = vunpack.c.l.b16 %v2100
      %v2217 = vunpack.c.l.b16 %v2114
      %v2218 = vunpack.c.l.b16 %v2128
      %v2219 = vunpack.c.l.b16 %v2142
      %v2220 = vunpack.c.l.b16 %v2156
      %v2221 = vunpack.c.l.b16 %v2170
      %v2222 = vunpack.c.l.b16 %v2184
      %v2223 = vunpack.c.l.b16 %v2198
      %v2224 = vpack.c.b16 %v2217, %v2216
      %v2225 = vpack.c.b16 %v2219, %v2218
      %v2226 = vpack.c.b16 %v2221, %v2220
      %v2227 = vpack.c.b16 %v2223, %v2222
      %v2248 = vunpack.c.l.b16 %v2200
      %v2249 = vunpack.c.l.b16 %v2201
      %v2250 = vunpack.c.l.b16 %v2202
      %v2251 = vunpack.c.l.b16 %v2203
      %v2252 = vunpack.c.l.b16 %v2204
      %v2253 = vunpack.c.l.b16 %v2205
      %v2254 = vunpack.c.l.b16 %v2206
      %v2255 = vunpack.c.l.b16 %v2207
      %v2256 = vunpack.c.l.b16 %v2208
      %v2257 = vunpack.c.l.b16 %v2209
      %v2258 = vunpack.c.l.b16 %v2210
      %v2259 = vunpack.c.l.b16 %v2211
      %v2260 = vunpack.c.l.b16 %v2212
      %v2261 = vunpack.c.l.b16 %v2213
      %v2262 = vunpack.c.l.b16 %v2214
      %v2263 = vunpack.c.l.b16 %v2215
      %v2264 = vpack.c.b16 %v2249, %v2248
      %v2265 = vpack.c.b16 %v2251, %v2250
      %v2266 = vpack.c.b16 %v2253, %v2252
      %v2267 = vpack.c.b16 %v2255, %v2254
      %v2268 = vpack.c.b16 %v2257, %v2256
      %v2269 = vpack.c.b16 %v2259, %v2258
      %v2270 = vpack.c.b16 %v2261, %v2260
      %v2271 = vpack.c.b16 %v2263, %v2262
      %2280 = vmatpush.bf16.msra.mxu0 %v2271
      %2281 = vmatpush.bf16.msra.mxu0 %v2270
      %2282 = vmatpush.bf16.msra.mxu0 %v2269
      %2283 = vmatpush.bf16.msra.mxu0 %v2268
      %2284 = vmatpush.bf16.msra.mxu0 %v2267
      %2285 = vmatpush.bf16.msra.mxu0 %v2266
      %2286 = vmatpush.bf16.msra.mxu0 %v2265
      %2287 = vmatpush.bf16.msra.mxu0 %v2264
      %2288 = vmatmul.bf16.gmra.mxu0 %v2224
      %v2289 = vpop.f32.mrf.mxu0
      %v2290 = vadd.f32 0.0, %v2289
      %v2291 = vpop.f32.mrf.mxu0
      %v2292 = vadd.f32 0.0, %v2291
      %2293 = vmatmul.bf16.gmra.mxu0 %v2225
      %v2294 = vpop.f32.mrf.mxu0
      %v2295 = vadd.f32 0.0, %v2294
      %v2296 = vpop.f32.mrf.mxu0
      %v2297 = vadd.f32 0.0, %v2296
      %2298 = vmatmul.bf16.gmra.mxu0 %v2226
      %v2299 = vpop.f32.mrf.mxu0
      %v2300 = vadd.f32 0.0, %v2299
      %v2301 = vpop.f32.mrf.mxu0
      %v2302 = vadd.f32 0.0, %v2301
      %2303 = vmatmul.bf16.gmra.mxu0 %v2227
      %v2304 = vpop.f32.mrf.mxu0
      %v2305 = vadd.f32 0.0, %v2304
      %v2306 = vpop.f32.mrf.mxu0
      %v2307 = vadd.f32 0.0, %v2306
      %2308 = vdwg.mxu0
      %v2309 = vadd.f32 %v2052, %v2290
      %v2310 = vadd.f32 %v2054, %v2292
      %v2311 = vadd.f32 %v2057, %v2295
      %v2312 = vadd.f32 %v2059, %v2297
      %v2313 = vadd.f32 %v2062, %v2300
      %v2314 = vadd.f32 %v2064, %v2302
      %v2315 = vadd.f32 %v2067, %v2305
      %v2316 = vadd.f32 %v2069, %v2307
      %v2317 = vld [vmem:[%s822] sm:$0xe]
      %v2318 = vld [vmem:[%s822 + $0x8] sm:$0xe]
      %v2319 = vld [vmem:[%s822 + $0x10] sm:$0xe]
      %v2320 = vld [vmem:[%s822 + $0x18] sm:$0xe]
      %v2321 = vld [vmem:[%s822 + $0x20] sm:$0xe]
      %v2322 = vld [vmem:[%s822 + $0x28] sm:$0xe]
      %v2323 = vld [vmem:[%s822 + $0x30] sm:$0xe]
      %v2324 = vld [vmem:[%s822 + $0x38] sm:$0xe]
      %v2341 = vrot.slane %v2317, 5
      %v2342 = vrot.slane %v2341, 4
      %v2343 = vrot.slane %v2072, 5
      %v2344 = vsel %vm1835, %v2342, %v2343
      %v2345 = vrot.slane %v2318, 5
      %v2346 = vrot.slane %v2345, 4
      %v2347 = vrot.slane %v2074, 5
      %v2348 = vsel %vm1835, %v2346, %v2347
      %v2349 = vrot.slane %v2319, 5
      %v2350 = vrot.slane %v2349, 4
      %v2351 = vrot.slane %v2076, 5
      %v2352 = vsel %vm1835, %v2350, %v2351
      %v2353 = vrot.slane %v2320, 5
      %v2354 = vrot.slane %v2353, 4
      %v2355 = vrot.slane %v2078, 5
      %v2356 = vsel %vm1835, %v2354, %v2355
      %v2357 = vrot.slane %v2321, 5
      %v2358 = vrot.slane %v2357, 4
      %v2359 = vrot.slane %v2080, 5
      %v2360 = vsel %vm1835, %v2358, %v2359
      %v2361 = vrot.slane %v2322, 5
      %v2362 = vrot.slane %v2361, 4
      %v2363 = vrot.slane %v2082, 5
      %v2364 = vsel %vm1835, %v2362, %v2363
      %v2365 = vrot.slane %v2323, 5
      %v2366 = vrot.slane %v2365, 4
      %v2367 = vrot.slane %v2084, 5
      %v2368 = vsel %vm1835, %v2366, %v2367
      %v2369 = vrot.slane %v2324, 5
      %v2370 = vrot.slane %v2369, 4
      %v2371 = vrot.slane %v2086, 5
      %v2372 = vsel %vm1835, %v2370, %v2371
      %s2373 = scalar_lea.vmem %s2, 448
      %v2374 = vld [vmem:[%s2373] sm:$0xf]
      %v2375 = vld [vmem:[%s2373 + $0x4] sm:$0xf]
      %v2376 = vld [vmem:[%s2373 + $0x8] sm:$0xf]
      %v2377 = vld [vmem:[%s2373 + $0xc] sm:$0xf]
      %v2378 = vld [vmem:[%s2373 + $0x10] sm:$0xf]
      %v2379 = vld [vmem:[%s2373 + $0x14] sm:$0xf]
      %v2380 = vld [vmem:[%s2373 + $0x18] sm:$0xf]
      %v2381 = vld [vmem:[%s2373 + $0x1c] sm:$0xf]
      %v2382 = vld [vmem:[%s2373 + $0x20] sm:$0xf]
      %v2383 = vld [vmem:[%s2373 + $0x24] sm:$0xf]
      %v2384 = vld [vmem:[%s2373 + $0x28] sm:$0xf]
      %v2385 = vld [vmem:[%s2373 + $0x2c] sm:$0xf]
      %v2386 = vld [vmem:[%s2373 + $0x30] sm:$0xf]
      %v2387 = vld [vmem:[%s2373 + $0x34] sm:$0xf]
      %v2388 = vld [vmem:[%s2373 + $0x38] sm:$0xf]
      %v2389 = vld [vmem:[%s2373 + $0x3c] sm:$0xf]
      %v2390 = vunpack.c.l.b16 %v2344
      %v2391 = vunpack.c.l.b16 %v2348
      %v2392 = vunpack.c.l.b16 %v2352
      %v2393 = vunpack.c.l.b16 %v2356
      %v2394 = vunpack.c.l.b16 %v2360
      %v2395 = vunpack.c.l.b16 %v2364
      %v2396 = vunpack.c.l.b16 %v2368
      %v2397 = vunpack.c.l.b16 %v2372
      %v2398 = vpack.c.b16 %v2391, %v2390
      %v2399 = vpack.c.b16 %v2393, %v2392
      %v2400 = vpack.c.b16 %v2395, %v2394
      %v2401 = vpack.c.b16 %v2397, %v2396
      %v2422 = vunpack.c.l.b16 %v2374
      %v2423 = vunpack.c.l.b16 %v2375
      %v2424 = vunpack.c.l.b16 %v2376
      %v2425 = vunpack.c.l.b16 %v2377
      %v2426 = vunpack.c.l.b16 %v2378
      %v2427 = vunpack.c.l.b16 %v2379
      %v2428 = vunpack.c.l.b16 %v2380
      %v2429 = vunpack.c.l.b16 %v2381
      %v2430 = vunpack.c.l.b16 %v2382
      %v2431 = vunpack.c.l.b16 %v2383
      %v2432 = vunpack.c.l.b16 %v2384
      %v2433 = vunpack.c.l.b16 %v2385
      %v2434 = vunpack.c.l.b16 %v2386
      %v2435 = vunpack.c.l.b16 %v2387
      %v2436 = vunpack.c.l.b16 %v2388
      %v2437 = vunpack.c.l.b16 %v2389
      %v2438 = vpack.c.b16 %v2423, %v2422
      %v2439 = vpack.c.b16 %v2425, %v2424
      %v2440 = vpack.c.b16 %v2427, %v2426
      %v2441 = vpack.c.b16 %v2429, %v2428
      %v2442 = vpack.c.b16 %v2431, %v2430
      %v2443 = vpack.c.b16 %v2433, %v2432
      %v2444 = vpack.c.b16 %v2435, %v2434
      %v2445 = vpack.c.b16 %v2437, %v2436
      %2454 = vmatpush.bf16.msra.mxu0 %v2445
      %2455 = vmatpush.bf16.msra.mxu0 %v2444
      %2456 = vmatpush.bf16.msra.mxu0 %v2443
      %2457 = vmatpush.bf16.msra.mxu0 %v2442
      %2458 = vmatpush.bf16.msra.mxu0 %v2441
      %2459 = vmatpush.bf16.msra.mxu0 %v2440
      %2460 = vmatpush.bf16.msra.mxu0 %v2439
      %2461 = vmatpush.bf16.msra.mxu0 %v2438
      %2462 = vmatmul.bf16.gmra.mxu0 %v2398
      %v2463 = vpop.f32.mrf.mxu0
      %v2464 = vadd.f32 0.0, %v2463
      %v2465 = vpop.f32.mrf.mxu0
      %v2466 = vadd.f32 0.0, %v2465
      %2467 = vmatmul.bf16.gmra.mxu0 %v2399
      %v2468 = vpop.f32.mrf.mxu0
      %v2469 = vadd.f32 0.0, %v2468
      %v2470 = vpop.f32.mrf.mxu0
      %v2471 = vadd.f32 0.0, %v2470
      %2472 = vmatmul.bf16.gmra.mxu0 %v2400
      %v2473 = vpop.f32.mrf.mxu0
      %v2474 = vadd.f32 0.0, %v2473
      %v2475 = vpop.f32.mrf.mxu0
      %v2476 = vadd.f32 0.0, %v2475
      %2477 = vmatmul.bf16.gmra.mxu0 %v2401
      %v2478 = vpop.f32.mrf.mxu0
      %v2479 = vadd.f32 0.0, %v2478
      %v2480 = vpop.f32.mrf.mxu0
      %v2481 = vadd.f32 0.0, %v2480
      %2482 = vdwg.mxu0
      %v2483 = vadd.f32 %v2309, %v2464
      %v2484 = vadd.f32 %v2310, %v2466
      %v2485 = vadd.f32 %v2311, %v2469
      %v2486 = vadd.f32 %v2312, %v2471
      %v2487 = vadd.f32 %v2313, %v2474
      %v2488 = vadd.f32 %v2314, %v2476
      %v2489 = vadd.f32 %v2315, %v2479
      %v2490 = vadd.f32 %v2316, %v2481
      %v2491 = vpack.c.bf16 %v2483, %v2483
      %v2492 = vpack.c.bf16 %v2484, %v2484
      %v2493 = vpack.c.bf16 %v2485, %v2485
      %v2494 = vpack.c.bf16 %v2486, %v2486
      %v2495 = vpack.c.bf16 %v2487, %v2487
      %v2496 = vpack.c.bf16 %v2488, %v2488
      %v2497 = vpack.c.bf16 %v2489, %v2489
      %v2498 = vpack.c.bf16 %v2490, %v2490
      %s2499 = scalar_lea.vmem %s204, 32
      %2500 = vst [vmem:[%s2499] sm:$0xf] %v2491
      %2501 = vst [vmem:[%s2499 + $0x4] sm:$0xf] %v2492
      %2502 = vst [vmem:[%s2499 + $0x8] sm:$0xf] %v2493
      %2503 = vst [vmem:[%s2499 + $0xc] sm:$0xf] %v2494
      %2504 = vst [vmem:[%s2499 + $0x10] sm:$0xf] %v2495
      %2505 = vst [vmem:[%s2499 + $0x14] sm:$0xf] %v2496
      %2506 = vst [vmem:[%s2499 + $0x18] sm:$0xf] %v2497
      %2507 = vst [vmem:[%s2499 + $0x1c] sm:$0xf] %v2498
      %v2508 = vadd.f32 %v2483, %v2484
      %v2509 = vadd.f32 %v2508, %v2485
      %v2510 = vadd.f32 %v2509, %v2486
      %v2511 = vadd.f32 %v2510, %v2487
      %v2512 = vadd.f32 %v2511, %v2488
      %v2513 = vadd.f32 %v2512, %v2489
      %v2514 = vadd.f32 %v2513, %v2490
      %v2515 = vrot.slane %v2514, 4
      %v2516 = vadd.f32 %v2514, %v2515
      %v2517 = vrot.slane %v2516, 2
      %v2518 = vadd.f32 %v2516, %v2517
      %v2519 = vrot.slane %v2518, 1
      %v2520 = vadd.f32 %v2518, %v2519
      %v2521 = vadd.f32 %v1641, %v2520
      %v2522 = vmul.f32 %v2483, %v2483
      %v2523 = vmul.f32 %v2484, %v2484
      %v2524 = vmul.f32 %v2485, %v2485
      %v2525 = vmul.f32 %v2486, %v2486
      %v2526 = vmul.f32 %v2487, %v2487
      %v2527 = vmul.f32 %v2488, %v2488
      %v2528 = vmul.f32 %v2489, %v2489
      %v2529 = vmul.f32 %v2490, %v2490
      %v2530 = vadd.f32 %v2522, %v2523
      %v2531 = vadd.f32 %v2530, %v2524
      %v2532 = vadd.f32 %v2531, %v2525
      %v2533 = vadd.f32 %v2532, %v2526
      %v2534 = vadd.f32 %v2533, %v2527
      %v2535 = vadd.f32 %v2534, %v2528
      %v2536 = vadd.f32 %v2535, %v2529
      %v2537 = vrot.slane %v2536, 4
      %v2538 = vadd.f32 %v2536, %v2537
      %v2539 = vrot.slane %v2538, 2
      %v2540 = vadd.f32 %v2538, %v2539
      %v2541 = vrot.slane %v2540, 1
      %v2542 = vadd.f32 %v2540, %v2541
      %v2543 = vadd.f32 %v1663, %v2542
      %v2544 = vld [vmem:[%s822] sm:$0xf]
      %v2545 = vld [vmem:[%s822 + $0x8] sm:$0xf]
      %v2546 = vld [vmem:[%s822 + $0x10] sm:$0xf]
      %v2547 = vld [vmem:[%s822 + $0x18] sm:$0xf]
      %v2548 = vld [vmem:[%s822 + $0x20] sm:$0xf]
      %v2549 = vld [vmem:[%s822 + $0x28] sm:$0xf]
      %v2550 = vld [vmem:[%s822 + $0x30] sm:$0xf]
      %v2551 = vld [vmem:[%s822 + $0x38] sm:$0xf]
      %s2552 = scalar_lea.vmem %s2, 512
      %v2553 = vld [vmem:[%s2552] sm:$0xf]
      %v2554 = vld [vmem:[%s2552 + $0x4] sm:$0xf]
      %v2555 = vld [vmem:[%s2552 + $0x8] sm:$0xf]
      %v2556 = vld [vmem:[%s2552 + $0xc] sm:$0xf]
      %v2557 = vld [vmem:[%s2552 + $0x10] sm:$0xf]
      %v2558 = vld [vmem:[%s2552 + $0x14] sm:$0xf]
      %v2559 = vld [vmem:[%s2552 + $0x18] sm:$0xf]
      %v2560 = vld [vmem:[%s2552 + $0x1c] sm:$0xf]
      %v2561 = vld [vmem:[%s2552 + $0x20] sm:$0xf]
      %v2562 = vld [vmem:[%s2552 + $0x24] sm:$0xf]
      %v2563 = vld [vmem:[%s2552 + $0x28] sm:$0xf]
      %v2564 = vld [vmem:[%s2552 + $0x2c] sm:$0xf]
      %v2565 = vld [vmem:[%s2552 + $0x30] sm:$0xf]
      %v2566 = vld [vmem:[%s2552 + $0x34] sm:$0xf]
      %v2567 = vld [vmem:[%s2552 + $0x38] sm:$0xf]
      %v2568 = vld [vmem:[%s2552 + $0x3c] sm:$0xf]
      %v2569 = vld [vmem:[%s822 + $0x4] sm:$0x1]
      %v2570 = vld [vmem:[%s822 + $0xc] sm:$0x1]
      %v2571 = vld [vmem:[%s822 + $0x14] sm:$0x1]
      %v2572 = vld [vmem:[%s822 + $0x1c] sm:$0x1]
      %v2573 = vld [vmem:[%s822 + $0x24] sm:$0x1]
      %v2574 = vld [vmem:[%s822 + $0x2c] sm:$0x1]
      %v2575 = vld [vmem:[%s822 + $0x34] sm:$0x1]
      %v2576 = vld [vmem:[%s822 + $0x3c] sm:$0x1]
      %v2578 = vshrl.u32 %v2544, 16
      %v2580 = vrot.slane %v2578, 4
      %v2581 = vshll.u32 %v2544, 16
      %v2583 = vrot.slane %v2581, 5
      %v2584 = vor.u32 %v2580, %v2583
      %v2585 = vrot.slane %v2584, 4
      %v2587 = vshll.u32 %v2569, 16
      %v2589 = vrot.slane %v2587, 5
      %v2590 = vsel %vm322, %v2585, %v2589
      %v2592 = vshrl.u32 %v2545, 16
      %v2594 = vrot.slane %v2592, 4
      %v2595 = vshll.u32 %v2545, 16
      %v2597 = vrot.slane %v2595, 5
      %v2598 = vor.u32 %v2594, %v2597
      %v2599 = vrot.slane %v2598, 4
      %v2601 = vshll.u32 %v2570, 16
      %v2603 = vrot.slane %v2601, 5
      %v2604 = vsel %vm322, %v2599, %v2603
      %v2606 = vshrl.u32 %v2546, 16
      %v2608 = vrot.slane %v2606, 4
      %v2609 = vshll.u32 %v2546, 16
      %v2611 = vrot.slane %v2609, 5
      %v2612 = vor.u32 %v2608, %v2611
      %v2613 = vrot.slane %v2612, 4
      %v2615 = vshll.u32 %v2571, 16
      %v2617 = vrot.slane %v2615, 5
      %v2618 = vsel %vm322, %v2613, %v2617
      %v2620 = vshrl.u32 %v2547, 16
      %v2622 = vrot.slane %v2620, 4
      %v2623 = vshll.u32 %v2547, 16
      %v2625 = vrot.slane %v2623, 5
      %v2626 = vor.u32 %v2622, %v2625
      %v2627 = vrot.slane %v2626, 4
      %v2629 = vshll.u32 %v2572, 16
      %v2631 = vrot.slane %v2629, 5
      %v2632 = vsel %vm322, %v2627, %v2631
      %v2634 = vshrl.u32 %v2548, 16
      %v2636 = vrot.slane %v2634, 4
      %v2637 = vshll.u32 %v2548, 16
      %v2639 = vrot.slane %v2637, 5
      %v2640 = vor.u32 %v2636, %v2639
      %v2641 = vrot.slane %v2640, 4
      %v2643 = vshll.u32 %v2573, 16
      %v2645 = vrot.slane %v2643, 5
      %v2646 = vsel %vm322, %v2641, %v2645
      %v2648 = vshrl.u32 %v2549, 16
      %v2650 = vrot.slane %v2648, 4
      %v2651 = vshll.u32 %v2549, 16
      %v2653 = vrot.slane %v2651, 5
      %v2654 = vor.u32 %v2650, %v2653
      %v2655 = vrot.slane %v2654, 4
      %v2657 = vshll.u32 %v2574, 16
      %v2659 = vrot.slane %v2657, 5
      %v2660 = vsel %vm322, %v2655, %v2659
      %v2662 = vshrl.u32 %v2550, 16
      %v2664 = vrot.slane %v2662, 4
      %v2665 = vshll.u32 %v2550, 16
      %v2667 = vrot.slane %v2665, 5
      %v2668 = vor.u32 %v2664, %v2667
      %v2669 = vrot.slane %v2668, 4
      %v2671 = vshll.u32 %v2575, 16
      %v2673 = vrot.slane %v2671, 5
      %v2674 = vsel %vm322, %v2669, %v2673
      %v2676 = vshrl.u32 %v2551, 16
      %v2678 = vrot.slane %v2676, 4
      %v2679 = vshll.u32 %v2551, 16
      %v2681 = vrot.slane %v2679, 5
      %v2682 = vor.u32 %v2678, %v2681
      %v2683 = vrot.slane %v2682, 4
      %v2685 = vshll.u32 %v2576, 16
      %v2687 = vrot.slane %v2685, 5
      %v2688 = vsel %vm322, %v2683, %v2687
      %s2689 = scalar_lea.vmem %s2, 576
      %v2690 = vld [vmem:[%s2689] sm:$0xf]
      %v2691 = vld [vmem:[%s2689 + $0x4] sm:$0xf]
      %v2692 = vld [vmem:[%s2689 + $0x8] sm:$0xf]
      %v2693 = vld [vmem:[%s2689 + $0xc] sm:$0xf]
      %v2694 = vld [vmem:[%s2689 + $0x10] sm:$0xf]
      %v2695 = vld [vmem:[%s2689 + $0x14] sm:$0xf]
      %v2696 = vld [vmem:[%s2689 + $0x18] sm:$0xf]
      %v2697 = vld [vmem:[%s2689 + $0x1c] sm:$0xf]
      %v2698 = vld [vmem:[%s2689 + $0x20] sm:$0xf]
      %v2699 = vld [vmem:[%s2689 + $0x24] sm:$0xf]
      %v2700 = vld [vmem:[%s2689 + $0x28] sm:$0xf]
      %v2701 = vld [vmem:[%s2689 + $0x2c] sm:$0xf]
      %v2702 = vld [vmem:[%s2689 + $0x30] sm:$0xf]
      %v2703 = vld [vmem:[%s2689 + $0x34] sm:$0xf]
      %v2704 = vld [vmem:[%s2689 + $0x38] sm:$0xf]
      %v2705 = vld [vmem:[%s2689 + $0x3c] sm:$0xf]
      %v2706 = vunpack.c.l.b16 %v2590
      %v2707 = vunpack.c.l.b16 %v2604
      %v2708 = vunpack.c.l.b16 %v2618
      %v2709 = vunpack.c.l.b16 %v2632
      %v2710 = vunpack.c.l.b16 %v2646
      %v2711 = vunpack.c.l.b16 %v2660
      %v2712 = vunpack.c.l.b16 %v2674
      %v2713 = vunpack.c.l.b16 %v2688
      %v2714 = vpack.c.b16 %v2707, %v2706
      %v2715 = vpack.c.b16 %v2709, %v2708
      %v2716 = vpack.c.b16 %v2711, %v2710
      %v2717 = vpack.c.b16 %v2713, %v2712
      %v2738 = vunpack.c.l.b16 %v2690
      %v2739 = vunpack.c.l.b16 %v2691
      %v2740 = vunpack.c.l.b16 %v2692
      %v2741 = vunpack.c.l.b16 %v2693
      %v2742 = vunpack.c.l.b16 %v2694
      %v2743 = vunpack.c.l.b16 %v2695
      %v2744 = vunpack.c.l.b16 %v2696
      %v2745 = vunpack.c.l.b16 %v2697
      %v2746 = vunpack.c.l.b16 %v2698
      %v2747 = vunpack.c.l.b16 %v2699
      %v2748 = vunpack.c.l.b16 %v2700
      %v2749 = vunpack.c.l.b16 %v2701
      %v2750 = vunpack.c.l.b16 %v2702
      %v2751 = vunpack.c.l.b16 %v2703
      %v2752 = vunpack.c.l.b16 %v2704
      %v2753 = vunpack.c.l.b16 %v2705
      %v2754 = vpack.c.b16 %v2739, %v2738
      %v2755 = vpack.c.b16 %v2741, %v2740
      %v2756 = vpack.c.b16 %v2743, %v2742
      %v2757 = vpack.c.b16 %v2745, %v2744
      %v2758 = vpack.c.b16 %v2747, %v2746
      %v2759 = vpack.c.b16 %v2749, %v2748
      %v2760 = vpack.c.b16 %v2751, %v2750
      %v2761 = vpack.c.b16 %v2753, %v2752
      %2770 = vmatpush.bf16.msra.mxu0 %v2761
      %2771 = vmatpush.bf16.msra.mxu0 %v2760
      %2772 = vmatpush.bf16.msra.mxu0 %v2759
      %2773 = vmatpush.bf16.msra.mxu0 %v2758
      %2774 = vmatpush.bf16.msra.mxu0 %v2757
      %2775 = vmatpush.bf16.msra.mxu0 %v2756
      %2776 = vmatpush.bf16.msra.mxu0 %v2755
      %2777 = vmatpush.bf16.msra.mxu0 %v2754
      %2778 = vmatmul.bf16.gmra.mxu0 %v2714
      %v2779 = vpop.f32.mrf.mxu0
      %v2780 = vadd.f32 0.0, %v2779
      %v2781 = vpop.f32.mrf.mxu0
      %v2782 = vadd.f32 0.0, %v2781
      %2783 = vmatmul.bf16.gmra.mxu0 %v2715
      %v2784 = vpop.f32.mrf.mxu0
      %v2785 = vadd.f32 0.0, %v2784
      %v2786 = vpop.f32.mrf.mxu0
      %v2787 = vadd.f32 0.0, %v2786
      %2788 = vmatmul.bf16.gmra.mxu0 %v2716
      %v2789 = vpop.f32.mrf.mxu0
      %v2790 = vadd.f32 0.0, %v2789
      %v2791 = vpop.f32.mrf.mxu0
      %v2792 = vadd.f32 0.0, %v2791
      %2793 = vmatmul.bf16.gmra.mxu0 %v2717
      %v2794 = vpop.f32.mrf.mxu0
      %v2795 = vadd.f32 0.0, %v2794
      %v2796 = vpop.f32.mrf.mxu0
      %v2797 = vadd.f32 0.0, %v2796
      %2798 = vdwg.mxu0
      %v2807 = vunpack.c.l.b16 %v2544
      %v2808 = vunpack.c.l.b16 %v2545
      %v2809 = vunpack.c.l.b16 %v2546
      %v2810 = vunpack.c.l.b16 %v2547
      %v2811 = vunpack.c.l.b16 %v2548
      %v2812 = vunpack.c.l.b16 %v2549
      %v2813 = vunpack.c.l.b16 %v2550
      %v2814 = vunpack.c.l.b16 %v2551
      %v2815 = vpack.c.b16 %v2808, %v2807
      %v2816 = vpack.c.b16 %v2810, %v2809
      %v2817 = vpack.c.b16 %v2812, %v2811
      %v2818 = vpack.c.b16 %v2814, %v2813
      %v2839 = vunpack.c.l.b16 %v2553
      %v2840 = vunpack.c.l.b16 %v2554
      %v2841 = vunpack.c.l.b16 %v2555
      %v2842 = vunpack.c.l.b16 %v2556
      %v2843 = vunpack.c.l.b16 %v2557
      %v2844 = vunpack.c.l.b16 %v2558
      %v2845 = vunpack.c.l.b16 %v2559
      %v2846 = vunpack.c.l.b16 %v2560
      %v2847 = vunpack.c.l.b16 %v2561
      %v2848 = vunpack.c.l.b16 %v2562
      %v2849 = vunpack.c.l.b16 %v2563
      %v2850 = vunpack.c.l.b16 %v2564
      %v2851 = vunpack.c.l.b16 %v2565
      %v2852 = vunpack.c.l.b16 %v2566
      %v2853 = vunpack.c.l.b16 %v2567
      %v2854 = vunpack.c.l.b16 %v2568
      %v2855 = vpack.c.b16 %v2840, %v2839
      %v2856 = vpack.c.b16 %v2842, %v2841
      %v2857 = vpack.c.b16 %v2844, %v2843
      %v2858 = vpack.c.b16 %v2846, %v2845
      %v2859 = vpack.c.b16 %v2848, %v2847
      %v2860 = vpack.c.b16 %v2850, %v2849
      %v2861 = vpack.c.b16 %v2852, %v2851
      %v2862 = vpack.c.b16 %v2854, %v2853
      %2871 = vmatpush.bf16.msra.mxu0 %v2862
      %2872 = vmatpush.bf16.msra.mxu0 %v2861
      %2873 = vmatpush.bf16.msra.mxu0 %v2860
      %2874 = vmatpush.bf16.msra.mxu0 %v2859
      %2875 = vmatpush.bf16.msra.mxu0 %v2858
      %2876 = vmatpush.bf16.msra.mxu0 %v2857
      %2877 = vmatpush.bf16.msra.mxu0 %v2856
      %2878 = vmatpush.bf16.msra.mxu0 %v2855
      %2879 = vmatmul.bf16.gmra.mxu0 %v2815
      %v2880 = vpop.f32.mrf.mxu0
      %v2881 = vadd.f32 %v2780, %v2880
      %v2882 = vpop.f32.mrf.mxu0
      %v2883 = vadd.f32 %v2782, %v2882
      %2884 = vmatmul.bf16.gmra.mxu0 %v2816
      %v2885 = vpop.f32.mrf.mxu0
      %v2886 = vadd.f32 %v2785, %v2885
      %v2887 = vpop.f32.mrf.mxu0
      %v2888 = vadd.f32 %v2787, %v2887
      %2889 = vmatmul.bf16.gmra.mxu0 %v2817
      %v2890 = vpop.f32.mrf.mxu0
      %v2891 = vadd.f32 %v2790, %v2890
      %v2892 = vpop.f32.mrf.mxu0
      %v2893 = vadd.f32 %v2792, %v2892
      %2894 = vmatmul.bf16.gmra.mxu0 %v2818
      %v2895 = vpop.f32.mrf.mxu0
      %v2896 = vadd.f32 %v2795, %v2895
      %v2897 = vpop.f32.mrf.mxu0
      %v2898 = vadd.f32 %v2797, %v2897
      %2899 = vdwg.mxu0
      %s2900 = scalar_lea.vmem [#allocation2], 16
      %v2901 = vld [vmem:[%s2900] sm:$0xf]
      %v2902 = vld [vmem:[%s2900 + $0x8] sm:$0xf]
      %v2903 = vld [vmem:[%s2900 + $0x10] sm:$0xf]
      %v2904 = vld [vmem:[%s2900 + $0x18] sm:$0xf]
      %v2905 = vld [vmem:[%s2900 + $0x20] sm:$0xf]
      %v2906 = vld [vmem:[%s2900 + $0x28] sm:$0xf]
      %v2907 = vld [vmem:[%s2900 + $0x30] sm:$0xf]
      %v2908 = vld [vmem:[%s2900 + $0x38] sm:$0xf]
      %s2909 = scalar_lea.vmem %s2, 640
      %v2910 = vld [vmem:[%s2909] sm:$0xf]
      %v2911 = vld [vmem:[%s2909 + $0x4] sm:$0xf]
      %v2912 = vld [vmem:[%s2909 + $0x8] sm:$0xf]
      %v2913 = vld [vmem:[%s2909 + $0xc] sm:$0xf]
      %v2914 = vld [vmem:[%s2909 + $0x10] sm:$0xf]
      %v2915 = vld [vmem:[%s2909 + $0x14] sm:$0xf]
      %v2916 = vld [vmem:[%s2909 + $0x18] sm:$0xf]
      %v2917 = vld [vmem:[%s2909 + $0x1c] sm:$0xf]
      %v2918 = vld [vmem:[%s2909 + $0x20] sm:$0xf]
      %v2919 = vld [vmem:[%s2909 + $0x24] sm:$0xf]
      %v2920 = vld [vmem:[%s2909 + $0x28] sm:$0xf]
      %v2921 = vld [vmem:[%s2909 + $0x2c] sm:$0xf]
      %v2922 = vld [vmem:[%s2909 + $0x30] sm:$0xf]
      %v2923 = vld [vmem:[%s2909 + $0x34] sm:$0xf]
      %v2924 = vld [vmem:[%s2909 + $0x38] sm:$0xf]
      %v2925 = vld [vmem:[%s2909 + $0x3c] sm:$0xf]
      %v2934 = vunpack.c.l.b16 %v2901
      %v2935 = vunpack.c.l.b16 %v2902
      %v2936 = vunpack.c.l.b16 %v2903
      %v2937 = vunpack.c.l.b16 %v2904
      %v2938 = vunpack.c.l.b16 %v2905
      %v2939 = vunpack.c.l.b16 %v2906
      %v2940 = vunpack.c.l.b16 %v2907
      %v2941 = vunpack.c.l.b16 %v2908
      %v2942 = vpack.c.b16 %v2935, %v2934
      %v2943 = vpack.c.b16 %v2937, %v2936
      %v2944 = vpack.c.b16 %v2939, %v2938
      %v2945 = vpack.c.b16 %v2941, %v2940
      %v2966 = vunpack.c.l.b16 %v2910
      %v2967 = vunpack.c.l.b16 %v2911
      %v2968 = vunpack.c.l.b16 %v2912
      %v2969 = vunpack.c.l.b16 %v2913
      %v2970 = vunpack.c.l.b16 %v2914
      %v2971 = vunpack.c.l.b16 %v2915
      %v2972 = vunpack.c.l.b16 %v2916
      %v2973 = vunpack.c.l.b16 %v2917
      %v2974 = vunpack.c.l.b16 %v2918
      %v2975 = vunpack.c.l.b16 %v2919
      %v2976 = vunpack.c.l.b16 %v2920
      %v2977 = vunpack.c.l.b16 %v2921
      %v2978 = vunpack.c.l.b16 %v2922
      %v2979 = vunpack.c.l.b16 %v2923
      %v2980 = vunpack.c.l.b16 %v2924
      %v2981 = vunpack.c.l.b16 %v2925
      %v2982 = vpack.c.b16 %v2967, %v2966
      %v2983 = vpack.c.b16 %v2969, %v2968
      %v2984 = vpack.c.b16 %v2971, %v2970
      %v2985 = vpack.c.b16 %v2973, %v2972
      %v2986 = vpack.c.b16 %v2975, %v2974
      %v2987 = vpack.c.b16 %v2977, %v2976
      %v2988 = vpack.c.b16 %v2979, %v2978
      %v2989 = vpack.c.b16 %v2981, %v2980
      %2998 = vmatpush.bf16.msra.mxu0 %v2989
      %2999 = vmatpush.bf16.msra.mxu0 %v2988
      %3000 = vmatpush.bf16.msra.mxu0 %v2987
      %3001 = vmatpush.bf16.msra.mxu0 %v2986
      %3002 = vmatpush.bf16.msra.mxu0 %v2985
      %3003 = vmatpush.bf16.msra.mxu0 %v2984
      %3004 = vmatpush.bf16.msra.mxu0 %v2983
      %3005 = vmatpush.bf16.msra.mxu0 %v2982
      %3006 = vmatmul.bf16.gmra.mxu0 %v2942
      %v3007 = vpop.f32.mrf.mxu0
      %v3008 = vadd.f32 0.0, %v3007
      %v3009 = vpop.f32.mrf.mxu0
      %v3010 = vadd.f32 0.0, %v3009
      %3011 = vmatmul.bf16.gmra.mxu0 %v2943
      %v3012 = vpop.f32.mrf.mxu0
      %v3013 = vadd.f32 0.0, %v3012
      %v3014 = vpop.f32.mrf.mxu0
      %v3015 = vadd.f32 0.0, %v3014
      %3016 = vmatmul.bf16.gmra.mxu0 %v2944
      %v3017 = vpop.f32.mrf.mxu0
      %v3018 = vadd.f32 0.0, %v3017
      %v3019 = vpop.f32.mrf.mxu0
      %v3020 = vadd.f32 0.0, %v3019
      %3021 = vmatmul.bf16.gmra.mxu0 %v2945
      %v3022 = vpop.f32.mrf.mxu0
      %v3023 = vadd.f32 0.0, %v3022
      %v3024 = vpop.f32.mrf.mxu0
      %v3025 = vadd.f32 0.0, %v3024
      %3026 = vdwg.mxu0
      %v3027 = vadd.f32 %v2881, %v3008
      %v3028 = vadd.f32 %v2883, %v3010
      %v3029 = vadd.f32 %v2886, %v3013
      %v3030 = vadd.f32 %v2888, %v3015
      %v3031 = vadd.f32 %v2891, %v3018
      %v3032 = vadd.f32 %v2893, %v3020
      %v3033 = vadd.f32 %v2896, %v3023
      %v3034 = vadd.f32 %v2898, %v3025
      %v3035 = vld [vmem:[%s2900] sm:$0xf]
      %v3036 = vld [vmem:[%s2900 + $0x4] sm:$0x1]
      %v3037 = vld [vmem:[%s2900 + $0x8] sm:$0xf]
      %v3038 = vld [vmem:[%s2900 + $0xc] sm:$0x1]
      %v3039 = vld [vmem:[%s2900 + $0x10] sm:$0xf]
      %v3040 = vld [vmem:[%s2900 + $0x14] sm:$0x1]
      %v3041 = vld [vmem:[%s2900 + $0x18] sm:$0xf]
      %v3042 = vld [vmem:[%s2900 + $0x1c] sm:$0x1]
      %v3043 = vld [vmem:[%s2900 + $0x20] sm:$0xf]
      %v3044 = vld [vmem:[%s2900 + $0x24] sm:$0x1]
      %v3045 = vld [vmem:[%s2900 + $0x28] sm:$0xf]
      %v3046 = vld [vmem:[%s2900 + $0x2c] sm:$0x1]
      %v3047 = vld [vmem:[%s2900 + $0x30] sm:$0xf]
      %v3048 = vld [vmem:[%s2900 + $0x34] sm:$0x1]
      %v3049 = vld [vmem:[%s2900 + $0x38] sm:$0xf]
      %v3050 = vld [vmem:[%s2900 + $0x3c] sm:$0x1]
      %v3052 = vshrl.u32 %v3035, 16
      %v3054 = vrot.slane %v3052, 4
      %v3055 = vshll.u32 %v3035, 16
      %v3057 = vrot.slane %v3055, 5
      %v3058 = vor.u32 %v3054, %v3057
      %v3059 = vrot.slane %v3058, 4
      %v3061 = vshll.u32 %v3036, 16
      %v3063 = vrot.slane %v3061, 5
      %v3064 = vsel %vm322, %v3059, %v3063
      %v3066 = vshrl.u32 %v3037, 16
      %v3068 = vrot.slane %v3066, 4
      %v3069 = vshll.u32 %v3037, 16
      %v3071 = vrot.slane %v3069, 5
      %v3072 = vor.u32 %v3068, %v3071
      %v3073 = vrot.slane %v3072, 4
      %v3075 = vshll.u32 %v3038, 16
      %v3077 = vrot.slane %v3075, 5
      %v3078 = vsel %vm322, %v3073, %v3077
      %v3080 = vshrl.u32 %v3039, 16
      %v3082 = vrot.slane %v3080, 4
      %v3083 = vshll.u32 %v3039, 16
      %v3085 = vrot.slane %v3083, 5
      %v3086 = vor.u32 %v3082, %v3085
      %v3087 = vrot.slane %v3086, 4
      %v3089 = vshll.u32 %v3040, 16
      %v3091 = vrot.slane %v3089, 5
      %v3092 = vsel %vm322, %v3087, %v3091
      %v3094 = vshrl.u32 %v3041, 16
      %v3096 = vrot.slane %v3094, 4
      %v3097 = vshll.u32 %v3041, 16
      %v3099 = vrot.slane %v3097, 5
      %v3100 = vor.u32 %v3096, %v3099
      %v3101 = vrot.slane %v3100, 4
      %v3103 = vshll.u32 %v3042, 16
      %v3105 = vrot.slane %v3103, 5
      %v3106 = vsel %vm322, %v3101, %v3105
      %v3108 = vshrl.u32 %v3043, 16
      %v3110 = vrot.slane %v3108, 4
      %v3111 = vshll.u32 %v3043, 16
      %v3113 = vrot.slane %v3111, 5
      %v3114 = vor.u32 %v3110, %v3113
      %v3115 = vrot.slane %v3114, 4
      %v3117 = vshll.u32 %v3044, 16
      %v3119 = vrot.slane %v3117, 5
      %v3120 = vsel %vm322, %v3115, %v3119
      %v3122 = vshrl.u32 %v3045, 16
      %v3124 = vrot.slane %v3122, 4
      %v3125 = vshll.u32 %v3045, 16
      %v3127 = vrot.slane %v3125, 5
      %v3128 = vor.u32 %v3124, %v3127
      %v3129 = vrot.slane %v3128, 4
      %v3131 = vshll.u32 %v3046, 16
      %v3133 = vrot.slane %v3131, 5
      %v3134 = vsel %vm322, %v3129, %v3133
      %v3136 = vshrl.u32 %v3047, 16
      %v3138 = vrot.slane %v3136, 4
      %v3139 = vshll.u32 %v3047, 16
      %v3141 = vrot.slane %v3139, 5
      %v3142 = vor.u32 %v3138, %v3141
      %v3143 = vrot.slane %v3142, 4
      %v3145 = vshll.u32 %v3048, 16
      %v3147 = vrot.slane %v3145, 5
      %v3148 = vsel %vm322, %v3143, %v3147
      %v3150 = vshrl.u32 %v3049, 16
      %v3152 = vrot.slane %v3150, 4
      %v3153 = vshll.u32 %v3049, 16
      %v3155 = vrot.slane %v3153, 5
      %v3156 = vor.u32 %v3152, %v3155
      %v3157 = vrot.slane %v3156, 4
      %v3159 = vshll.u32 %v3050, 16
      %v3161 = vrot.slane %v3159, 5
      %v3162 = vsel %vm322, %v3157, %v3161
      %s3163 = scalar_lea.vmem %s2, 704
      %v3164 = vld [vmem:[%s3163] sm:$0xf]
      %v3165 = vld [vmem:[%s3163 + $0x4] sm:$0xf]
      %v3166 = vld [vmem:[%s3163 + $0x8] sm:$0xf]
      %v3167 = vld [vmem:[%s3163 + $0xc] sm:$0xf]
      %v3168 = vld [vmem:[%s3163 + $0x10] sm:$0xf]
      %v3169 = vld [vmem:[%s3163 + $0x14] sm:$0xf]
      %v3170 = vld [vmem:[%s3163 + $0x18] sm:$0xf]
      %v3171 = vld [vmem:[%s3163 + $0x1c] sm:$0xf]
      %v3172 = vld [vmem:[%s3163 + $0x20] sm:$0xf]
      %v3173 = vld [vmem:[%s3163 + $0x24] sm:$0xf]
      %v3174 = vld [vmem:[%s3163 + $0x28] sm:$0xf]
      %v3175 = vld [vmem:[%s3163 + $0x2c] sm:$0xf]
      %v3176 = vld [vmem:[%s3163 + $0x30] sm:$0xf]
      %v3177 = vld [vmem:[%s3163 + $0x34] sm:$0xf]
      %v3178 = vld [vmem:[%s3163 + $0x38] sm:$0xf]
      %v3179 = vld [vmem:[%s3163 + $0x3c] sm:$0xf]
      %v3180 = vunpack.c.l.b16 %v3064
      %v3181 = vunpack.c.l.b16 %v3078
      %v3182 = vunpack.c.l.b16 %v3092
      %v3183 = vunpack.c.l.b16 %v3106
      %v3184 = vunpack.c.l.b16 %v3120
      %v3185 = vunpack.c.l.b16 %v3134
      %v3186 = vunpack.c.l.b16 %v3148
      %v3187 = vunpack.c.l.b16 %v3162
      %v3188 = vpack.c.b16 %v3181, %v3180
      %v3189 = vpack.c.b16 %v3183, %v3182
      %v3190 = vpack.c.b16 %v3185, %v3184
      %v3191 = vpack.c.b16 %v3187, %v3186
      %v3212 = vunpack.c.l.b16 %v3164
      %v3213 = vunpack.c.l.b16 %v3165
      %v3214 = vunpack.c.l.b16 %v3166
      %v3215 = vunpack.c.l.b16 %v3167
      %v3216 = vunpack.c.l.b16 %v3168
      %v3217 = vunpack.c.l.b16 %v3169
      %v3218 = vunpack.c.l.b16 %v3170
      %v3219 = vunpack.c.l.b16 %v3171
      %v3220 = vunpack.c.l.b16 %v3172
      %v3221 = vunpack.c.l.b16 %v3173
      %v3222 = vunpack.c.l.b16 %v3174
      %v3223 = vunpack.c.l.b16 %v3175
      %v3224 = vunpack.c.l.b16 %v3176
      %v3225 = vunpack.c.l.b16 %v3177
      %v3226 = vunpack.c.l.b16 %v3178
      %v3227 = vunpack.c.l.b16 %v3179
      %v3228 = vpack.c.b16 %v3213, %v3212
      %v3229 = vpack.c.b16 %v3215, %v3214
      %v3230 = vpack.c.b16 %v3217, %v3216
      %v3231 = vpack.c.b16 %v3219, %v3218
      %v3232 = vpack.c.b16 %v3221, %v3220
      %v3233 = vpack.c.b16 %v3223, %v3222
      %v3234 = vpack.c.b16 %v3225, %v3224
      %v3235 = vpack.c.b16 %v3227, %v3226
      %3244 = vmatpush.bf16.msra.mxu0 %v3235
      %3245 = vmatpush.bf16.msra.mxu0 %v3234
      %3246 = vmatpush.bf16.msra.mxu0 %v3233
      %3247 = vmatpush.bf16.msra.mxu0 %v3232
      %3248 = vmatpush.bf16.msra.mxu0 %v3231
      %3249 = vmatpush.bf16.msra.mxu0 %v3230
      %3250 = vmatpush.bf16.msra.mxu0 %v3229
      %3251 = vmatpush.bf16.msra.mxu0 %v3228
      %3252 = vmatmul.bf16.gmra.mxu0 %v3188
      %v3253 = vpop.f32.mrf.mxu0
      %v3254 = vadd.f32 0.0, %v3253
      %v3255 = vpop.f32.mrf.mxu0
      %v3256 = vadd.f32 0.0, %v3255
      %3257 = vmatmul.bf16.gmra.mxu0 %v3189
      %v3258 = vpop.f32.mrf.mxu0
      %v3259 = vadd.f32 0.0, %v3258
      %v3260 = vpop.f32.mrf.mxu0
      %v3261 = vadd.f32 0.0, %v3260
      %3262 = vmatmul.bf16.gmra.mxu0 %v3190
      %v3263 = vpop.f32.mrf.mxu0
      %v3264 = vadd.f32 0.0, %v3263
      %v3265 = vpop.f32.mrf.mxu0
      %v3266 = vadd.f32 0.0, %v3265
      %3267 = vmatmul.bf16.gmra.mxu0 %v3191
      %v3268 = vpop.f32.mrf.mxu0
      %v3269 = vadd.f32 0.0, %v3268
      %v3270 = vpop.f32.mrf.mxu0
      %v3271 = vadd.f32 0.0, %v3270
      %3272 = vdwg.mxu0
      %v3273 = vadd.f32 %v3027, %v3254
      %v3274 = vadd.f32 %v3028, %v3256
      %v3275 = vadd.f32 %v3029, %v3259
      %v3276 = vadd.f32 %v3030, %v3261
      %v3277 = vadd.f32 %v3031, %v3264
      %v3278 = vadd.f32 %v3032, %v3266
      %v3279 = vadd.f32 %v3033, %v3269
      %v3280 = vadd.f32 %v3034, %v3271
      %v3281 = vpack.c.bf16 %v3273, %v3273
      %v3282 = vpack.c.bf16 %v3274, %v3274
      %v3283 = vpack.c.bf16 %v3275, %v3275
      %v3284 = vpack.c.bf16 %v3276, %v3276
      %v3285 = vpack.c.bf16 %v3277, %v3277
      %v3286 = vpack.c.bf16 %v3278, %v3278
      %v3287 = vpack.c.bf16 %v3279, %v3279
      %v3288 = vpack.c.bf16 %v3280, %v3280
      %s3289 = scalar_lea.vmem %s204, 64
      %3290 = vst [vmem:[%s3289] sm:$0xf] %v3281
      %3291 = vst [vmem:[%s3289 + $0x4] sm:$0xf] %v3282
      %3292 = vst [vmem:[%s3289 + $0x8] sm:$0xf] %v3283
      %3293 = vst [vmem:[%s3289 + $0xc] sm:$0xf] %v3284
      %3294 = vst [vmem:[%s3289 + $0x10] sm:$0xf] %v3285
      %3295 = vst [vmem:[%s3289 + $0x14] sm:$0xf] %v3286
      %3296 = vst [vmem:[%s3289 + $0x18] sm:$0xf] %v3287
      %3297 = vst [vmem:[%s3289 + $0x1c] sm:$0xf] %v3288
      %v3298 = vadd.f32 %v3273, %v3274
      %v3299 = vadd.f32 %v3298, %v3275
      %v3300 = vadd.f32 %v3299, %v3276
      %v3301 = vadd.f32 %v3300, %v3277
      %v3302 = vadd.f32 %v3301, %v3278
      %v3303 = vadd.f32 %v3302, %v3279
      %v3304 = vadd.f32 %v3303, %v3280
      %v3305 = vrot.slane %v3304, 4
      %v3306 = vadd.f32 %v3304, %v3305
      %v3307 = vrot.slane %v3306, 2
      %v3308 = vadd.f32 %v3306, %v3307
      %v3309 = vrot.slane %v3308, 1
      %v3310 = vadd.f32 %v3308, %v3309
      %v3311 = vadd.f32 %v2521, %v3310
      %v3312 = vmul.f32 %v3273, %v3273
      %v3313 = vmul.f32 %v3274, %v3274
      %v3314 = vmul.f32 %v3275, %v3275
      %v3315 = vmul.f32 %v3276, %v3276
      %v3316 = vmul.f32 %v3277, %v3277
      %v3317 = vmul.f32 %v3278, %v3278
      %v3318 = vmul.f32 %v3279, %v3279
      %v3319 = vmul.f32 %v3280, %v3280
      %v3320 = vadd.f32 %v3312, %v3313
      %v3321 = vadd.f32 %v3320, %v3314
      %v3322 = vadd.f32 %v3321, %v3315
      %v3323 = vadd.f32 %v3322, %v3316
      %v3324 = vadd.f32 %v3323, %v3317
      %v3325 = vadd.f32 %v3324, %v3318
      %v3326 = vadd.f32 %v3325, %v3319
      %v3327 = vrot.slane %v3326, 4
      %v3328 = vadd.f32 %v3326, %v3327
      %v3329 = vrot.slane %v3328, 2
      %v3330 = vadd.f32 %v3328, %v3329
      %v3331 = vrot.slane %v3330, 1
      %v3332 = vadd.f32 %v3330, %v3331
      %v3333 = vadd.f32 %v2543, %v3332
      %v3334 = vld [vmem:[%s822] sm:$0xf]
      %v3335 = vld [vmem:[%s822 + $0x4] sm:$0x1]
      %v3336 = vld [vmem:[%s822 + $0x8] sm:$0xf]
      %v3337 = vld [vmem:[%s822 + $0xc] sm:$0x1]
      %v3338 = vld [vmem:[%s822 + $0x10] sm:$0xf]
      %v3339 = vld [vmem:[%s822 + $0x14] sm:$0x1]
      %v3340 = vld [vmem:[%s822 + $0x18] sm:$0xf]
      %v3341 = vld [vmem:[%s822 + $0x1c] sm:$0x1]
      %v3342 = vld [vmem:[%s822 + $0x20] sm:$0xf]
      %v3343 = vld [vmem:[%s822 + $0x24] sm:$0x1]
      %v3344 = vld [vmem:[%s822 + $0x28] sm:$0xf]
      %v3345 = vld [vmem:[%s822 + $0x2c] sm:$0x1]
      %v3346 = vld [vmem:[%s822 + $0x30] sm:$0xf]
      %v3347 = vld [vmem:[%s822 + $0x34] sm:$0x1]
      %v3348 = vld [vmem:[%s822 + $0x38] sm:$0xf]
      %v3349 = vld [vmem:[%s822 + $0x3c] sm:$0x1]
      %v3351 = vshrl.u32 %v3334, 16
      %v3353 = vrot.slane %v3351, 4
      %v3354 = vshll.u32 %v3334, 16
      %v3356 = vrot.slane %v3354, 5
      %v3357 = vor.u32 %v3353, %v3356
      %v3358 = vrot.slane %v3357, 4
      %v3360 = vshll.u32 %v3335, 16
      %v3362 = vrot.slane %v3360, 5
      %v3363 = vsel %vm322, %v3358, %v3362
      %v3365 = vshrl.u32 %v3336, 16
      %v3367 = vrot.slane %v3365, 4
      %v3368 = vshll.u32 %v3336, 16
      %v3370 = vrot.slane %v3368, 5
      %v3371 = vor.u32 %v3367, %v3370
      %v3372 = vrot.slane %v3371, 4
      %v3374 = vshll.u32 %v3337, 16
      %v3376 = vrot.slane %v3374, 5
      %v3377 = vsel %vm322, %v3372, %v3376
      %v3379 = vshrl.u32 %v3338, 16
      %v3381 = vrot.slane %v3379, 4
      %v3382 = vshll.u32 %v3338, 16
      %v3384 = vrot.slane %v3382, 5
      %v3385 = vor.u32 %v3381, %v3384
      %v3386 = vrot.slane %v3385, 4
      %v3388 = vshll.u32 %v3339, 16
      %v3390 = vrot.slane %v3388, 5
      %v3391 = vsel %vm322, %v3386, %v3390
      %v3393 = vshrl.u32 %v3340, 16
      %v3395 = vrot.slane %v3393, 4
      %v3396 = vshll.u32 %v3340, 16
      %v3398 = vrot.slane %v3396, 5
      %v3399 = vor.u32 %v3395, %v3398
      %v3400 = vrot.slane %v3399, 4
      %v3402 = vshll.u32 %v3341, 16
      %v3404 = vrot.slane %v3402, 5
      %v3405 = vsel %vm322, %v3400, %v3404
      %v3407 = vshrl.u32 %v3342, 16
      %v3409 = vrot.slane %v3407, 4
      %v3410 = vshll.u32 %v3342, 16
      %v3412 = vrot.slane %v3410, 5
      %v3413 = vor.u32 %v3409, %v3412
      %v3414 = vrot.slane %v3413, 4
      %v3416 = vshll.u32 %v3343, 16
      %v3418 = vrot.slane %v3416, 5
      %v3419 = vsel %vm322, %v3414, %v3418
      %v3421 = vshrl.u32 %v3344, 16
      %v3423 = vrot.slane %v3421, 4
      %v3424 = vshll.u32 %v3344, 16
      %v3426 = vrot.slane %v3424, 5
      %v3427 = vor.u32 %v3423, %v3426
      %v3428 = vrot.slane %v3427, 4
      %v3430 = vshll.u32 %v3345, 16
      %v3432 = vrot.slane %v3430, 5
      %v3433 = vsel %vm322, %v3428, %v3432
      %v3435 = vshrl.u32 %v3346, 16
      %v3437 = vrot.slane %v3435, 4
      %v3438 = vshll.u32 %v3346, 16
      %v3440 = vrot.slane %v3438, 5
      %v3441 = vor.u32 %v3437, %v3440
      %v3442 = vrot.slane %v3441, 4
      %v3444 = vshll.u32 %v3347, 16
      %v3446 = vrot.slane %v3444, 5
      %v3447 = vsel %vm322, %v3442, %v3446
      %v3449 = vshrl.u32 %v3348, 16
      %v3451 = vrot.slane %v3449, 4
      %v3452 = vshll.u32 %v3348, 16
      %v3454 = vrot.slane %v3452, 5
      %v3455 = vor.u32 %v3451, %v3454
      %v3456 = vrot.slane %v3455, 4
      %v3458 = vshll.u32 %v3349, 16
      %v3460 = vrot.slane %v3458, 5
      %v3461 = vsel %vm322, %v3456, %v3460
      %s3462 = scalar_lea.vmem %s2, 768
      %v3463 = vld [vmem:[%s3462] sm:$0xf]
      %v3464 = vld [vmem:[%s3462 + $0x4] sm:$0xf]
      %v3465 = vld [vmem:[%s3462 + $0x8] sm:$0xf]
      %v3466 = vld [vmem:[%s3462 + $0xc] sm:$0xf]
      %v3467 = vld [vmem:[%s3462 + $0x10] sm:$0xf]
      %v3468 = vld [vmem:[%s3462 + $0x14] sm:$0xf]
      %v3469 = vld [vmem:[%s3462 + $0x18] sm:$0xf]
      %v3470 = vld [vmem:[%s3462 + $0x1c] sm:$0xf]
      %v3471 = vld [vmem:[%s3462 + $0x20] sm:$0xf]
      %v3472 = vld [vmem:[%s3462 + $0x24] sm:$0xf]
      %v3473 = vld [vmem:[%s3462 + $0x28] sm:$0xf]
      %v3474 = vld [vmem:[%s3462 + $0x2c] sm:$0xf]
      %v3475 = vld [vmem:[%s3462 + $0x30] sm:$0xf]
      %v3476 = vld [vmem:[%s3462 + $0x34] sm:$0xf]
      %v3477 = vld [vmem:[%s3462 + $0x38] sm:$0xf]
      %v3478 = vld [vmem:[%s3462 + $0x3c] sm:$0xf]
      %v3479 = vld [vmem:[%s822] sm:$0xe]
      %v3480 = vld [vmem:[%s822 + $0x8] sm:$0xe]
      %v3481 = vld [vmem:[%s822 + $0x10] sm:$0xe]
      %v3482 = vld [vmem:[%s822 + $0x18] sm:$0xe]
      %v3483 = vld [vmem:[%s822 + $0x20] sm:$0xe]
      %v3484 = vld [vmem:[%s822 + $0x28] sm:$0xe]
      %v3485 = vld [vmem:[%s822 + $0x30] sm:$0xe]
      %v3486 = vld [vmem:[%s822 + $0x38] sm:$0xe]
      %v3503 = vrot.slane %v3479, 5
      %v3504 = vrot.slane %v3503, 4
      %v3505 = vrot.slane %v3335, 5
      %v3506 = vsel %vm1835, %v3504, %v3505
      %v3507 = vrot.slane %v3480, 5
      %v3508 = vrot.slane %v3507, 4
      %v3509 = vrot.slane %v3337, 5
      %v3510 = vsel %vm1835, %v3508, %v3509
      %v3511 = vrot.slane %v3481, 5
      %v3512 = vrot.slane %v3511, 4
      %v3513 = vrot.slane %v3339, 5
      %v3514 = vsel %vm1835, %v3512, %v3513
      %v3515 = vrot.slane %v3482, 5
      %v3516 = vrot.slane %v3515, 4
      %v3517 = vrot.slane %v3341, 5
      %v3518 = vsel %vm1835, %v3516, %v3517
      %v3519 = vrot.slane %v3483, 5
      %v3520 = vrot.slane %v3519, 4
      %v3521 = vrot.slane %v3343, 5
      %v3522 = vsel %vm1835, %v3520, %v3521
      %v3523 = vrot.slane %v3484, 5
      %v3524 = vrot.slane %v3523, 4
      %v3525 = vrot.slane %v3345, 5
      %v3526 = vsel %vm1835, %v3524, %v3525
      %v3527 = vrot.slane %v3485, 5
      %v3528 = vrot.slane %v3527, 4
      %v3529 = vrot.slane %v3347, 5
      %v3530 = vsel %vm1835, %v3528, %v3529
      %v3531 = vrot.slane %v3486, 5
      %v3532 = vrot.slane %v3531, 4
      %v3533 = vrot.slane %v3349, 5
      %v3534 = vsel %vm1835, %v3532, %v3533
      %s3535 = scalar_lea.vmem %s2, 832
      %v3536 = vld [vmem:[%s3535] sm:$0xf]
      %v3537 = vld [vmem:[%s3535 + $0x4] sm:$0xf]
      %v3538 = vld [vmem:[%s3535 + $0x8] sm:$0xf]
      %v3539 = vld [vmem:[%s3535 + $0xc] sm:$0xf]
      %v3540 = vld [vmem:[%s3535 + $0x10] sm:$0xf]
      %v3541 = vld [vmem:[%s3535 + $0x14] sm:$0xf]
      %v3542 = vld [vmem:[%s3535 + $0x18] sm:$0xf]
      %v3543 = vld [vmem:[%s3535 + $0x1c] sm:$0xf]
      %v3544 = vld [vmem:[%s3535 + $0x20] sm:$0xf]
      %v3545 = vld [vmem:[%s3535 + $0x24] sm:$0xf]
      %v3546 = vld [vmem:[%s3535 + $0x28] sm:$0xf]
      %v3547 = vld [vmem:[%s3535 + $0x2c] sm:$0xf]
      %v3548 = vld [vmem:[%s3535 + $0x30] sm:$0xf]
      %v3549 = vld [vmem:[%s3535 + $0x34] sm:$0xf]
      %v3550 = vld [vmem:[%s3535 + $0x38] sm:$0xf]
      %v3551 = vld [vmem:[%s3535 + $0x3c] sm:$0xf]
      %v3552 = vunpack.c.l.b16 %v3506
      %v3553 = vunpack.c.l.b16 %v3510
      %v3554 = vunpack.c.l.b16 %v3514
      %v3555 = vunpack.c.l.b16 %v3518
      %v3556 = vunpack.c.l.b16 %v3522
      %v3557 = vunpack.c.l.b16 %v3526
      %v3558 = vunpack.c.l.b16 %v3530
      %v3559 = vunpack.c.l.b16 %v3534
      %v3560 = vpack.c.b16 %v3553, %v3552
      %v3561 = vpack.c.b16 %v3555, %v3554
      %v3562 = vpack.c.b16 %v3557, %v3556
      %v3563 = vpack.c.b16 %v3559, %v3558
      %v3584 = vunpack.c.l.b16 %v3536
      %v3585 = vunpack.c.l.b16 %v3537
      %v3586 = vunpack.c.l.b16 %v3538
      %v3587 = vunpack.c.l.b16 %v3539
      %v3588 = vunpack.c.l.b16 %v3540
      %v3589 = vunpack.c.l.b16 %v3541
      %v3590 = vunpack.c.l.b16 %v3542
      %v3591 = vunpack.c.l.b16 %v3543
      %v3592 = vunpack.c.l.b16 %v3544
      %v3593 = vunpack.c.l.b16 %v3545
      %v3594 = vunpack.c.l.b16 %v3546
      %v3595 = vunpack.c.l.b16 %v3547
      %v3596 = vunpack.c.l.b16 %v3548
      %v3597 = vunpack.c.l.b16 %v3549
      %v3598 = vunpack.c.l.b16 %v3550
      %v3599 = vunpack.c.l.b16 %v3551
      %v3600 = vpack.c.b16 %v3585, %v3584
      %v3601 = vpack.c.b16 %v3587, %v3586
      %v3602 = vpack.c.b16 %v3589, %v3588
      %v3603 = vpack.c.b16 %v3591, %v3590
      %v3604 = vpack.c.b16 %v3593, %v3592
      %v3605 = vpack.c.b16 %v3595, %v3594
      %v3606 = vpack.c.b16 %v3597, %v3596
      %v3607 = vpack.c.b16 %v3599, %v3598
      %3616 = vmatpush.bf16.msra.mxu0 %v3607
      %3617 = vmatpush.bf16.msra.mxu0 %v3606
      %3618 = vmatpush.bf16.msra.mxu0 %v3605
      %3619 = vmatpush.bf16.msra.mxu0 %v3604
      %3620 = vmatpush.bf16.msra.mxu0 %v3603
      %3621 = vmatpush.bf16.msra.mxu0 %v3602
      %3622 = vmatpush.bf16.msra.mxu0 %v3601
      %3623 = vmatpush.bf16.msra.mxu0 %v3600
      %3624 = vmatmul.bf16.gmra.mxu0 %v3560
      %v3625 = vpop.f32.mrf.mxu0
      %v3626 = vadd.f32 0.0, %v3625
      %v3627 = vpop.f32.mrf.mxu0
      %v3628 = vadd.f32 0.0, %v3627
      %3629 = vmatmul.bf16.gmra.mxu0 %v3561
      %v3630 = vpop.f32.mrf.mxu0
      %v3631 = vadd.f32 0.0, %v3630
      %v3632 = vpop.f32.mrf.mxu0
      %v3633 = vadd.f32 0.0, %v3632
      %3634 = vmatmul.bf16.gmra.mxu0 %v3562
      %v3635 = vpop.f32.mrf.mxu0
      %v3636 = vadd.f32 0.0, %v3635
      %v3637 = vpop.f32.mrf.mxu0
      %v3638 = vadd.f32 0.0, %v3637
      %3639 = vmatmul.bf16.gmra.mxu0 %v3563
      %v3640 = vpop.f32.mrf.mxu0
      %v3641 = vadd.f32 0.0, %v3640
      %v3642 = vpop.f32.mrf.mxu0
      %v3643 = vadd.f32 0.0, %v3642
      %3644 = vdwg.mxu0
      %v3645 = vunpack.c.l.b16 %v3363
      %v3646 = vunpack.c.l.b16 %v3377
      %v3647 = vunpack.c.l.b16 %v3391
      %v3648 = vunpack.c.l.b16 %v3405
      %v3649 = vunpack.c.l.b16 %v3419
      %v3650 = vunpack.c.l.b16 %v3433
      %v3651 = vunpack.c.l.b16 %v3447
      %v3652 = vunpack.c.l.b16 %v3461
      %v3653 = vpack.c.b16 %v3646, %v3645
      %v3654 = vpack.c.b16 %v3648, %v3647
      %v3655 = vpack.c.b16 %v3650, %v3649
      %v3656 = vpack.c.b16 %v3652, %v3651
      %v3677 = vunpack.c.l.b16 %v3463
      %v3678 = vunpack.c.l.b16 %v3464
      %v3679 = vunpack.c.l.b16 %v3465
      %v3680 = vunpack.c.l.b16 %v3466
      %v3681 = vunpack.c.l.b16 %v3467
      %v3682 = vunpack.c.l.b16 %v3468
      %v3683 = vunpack.c.l.b16 %v3469
      %v3684 = vunpack.c.l.b16 %v3470
      %v3685 = vunpack.c.l.b16 %v3471
      %v3686 = vunpack.c.l.b16 %v3472
      %v3687 = vunpack.c.l.b16 %v3473
      %v3688 = vunpack.c.l.b16 %v3474
      %v3689 = vunpack.c.l.b16 %v3475
      %v3690 = vunpack.c.l.b16 %v3476
      %v3691 = vunpack.c.l.b16 %v3477
      %v3692 = vunpack.c.l.b16 %v3478
      %v3693 = vpack.c.b16 %v3678, %v3677
      %v3694 = vpack.c.b16 %v3680, %v3679
      %v3695 = vpack.c.b16 %v3682, %v3681
      %v3696 = vpack.c.b16 %v3684, %v3683
      %v3697 = vpack.c.b16 %v3686, %v3685
      %v3698 = vpack.c.b16 %v3688, %v3687
      %v3699 = vpack.c.b16 %v3690, %v3689
      %v3700 = vpack.c.b16 %v3692, %v3691
      %3709 = vmatpush.bf16.msra.mxu0 %v3700
      %3710 = vmatpush.bf16.msra.mxu0 %v3699
      %3711 = vmatpush.bf16.msra.mxu0 %v3698
      %3712 = vmatpush.bf16.msra.mxu0 %v3697
      %3713 = vmatpush.bf16.msra.mxu0 %v3696
      %3714 = vmatpush.bf16.msra.mxu0 %v3695
      %3715 = vmatpush.bf16.msra.mxu0 %v3694
      %3716 = vmatpush.bf16.msra.mxu0 %v3693
      %3717 = vmatmul.bf16.gmra.mxu0 %v3653
      %v3718 = vpop.f32.mrf.mxu0
      %v3719 = vadd.f32 %v3626, %v3718
      %v3720 = vpop.f32.mrf.mxu0
      %v3721 = vadd.f32 %v3628, %v3720
      %3722 = vmatmul.bf16.gmra.mxu0 %v3654
      %v3723 = vpop.f32.mrf.mxu0
      %v3724 = vadd.f32 %v3631, %v3723
      %v3725 = vpop.f32.mrf.mxu0
      %v3726 = vadd.f32 %v3633, %v3725
      %3727 = vmatmul.bf16.gmra.mxu0 %v3655
      %v3728 = vpop.f32.mrf.mxu0
      %v3729 = vadd.f32 %v3636, %v3728
      %v3730 = vpop.f32.mrf.mxu0
      %v3731 = vadd.f32 %v3638, %v3730
      %3732 = vmatmul.bf16.gmra.mxu0 %v3656
      %v3733 = vpop.f32.mrf.mxu0
      %v3734 = vadd.f32 %v3641, %v3733
      %v3735 = vpop.f32.mrf.mxu0
      %v3736 = vadd.f32 %v3643, %v3735
      %3737 = vdwg.mxu0
      %v3738 = vld [vmem:[%s2900] sm:$0xf]
      %v3739 = vld [vmem:[%s2900 + $0x4] sm:$0x1]
      %v3740 = vld [vmem:[%s2900 + $0x8] sm:$0xf]
      %v3741 = vld [vmem:[%s2900 + $0xc] sm:$0x1]
      %v3742 = vld [vmem:[%s2900 + $0x10] sm:$0xf]
      %v3743 = vld [vmem:[%s2900 + $0x14] sm:$0x1]
      %v3744 = vld [vmem:[%s2900 + $0x18] sm:$0xf]
      %v3745 = vld [vmem:[%s2900 + $0x1c] sm:$0x1]
      %v3746 = vld [vmem:[%s2900 + $0x20] sm:$0xf]
      %v3747 = vld [vmem:[%s2900 + $0x24] sm:$0x1]
      %v3748 = vld [vmem:[%s2900 + $0x28] sm:$0xf]
      %v3749 = vld [vmem:[%s2900 + $0x2c] sm:$0x1]
      %v3750 = vld [vmem:[%s2900 + $0x30] sm:$0xf]
      %v3751 = vld [vmem:[%s2900 + $0x34] sm:$0x1]
      %v3752 = vld [vmem:[%s2900 + $0x38] sm:$0xf]
      %v3753 = vld [vmem:[%s2900 + $0x3c] sm:$0x1]
      %v3755 = vshrl.u32 %v3738, 16
      %v3757 = vrot.slane %v3755, 4
      %v3758 = vshll.u32 %v3738, 16
      %v3760 = vrot.slane %v3758, 5
      %v3761 = vor.u32 %v3757, %v3760
      %v3762 = vrot.slane %v3761, 4
      %v3764 = vshll.u32 %v3739, 16
      %v3766 = vrot.slane %v3764, 5
      %v3767 = vsel %vm322, %v3762, %v3766
      %v3769 = vshrl.u32 %v3740, 16
      %v3771 = vrot.slane %v3769, 4
      %v3772 = vshll.u32 %v3740, 16
      %v3774 = vrot.slane %v3772, 5
      %v3775 = vor.u32 %v3771, %v3774
      %v3776 = vrot.slane %v3775, 4
      %v3778 = vshll.u32 %v3741, 16
      %v3780 = vrot.slane %v3778, 5
      %v3781 = vsel %vm322, %v3776, %v3780
      %v3783 = vshrl.u32 %v3742, 16
      %v3785 = vrot.slane %v3783, 4
      %v3786 = vshll.u32 %v3742, 16
      %v3788 = vrot.slane %v3786, 5
      %v3789 = vor.u32 %v3785, %v3788
      %v3790 = vrot.slane %v3789, 4
      %v3792 = vshll.u32 %v3743, 16
      %v3794 = vrot.slane %v3792, 5
      %v3795 = vsel %vm322, %v3790, %v3794
      %v3797 = vshrl.u32 %v3744, 16
      %v3799 = vrot.slane %v3797, 4
      %v3800 = vshll.u32 %v3744, 16
      %v3802 = vrot.slane %v3800, 5
      %v3803 = vor.u32 %v3799, %v3802
      %v3804 = vrot.slane %v3803, 4
      %v3806 = vshll.u32 %v3745, 16
      %v3808 = vrot.slane %v3806, 5
      %v3809 = vsel %vm322, %v3804, %v3808
      %v3811 = vshrl.u32 %v3746, 16
      %v3813 = vrot.slane %v3811, 4
      %v3814 = vshll.u32 %v3746, 16
      %v3816 = vrot.slane %v3814, 5
      %v3817 = vor.u32 %v3813, %v3816
      %v3818 = vrot.slane %v3817, 4
      %v3820 = vshll.u32 %v3747, 16
      %v3822 = vrot.slane %v3820, 5
      %v3823 = vsel %vm322, %v3818, %v3822
      %v3825 = vshrl.u32 %v3748, 16
      %v3827 = vrot.slane %v3825, 4
      %v3828 = vshll.u32 %v3748, 16
      %v3830 = vrot.slane %v3828, 5
      %v3831 = vor.u32 %v3827, %v3830
      %v3832 = vrot.slane %v3831, 4
      %v3834 = vshll.u32 %v3749, 16
      %v3836 = vrot.slane %v3834, 5
      %v3837 = vsel %vm322, %v3832, %v3836
      %v3839 = vshrl.u32 %v3750, 16
      %v3841 = vrot.slane %v3839, 4
      %v3842 = vshll.u32 %v3750, 16
      %v3844 = vrot.slane %v3842, 5
      %v3845 = vor.u32 %v3841, %v3844
      %v3846 = vrot.slane %v3845, 4
      %v3848 = vshll.u32 %v3751, 16
      %v3850 = vrot.slane %v3848, 5
      %v3851 = vsel %vm322, %v3846, %v3850
      %v3853 = vshrl.u32 %v3752, 16
      %v3855 = vrot.slane %v3853, 4
      %v3856 = vshll.u32 %v3752, 16
      %v3858 = vrot.slane %v3856, 5
      %v3859 = vor.u32 %v3855, %v3858
      %v3860 = vrot.slane %v3859, 4
      %v3862 = vshll.u32 %v3753, 16
      %v3864 = vrot.slane %v3862, 5
      %v3865 = vsel %vm322, %v3860, %v3864
      %s3866 = scalar_lea.vmem %s2, 896
      %v3867 = vld [vmem:[%s3866] sm:$0xf]
      %v3868 = vld [vmem:[%s3866 + $0x4] sm:$0xf]
      %v3869 = vld [vmem:[%s3866 + $0x8] sm:$0xf]
      %v3870 = vld [vmem:[%s3866 + $0xc] sm:$0xf]
      %v3871 = vld [vmem:[%s3866 + $0x10] sm:$0xf]
      %v3872 = vld [vmem:[%s3866 + $0x14] sm:$0xf]
      %v3873 = vld [vmem:[%s3866 + $0x18] sm:$0xf]
      %v3874 = vld [vmem:[%s3866 + $0x1c] sm:$0xf]
      %v3875 = vld [vmem:[%s3866 + $0x20] sm:$0xf]
      %v3876 = vld [vmem:[%s3866 + $0x24] sm:$0xf]
      %v3877 = vld [vmem:[%s3866 + $0x28] sm:$0xf]
      %v3878 = vld [vmem:[%s3866 + $0x2c] sm:$0xf]
      %v3879 = vld [vmem:[%s3866 + $0x30] sm:$0xf]
      %v3880 = vld [vmem:[%s3866 + $0x34] sm:$0xf]
      %v3881 = vld [vmem:[%s3866 + $0x38] sm:$0xf]
      %v3882 = vld [vmem:[%s3866 + $0x3c] sm:$0xf]
      %v3883 = vunpack.c.l.b16 %v3767
      %v3884 = vunpack.c.l.b16 %v3781
      %v3885 = vunpack.c.l.b16 %v3795
      %v3886 = vunpack.c.l.b16 %v3809
      %v3887 = vunpack.c.l.b16 %v3823
      %v3888 = vunpack.c.l.b16 %v3837
      %v3889 = vunpack.c.l.b16 %v3851
      %v3890 = vunpack.c.l.b16 %v3865
      %v3891 = vpack.c.b16 %v3884, %v3883
      %v3892 = vpack.c.b16 %v3886, %v3885
      %v3893 = vpack.c.b16 %v3888, %v3887
      %v3894 = vpack.c.b16 %v3890, %v3889
      %v3915 = vunpack.c.l.b16 %v3867
      %v3916 = vunpack.c.l.b16 %v3868
      %v3917 = vunpack.c.l.b16 %v3869
      %v3918 = vunpack.c.l.b16 %v3870
      %v3919 = vunpack.c.l.b16 %v3871
      %v3920 = vunpack.c.l.b16 %v3872
      %v3921 = vunpack.c.l.b16 %v3873
      %v3922 = vunpack.c.l.b16 %v3874
      %v3923 = vunpack.c.l.b16 %v3875
      %v3924 = vunpack.c.l.b16 %v3876
      %v3925 = vunpack.c.l.b16 %v3877
      %v3926 = vunpack.c.l.b16 %v3878
      %v3927 = vunpack.c.l.b16 %v3879
      %v3928 = vunpack.c.l.b16 %v3880
      %v3929 = vunpack.c.l.b16 %v3881
      %v3930 = vunpack.c.l.b16 %v3882
      %v3931 = vpack.c.b16 %v3916, %v3915
      %v3932 = vpack.c.b16 %v3918, %v3917
      %v3933 = vpack.c.b16 %v3920, %v3919
      %v3934 = vpack.c.b16 %v3922, %v3921
      %v3935 = vpack.c.b16 %v3924, %v3923
      %v3936 = vpack.c.b16 %v3926, %v3925
      %v3937 = vpack.c.b16 %v3928, %v3927
      %v3938 = vpack.c.b16 %v3930, %v3929
      %3947 = vmatpush.bf16.msra.mxu0 %v3938
      %3948 = vmatpush.bf16.msra.mxu0 %v3937
      %3949 = vmatpush.bf16.msra.mxu0 %v3936
      %3950 = vmatpush.bf16.msra.mxu0 %v3935
      %3951 = vmatpush.bf16.msra.mxu0 %v3934
      %3952 = vmatpush.bf16.msra.mxu0 %v3933
      %3953 = vmatpush.bf16.msra.mxu0 %v3932
      %3954 = vmatpush.bf16.msra.mxu0 %v3931
      %3955 = vmatmul.bf16.gmra.mxu0 %v3891
      %v3956 = vpop.f32.mrf.mxu0
      %v3957 = vadd.f32 0.0, %v3956
      %v3958 = vpop.f32.mrf.mxu0
      %v3959 = vadd.f32 0.0, %v3958
      %3960 = vmatmul.bf16.gmra.mxu0 %v3892
      %v3961 = vpop.f32.mrf.mxu0
      %v3962 = vadd.f32 0.0, %v3961
      %v3963 = vpop.f32.mrf.mxu0
      %v3964 = vadd.f32 0.0, %v3963
      %3965 = vmatmul.bf16.gmra.mxu0 %v3893
      %v3966 = vpop.f32.mrf.mxu0
      %v3967 = vadd.f32 0.0, %v3966
      %v3968 = vpop.f32.mrf.mxu0
      %v3969 = vadd.f32 0.0, %v3968
      %3970 = vmatmul.bf16.gmra.mxu0 %v3894
      %v3971 = vpop.f32.mrf.mxu0
      %v3972 = vadd.f32 0.0, %v3971
      %v3973 = vpop.f32.mrf.mxu0
      %v3974 = vadd.f32 0.0, %v3973
      %3975 = vdwg.mxu0
      %v3976 = vadd.f32 %v3719, %v3957
      %v3977 = vadd.f32 %v3721, %v3959
      %v3978 = vadd.f32 %v3724, %v3962
      %v3979 = vadd.f32 %v3726, %v3964
      %v3980 = vadd.f32 %v3729, %v3967
      %v3981 = vadd.f32 %v3731, %v3969
      %v3982 = vadd.f32 %v3734, %v3972
      %v3983 = vadd.f32 %v3736, %v3974
      %v3984 = vld [vmem:[%s2900] sm:$0xe]
      %v3985 = vld [vmem:[%s2900 + $0x8] sm:$0xe]
      %v3986 = vld [vmem:[%s2900 + $0x10] sm:$0xe]
      %v3987 = vld [vmem:[%s2900 + $0x18] sm:$0xe]
      %v3988 = vld [vmem:[%s2900 + $0x20] sm:$0xe]
      %v3989 = vld [vmem:[%s2900 + $0x28] sm:$0xe]
      %v3990 = vld [vmem:[%s2900 + $0x30] sm:$0xe]
      %v3991 = vld [vmem:[%s2900 + $0x38] sm:$0xe]
      %v4008 = vrot.slane %v3984, 5
      %v4009 = vrot.slane %v4008, 4
      %v4010 = vrot.slane %v3739, 5
      %v4011 = vsel %vm1835, %v4009, %v4010
      %v4012 = vrot.slane %v3985, 5
      %v4013 = vrot.slane %v4012, 4
      %v4014 = vrot.slane %v3741, 5
      %v4015 = vsel %vm1835, %v4013, %v4014
      %v4016 = vrot.slane %v3986, 5
      %v4017 = vrot.slane %v4016, 4
      %v4018 = vrot.slane %v3743, 5
      %v4019 = vsel %vm1835, %v4017, %v4018
      %v4020 = vrot.slane %v3987, 5
      %v4021 = vrot.slane %v4020, 4
      %v4022 = vrot.slane %v3745, 5
      %v4023 = vsel %vm1835, %v4021, %v4022
      %v4024 = vrot.slane %v3988, 5
      %v4025 = vrot.slane %v4024, 4
      %v4026 = vrot.slane %v3747, 5
      %v4027 = vsel %vm1835, %v4025, %v4026
      %v4028 = vrot.slane %v3989, 5
      %v4029 = vrot.slane %v4028, 4
      %v4030 = vrot.slane %v3749, 5
      %v4031 = vsel %vm1835, %v4029, %v4030
      %v4032 = vrot.slane %v3990, 5
      %v4033 = vrot.slane %v4032, 4
      %v4034 = vrot.slane %v3751, 5
      %v4035 = vsel %vm1835, %v4033, %v4034
      %v4036 = vrot.slane %v3991, 5
      %v4037 = vrot.slane %v4036, 4
      %v4038 = vrot.slane %v3753, 5
      %v4039 = vsel %vm1835, %v4037, %v4038
      %s4040 = scalar_lea.vmem %s2, 960
      %v4041 = vld [vmem:[%s4040] sm:$0xf]
      %v4042 = vld [vmem:[%s4040 + $0x4] sm:$0xf]
      %v4043 = vld [vmem:[%s4040 + $0x8] sm:$0xf]
      %v4044 = vld [vmem:[%s4040 + $0xc] sm:$0xf]
      %v4045 = vld [vmem:[%s4040 + $0x10] sm:$0xf]
      %v4046 = vld [vmem:[%s4040 + $0x14] sm:$0xf]
      %v4047 = vld [vmem:[%s4040 + $0x18] sm:$0xf]
      %v4048 = vld [vmem:[%s4040 + $0x1c] sm:$0xf]
      %v4049 = vld [vmem:[%s4040 + $0x20] sm:$0xf]
      %v4050 = vld [vmem:[%s4040 + $0x24] sm:$0xf]
      %v4051 = vld [vmem:[%s4040 + $0x28] sm:$0xf]
      %v4052 = vld [vmem:[%s4040 + $0x2c] sm:$0xf]
      %v4053 = vld [vmem:[%s4040 + $0x30] sm:$0xf]
      %v4054 = vld [vmem:[%s4040 + $0x34] sm:$0xf]
      %v4055 = vld [vmem:[%s4040 + $0x38] sm:$0xf]
      %v4056 = vld [vmem:[%s4040 + $0x3c] sm:$0xf]
      %v4057 = vunpack.c.l.b16 %v4011
      %v4058 = vunpack.c.l.b16 %v4015
      %v4059 = vunpack.c.l.b16 %v4019
      %v4060 = vunpack.c.l.b16 %v4023
      %v4061 = vunpack.c.l.b16 %v4027
      %v4062 = vunpack.c.l.b16 %v4031
      %v4063 = vunpack.c.l.b16 %v4035
      %v4064 = vunpack.c.l.b16 %v4039
      %v4065 = vpack.c.b16 %v4058, %v4057
      %v4066 = vpack.c.b16 %v4060, %v4059
      %v4067 = vpack.c.b16 %v4062, %v4061
      %v4068 = vpack.c.b16 %v4064, %v4063
      %v4089 = vunpack.c.l.b16 %v4041
      %v4090 = vunpack.c.l.b16 %v4042
      %v4091 = vunpack.c.l.b16 %v4043
      %v4092 = vunpack.c.l.b16 %v4044
      %v4093 = vunpack.c.l.b16 %v4045
      %v4094 = vunpack.c.l.b16 %v4046
      %v4095 = vunpack.c.l.b16 %v4047
      %v4096 = vunpack.c.l.b16 %v4048
      %v4097 = vunpack.c.l.b16 %v4049
      %v4098 = vunpack.c.l.b16 %v4050
      %v4099 = vunpack.c.l.b16 %v4051
      %v4100 = vunpack.c.l.b16 %v4052
      %v4101 = vunpack.c.l.b16 %v4053
      %v4102 = vunpack.c.l.b16 %v4054
      %v4103 = vunpack.c.l.b16 %v4055
      %v4104 = vunpack.c.l.b16 %v4056
      %v4105 = vpack.c.b16 %v4090, %v4089
      %v4106 = vpack.c.b16 %v4092, %v4091
      %v4107 = vpack.c.b16 %v4094, %v4093
      %v4108 = vpack.c.b16 %v4096, %v4095
      %v4109 = vpack.c.b16 %v4098, %v4097
      %v4110 = vpack.c.b16 %v4100, %v4099
      %v4111 = vpack.c.b16 %v4102, %v4101
      %v4112 = vpack.c.b16 %v4104, %v4103
      %4121 = vmatpush.bf16.msra.mxu0 %v4112
      %4122 = vmatpush.bf16.msra.mxu0 %v4111
      %4123 = vmatpush.bf16.msra.mxu0 %v4110
      %4124 = vmatpush.bf16.msra.mxu0 %v4109
      %4125 = vmatpush.bf16.msra.mxu0 %v4108
      %4126 = vmatpush.bf16.msra.mxu0 %v4107
      %4127 = vmatpush.bf16.msra.mxu0 %v4106
      %4128 = vmatpush.bf16.msra.mxu0 %v4105
      %4129 = vmatmul.bf16.gmra.mxu0 %v4065
      %v4130 = vpop.f32.mrf.mxu0
      %v4131 = vadd.f32 0.0, %v4130
      %v4132 = vpop.f32.mrf.mxu0
      %v4133 = vadd.f32 0.0, %v4132
      %4134 = vmatmul.bf16.gmra.mxu0 %v4066
      %v4135 = vpop.f32.mrf.mxu0
      %v4136 = vadd.f32 0.0, %v4135
      %v4137 = vpop.f32.mrf.mxu0
      %v4138 = vadd.f32 0.0, %v4137
      %4139 = vmatmul.bf16.gmra.mxu0 %v4067
      %v4140 = vpop.f32.mrf.mxu0
      %v4141 = vadd.f32 0.0, %v4140
      %v4142 = vpop.f32.mrf.mxu0
      %v4143 = vadd.f32 0.0, %v4142
      %4144 = vmatmul.bf16.gmra.mxu0 %v4068
      %v4145 = vpop.f32.mrf.mxu0
      %v4146 = vadd.f32 0.0, %v4145
      %v4147 = vpop.f32.mrf.mxu0
      %v4148 = vadd.f32 0.0, %v4147
      %4149 = vdwg.mxu0
      %v4150 = vadd.f32 %v3976, %v4131
      %v4151 = vadd.f32 %v3977, %v4133
      %v4152 = vadd.f32 %v3978, %v4136
      %v4153 = vadd.f32 %v3979, %v4138
      %v4154 = vadd.f32 %v3980, %v4141
      %v4155 = vadd.f32 %v3981, %v4143
      %v4156 = vadd.f32 %v3982, %v4146
      %v4157 = vadd.f32 %v3983, %v4148
      %v4158 = vpack.c.bf16 %v4150, %v4150
      %v4159 = vpack.c.bf16 %v4151, %v4151
      %v4160 = vpack.c.bf16 %v4152, %v4152
      %v4161 = vpack.c.bf16 %v4153, %v4153
      %v4162 = vpack.c.bf16 %v4154, %v4154
      %v4163 = vpack.c.bf16 %v4155, %v4155
      %v4164 = vpack.c.bf16 %v4156, %v4156
      %v4165 = vpack.c.bf16 %v4157, %v4157
      %s4166 = scalar_lea.vmem %s204, 96
      %4167 = vst [vmem:[%s4166] sm:$0xf] %v4158
      %4168 = vst [vmem:[%s4166 + $0x4] sm:$0xf] %v4159
      %4169 = vst [vmem:[%s4166 + $0x8] sm:$0xf] %v4160
      %4170 = vst [vmem:[%s4166 + $0xc] sm:$0xf] %v4161
      %4171 = vst [vmem:[%s4166 + $0x10] sm:$0xf] %v4162
      %4172 = vst [vmem:[%s4166 + $0x14] sm:$0xf] %v4163
      %4173 = vst [vmem:[%s4166 + $0x18] sm:$0xf] %v4164
      %4174 = vst [vmem:[%s4166 + $0x1c] sm:$0xf] %v4165
      %v4175 = vadd.f32 %v4150, %v4151
      %v4176 = vadd.f32 %v4175, %v4152
      %v4177 = vadd.f32 %v4176, %v4153
      %v4178 = vadd.f32 %v4177, %v4154
      %v4179 = vadd.f32 %v4178, %v4155
      %v4180 = vadd.f32 %v4179, %v4156
      %v4181 = vadd.f32 %v4180, %v4157
      %v4182 = vrot.slane %v4181, 4
      %v4183 = vadd.f32 %v4181, %v4182
      %v4184 = vrot.slane %v4183, 2
      %v4185 = vadd.f32 %v4183, %v4184
      %v4186 = vrot.slane %v4185, 1
      %v4187 = vadd.f32 %v4185, %v4186
      %v4188 = vadd.f32 %v3311, %v4187
      %v4189 = vmul.f32 %v4150, %v4150
      %v4190 = vmul.f32 %v4151, %v4151
      %v4191 = vmul.f32 %v4152, %v4152
      %v4192 = vmul.f32 %v4153, %v4153
      %v4193 = vmul.f32 %v4154, %v4154
      %v4194 = vmul.f32 %v4155, %v4155
      %v4195 = vmul.f32 %v4156, %v4156
      %v4196 = vmul.f32 %v4157, %v4157
      %v4197 = vadd.f32 %v4189, %v4190
      %v4198 = vadd.f32 %v4197, %v4191
      %v4199 = vadd.f32 %v4198, %v4192
      %v4200 = vadd.f32 %v4199, %v4193
      %v4201 = vadd.f32 %v4200, %v4194
      %v4202 = vadd.f32 %v4201, %v4195
      %v4203 = vadd.f32 %v4202, %v4196
      %v4204 = vrot.slane %v4203, 4
      %v4205 = vadd.f32 %v4203, %v4204
      %v4206 = vrot.slane %v4205, 2
      %v4207 = vadd.f32 %v4205, %v4206
      %v4208 = vrot.slane %v4207, 1
      %v4209 = vadd.f32 %v4207, %v4208
      %v4210 = vadd.f32 %v3333, %v4209
      %4211 = vst [vmem:[%s208] sm:$0x1] %v4188
      %4212 = vst [vmem:[%s208 + $0x1] sm:$0x1] %v4210
      %4213 = vst [vmem:[%s208 + $0x2] sm:$0x3f] 0.0
      %p4214 = scmp.lt.s32.totalorder %s16, 1
      %s4215 = scalar_select %p4214, %s16, 1
      %s4216 = smul.addr %s4215, 32
      %s4217 = smul.addr %s4216, 4
      %s4218 = scalar_lea.vmem %s3, %s4217
      %p4219 = scmp.lt.s32.totalorder %s16, 1
      %s4220 = scalar_select %p4219, %s16, 1
      %s4221 = smul.addr %s4220, 8
      %s4222 = scalar_lea.vmem %s4, %s4221
      // Predicated region
      $region33: #{unet_innermost_forward.2} parent=31 // pred_check
        %p4223 = pneg %p102
      $region34: #{unet_innermost_forward.2} parent=31 // pred_check_branch
        %4225 = sbr.rel (%p4223) target = $region36
      $region35: #{unet_innermost_forward.2} parent=31 // pred_region
        _
      $region36: #{unet_innermost_forward.2} parent=31 // pred_fallthru
        _
      // Predicated region
      $region37: #{unet_innermost_forward.2} parent=31 // pred_check
        %p4226 = pneg %p128
      $region38: #{unet_innermost_forward.2} parent=31 // pred_check_branch
        %4228 = sbr.rel (%p4226) target = $region40
      $region39: #{unet_innermost_forward.2} parent=31 // pred_region
        _
      $region40: #{unet_innermost_forward.2} parent=31 // pred_fallthru
        _
    $region32: #{unet_innermost_forward.2} parent=5 // pred_fallthru
      _
    %p4229 = scmp.le.s32.totalorder 2, %s11
    // Predicated region
    $region41: #{unet_innermost_forward.2} parent=5 // pred_check
      %p4230 = pneg %p4229
    $region42: #{unet_innermost_forward.2} parent=5 // pred_check_branch
      %4232 = sbr.rel (%p4230) target = $region44
    $region43: #{unet_innermost_forward.2} parent=5 // pred_region
      %s4233 = ssub.s32 %s11, 2
      // Predicated region
      $region45: #{unet_innermost_forward.2} parent=43 // pred_check
        %p4234 = pneg %p108
      $region46: #{unet_innermost_forward.2} parent=43 // pred_check_branch
        %4236 = sbr.rel (%p4234) target = $region48
      $region47: #{unet_innermost_forward.2} parent=43 // pred_region
        %p4237 = scmp.lt.s32.totalorder %s17, 1
        %s4238 = scalar_select %p4237, %s17, 1
        %s4239 = smul.addr %s4238, 32
        %s4240 = smul.addr %s4239, 4
        %s4241 = scalar_lea.vmem %s3, %s4240
      $region48: #{unet_innermost_forward.2} parent=43 // pred_fallthru
        _
      // Predicated region
      $region49: #{unet_innermost_forward.2} parent=43 // pred_check
        %p4242 = pneg %p134
      $region50: #{unet_innermost_forward.2} parent=43 // pred_check_branch
        %4244 = sbr.rel (%p4242) target = $region52
      $region51: #{unet_innermost_forward.2} parent=43 // pred_region
        %p4245 = scmp.lt.s32.totalorder %s17, 1
        %s4246 = scalar_select %p4245, %s17, 1
        %s4247 = smul.addr %s4246, 8
        %s4248 = scalar_lea.vmem %s4, %s4247
      $region52: #{unet_innermost_forward.2} parent=43 // pred_fallthru
        _
    $region44: #{unet_innermost_forward.2} parent=5 // pred_fallthru
      _
  $region6: #{unet_innermost_forward.2} parent=0 // loop_footer
    %s15 = sadd.s32 1, %s11
  $region7: #{unet_innermost_forward.2} parent=0 // loop_footer_branch
    %10 = sbr.rel target = $region3
  $region8: #{unet_innermost_forward.2} parent=0 // loop_exit
    _

</llo_original>
